<compile_context>
chip_gen: v6e
topology: v6e:2x2x1
jax: 0.10.0
libtpu: 0.0.40
codegen_flags: <defaults>
</compile_context>

<pallas_src>
from functools import partial

import jax
import jax.numpy as jnp
import numpy as np
from jax import lax
from jax.experimental import pallas as pl
from jax.experimental.pallas import tpu as pltpu


# ----------------------------------------------------------------------------
# TPU-generation-aware configuration
# ----------------------------------------------------------------------------
def _device_kind():
    try:
        return jax.devices()[0].device_kind.lower()
    except Exception:
        return ""


_KIND = _device_kind()
_IS_PRE_V6 = any(t in _KIND for t in ("v2", "v3", "v4", "v5"))
_IS_V7 = "v7" in _KIND
# bf16 exp relieves the (binding) EUP slot on v6e/v7x; v5e has no bf16 EUP/VPU.
_EXP_DTYPE = jnp.float32 if _IS_PRE_V6 else jnp.bfloat16
# Exact erf GELU (PyTorch nn.GELU default) except on v5e (long f32 VPU chain).
_GELU_APPROX = bool(_IS_PRE_V6)


def _vmem_limit():
    """Generation-aware scoped-VMEM ceiling (~48 MiB v7x, ~96 MiB v5e/v6e)."""
    try:
        cap = int(pltpu.get_tpu_info().vmem_capacity_bytes)
    except Exception:
        cap = 64 * 2**20 if _IS_V7 else 128 * 2**20
    return int(min(100 * 2**20, (cap * 3) // 4))


# ----------------------------------------------------------------------------
# Shared helpers
# ----------------------------------------------------------------------------
def _round_up(n, m):
    return ((n + m - 1) // m) * m


def _largest_tile(n_pad, cap):
    """Largest multiple-of-8 divisor of n_pad that is <= cap (n_pad if it fits)."""
    if n_pad <= cap:
        return n_pad
    best = 8
    t = 8
    while t <= cap:
        if n_pad % t == 0:
            best = t
        t += 8
    return best


def _pad_and_tile(n, cap=512, min_tile=128):
    """Pick (padded length, tile) for a token axis: sublane-aligned tiles, big
    enough to feed the MXU, with minimal padding."""
    best = None
    for align in (8, 64, 128):
        n_pad = _round_up(n, align)
        tile = _largest_tile(n_pad, cap)
        key = (tile >= min(min_tile, n_pad), -(n_pad - n), tile)
        if best is None or key > best[0]:
            best = (key, n_pad, tile)
    return best[1], best[2]


def _layernorm(x, gamma, beta, eps=1e-5):
    mu = jnp.mean(x, axis=-1, keepdims=True)
    var = jnp.mean(jnp.square(x - mu), axis=-1, keepdims=True)
    return (x - mu) * lax.rsqrt(var + eps) * gamma + beta


def _const_spec(shape, single_buffer):
    """Constant-index (fully resident) operand; single-buffered when supported so
    grid-invariant weights don't pay 2x VMEM residency."""
    nd = len(shape)
    index_map = lambda *_args, _nd=nd: (0,) * _nd
    if single_buffer:
        return pl.BlockSpec(shape, index_map,
                            pipeline_mode=pl.Buffered(buffer_count=1))
    return pl.BlockSpec(shape, index_map)


# ----------------------------------------------------------------------------
# Kernel 1: norm1 -> SelectAttention (flash, online softmax, CLS scores) -> resid
# ----------------------------------------------------------------------------
def _attn_kernel(x_ref, n1g_ref, n1b_ref, wqkv_ref, wproj_ref, bproj_ref,
                 xo_ref, sc_ref, q_scr, k_scr, v_scr,
                 *, num_heads, head_dim, n_tok, tq, tk, exp_dtype):
    C = num_heads * head_dim
    nt_pad = q_scr.shape[0]
    n_kv = nt_pad // tk
    qi = pl.program_id(1)

    # -- once per batch element: LayerNorm1 + fused QKV projection into bf16
    #    VMEM scratch, plus the CLS-row selection scores (exact f32 softmax).
    @pl.when(qi == 0)
    def _():
        xn = _layernorm(x_ref[0].astype(jnp.float32), n1g_ref[...], n1b_ref[...])
        qkv = jnp.dot(xn.astype(jnp.bfloat16), wqkv_ref[...],
                      preferred_element_type=jnp.float32)          # (nt_pad, 3C)
        qb = qkv[:, 0 * C:1 * C].astype(jnp.bfloat16)              # scale pre-folded
        kb = qkv[:, 1 * C:2 * C].astype(jnp.bfloat16)
        vb = qkv[:, 2 * C:3 * C].astype(jnp.bfloat16)
        q_scr[...] = qb
        k_scr[...] = kb
        v_scr[...] = vb

        # scores = mean over heads of softmax(CLS query row); padded keys masked.
        valid_all = lax.broadcasted_iota(jnp.int32, (1, nt_pad), 1) < n_tok
        sc = jnp.zeros((1, nt_pad), jnp.float32)
        for h in range(num_heads):
            lo, hi = h * head_dim, (h + 1) * head_dim
            s = lax.dot_general(qb[0:1, lo:hi], kb[:, lo:hi],
                                (((1,), (1,)), ((), ())),
                                preferred_element_type=jnp.float32)  # (1, nt_pad)
            s = jnp.where(valid_all, s, -1e30)
            s = s - jnp.max(s, axis=-1, keepdims=True)
            p = jnp.exp(s)
            sc = sc + p / jnp.sum(p, axis=-1, keepdims=True)         # exact divide
        sc_ref[0] = sc * (1.0 / num_heads)

    # -- flash attention for this query tile: head/kv loops are static-unrolled
    #    2-D MXU dots on lane slices; online softmax caps live logits at (tq, tk).
    row = pl.multiple_of(qi * tq, 8)
    q_tile = q_scr[pl.ds(row, tq), :]                                # (tq, C) bf16
    q_h = [q_tile[:, h * head_dim:(h + 1) * head_dim] for h in range(num_heads)]
    m = [jnp.full((tq, 1), -1e30, jnp.float32) for _ in range(num_heads)]
    lsum = [jnp.zeros((tq, 1), jnp.float32) for _ in range(num_heads)]
    acc = [jnp.zeros((tq, head_dim), jnp.float32) for _ in range(num_heads)]

    for j in range(n_kv):                       # static, fully unrolled
        k_blk = k_scr[pl.ds(j * tk, tk), :]                          # (tk, C) bf16
        v_blk = v_scr[pl.ds(j * tk, tk), :]
        valid = (j * tk + lax.broadcasted_iota(jnp.int32, (1, tk), 1)) < n_tok
        for h in range(num_heads):              # static, fully unrolled
            lo, hi = h * head_dim, (h + 1) * head_dim
            s = lax.dot_general(q_h[h], k_blk[:, lo:hi],
                                (((1,), (1,)), ((), ())),
                                preferred_element_type=jnp.float32)  # (tq, tk)
            s = jnp.where(valid, s, -1e30)
            m_new = jnp.maximum(m[h], jnp.max(s, axis=-1, keepdims=True))
            alpha = jnp.exp(m[h] - m_new)
            p = jnp.exp((s - m_new).astype(exp_dtype))               # bf16 on v6e/v7x
            lsum[h] = alpha * lsum[h] + jnp.sum(p.astype(jnp.float32),
                                                axis=-1, keepdims=True)
            acc[h] = alpha * acc[h] + jnp.dot(p.astype(jnp.bfloat16),
                                              v_blk[:, lo:hi],
                                              preferred_element_type=jnp.float32)
            m[h] = m_new

    # -- finalize: normalize, fold the head-merge into the output projection
    #    (per-head (tq,hd)@(hd,C) accumulation -> no (H,tq,hd)->(tq,C) relayout),
    #    add the projection bias and the residual.
    out = jnp.zeros((tq, C), jnp.float32)
    for h in range(num_heads):
        ctx_h = acc[h] * pl.reciprocal(lsum[h], approx=True)
        out = out + jnp.dot(ctx_h.astype(jnp.bfloat16), wproj_ref[h],
                            preferred_element_type=jnp.float32)
    out = out + bproj_ref[...]
    xq = x_ref[0, pl.ds(row, tq), :].astype(jnp.float32)
    xo_ref[0] = (xq + out).astype(xo_ref.dtype)


def attention_stage(x, params, num_heads):
    """norm1 + SelectAttention + residual.

    Returns (x_attn [B, Nt, C] bf16, scores [B, Nt] f32)."""
    B, Nt, C = x.shape
    head_dim = C // num_heads
    scale = head_dim ** -0.5

    nt_pad, tq = _pad_and_tile(Nt)
    tk = tq

    # bf16 activations at the HBM boundary; pad tokens to the tiled length.
    x_p = jnp.pad(x.astype(jnp.bfloat16), ((0, 0), (0, nt_pad - Nt), (0, 0)))

    # Weight prep: fold the attention scale into the q columns of wqkv, cast the
    # MXU operands to bf16, pre-split wproj by head for the folded projection.
    wqkv = params["wqkv"].astype(jnp.float32)
    wqkv_b = jnp.concatenate([wqkv[:, :C] * scale, wqkv[:, C:]],
                             axis=1).astype(jnp.bfloat16)
    wproj_b = params["wproj"].astype(jnp.bfloat16).reshape(num_heads, head_dim, C)

    kernel = partial(_attn_kernel, num_heads=num_heads, head_dim=head_dim,
                     n_tok=Nt, tq=tq, tk=tk, exp_dtype=_EXP_DTYPE)

    def build(single_buffer):
        cs = partial(_const_spec, single_buffer=single_buffer)
        return pl.pallas_call(
            kernel,
            out_shape=(jax.ShapeDtypeStruct((B, nt_pad, C), jnp.bfloat16),
                       jax.ShapeDtypeStruct((B, 1, nt_pad), jnp.float32)),
            grid=(B, nt_pad // tq),
            in_specs=[
                pl.BlockSpec((1, nt_pad, C), lambda b, qi: (b, 0, 0)),  # x per batch
                cs((1, C)), cs((1, C)),                                 # norm1 g, b
                cs((C, 3 * C)),                                         # wqkv (q scaled)
                cs((num_heads, head_dim, C)),                           # wproj head-split
                cs((1, C)),                                             # proj bias
            ],
            out_specs=(pl.BlockSpec((1, tq, C), lambda b, qi: (b, qi, 0)),
                       pl.BlockSpec((1, 1, nt_pad), lambda b, qi: (b, 0, 0))),
            scratch_shapes=[pltpu.VMEM((nt_pad, C), jnp.bfloat16)
                            for _ in range(3)],
            compiler_params=pltpu.CompilerParams(
                # qi reuses the per-batch q/k/v scratch from the qi==0 step, so it
                # must stay "arbitrary"; the batch axis is megacore-parallel.
                dimension_semantics=("parallel", "arbitrary"),
                vmem_limit_bytes=_vmem_limit()),
        )

    args = (x_p, params["n1g"], params["n1b"], wqkv_b, wproj_b, params["bproj"])
    try:
        x_attn, scores = build(True)(*args)
    except Exception:  # fallback if this JAX build rejects Buffered(buffer_count=1)
        x_attn, scores = build(False)(*args)
    return x_attn[:, :Nt, :], scores[:, 0, :Nt]


# ----------------------------------------------------------------------------
# Patch selection (pure JAX wrapper — mirrors SelectBlock.select_patches)
# ----------------------------------------------------------------------------
def select_patches(x, scores, *, rate, grid_h, grid_w, keep_indices_old=None):
    # TODO(synk): top-k / gather selection stays in plain JAX — Pallas TPU has no
    # clean sort/top-k primitive.
    cls_token = x[:, :1, :]
    patches = x[:, 1:, :]
    patch_scores = scores[:, 1:]
    N = patches.shape[1]
    patch_h = 224.0 / grid_h
    patch_w = 224.0 / grid_w
    keep_num = int(N * rate)

    _, keep_indices = lax.top_k(patch_scores, keep_num)     # sorted desc (== torch.topk)
    gathered = jnp.take_along_axis(patches, keep_indices[..., None], axis=1)
    x_selected = jnp.concatenate([cls_token, gathered], axis=1)

    if keep_indices_old is not None:
        keep_indices = jnp.take_along_axis(keep_indices_old, keep_indices, axis=1)

    rows = keep_indices // grid_w
    cols = keep_indices % grid_w
    positions = jnp.stack(
        [cols * patch_w, rows * patch_h, (cols + 1) * patch_w, (rows + 1) * patch_h],
        axis=-1).astype(jnp.float32)
    return x_selected, positions, keep_indices


# ----------------------------------------------------------------------------
# Kernel 2: norm2 -> MLP (fc1 -> GELU -> fc2) -> residual on selected tokens
# ----------------------------------------------------------------------------
def _mlp_kernel(x_ref, n2g_ref, n2b_ref, w1_ref, b1_ref, w2_ref, b2_ref, o_ref,
                *, gelu_approx):
    x = x_ref[0].astype(jnp.float32)
    xn = _layernorm(x, n2g_ref[...], n2b_ref[...])
    h = jnp.dot(xn.astype(jnp.bfloat16), w1_ref[...],
                preferred_element_type=jnp.float32) + b1_ref[...]
    h = jax.nn.gelu(h, approximate=gelu_approx)
    y = jnp.dot(h.astype(jnp.bfloat16), w2_ref[...],
                preferred_element_type=jnp.float32) + b2_ref[...]
    o_ref[0] = (x + y).astype(o_ref.dtype)


def mlp_stage(x_sel, params):
    B, S, C = x_sel.shape
    H = params["w1"].shape[1]
    s_pad, ts = _pad_and_tile(S)
    x_p = jnp.pad(x_sel.astype(jnp.bfloat16), ((0, 0), (0, s_pad - S), (0, 0)))
    w1_b = params["w1"].astype(jnp.bfloat16)
    w2_b = params["w2"].astype(jnp.bfloat16)

    kernel = partial(_mlp_kernel, gelu_approx=_GELU_APPROX)

    def build(single_buffer):
        cs = partial(_const_spec, single_buffer=single_buffer)
        return pl.pallas_call(
            kernel,
            out_shape=jax.ShapeDtypeStruct((B, s_pad, C), jnp.bfloat16),
            grid=(B, s_pad // ts),
            in_specs=[
                pl.BlockSpec((1, ts, C), lambda b, i: (b, i, 0)),   # selected tokens
                cs((1, C)), cs((1, C)),                             # norm2 g, b
                cs((C, H)), cs((1, H)),                             # fc1 weight, bias
                cs((H, C)), cs((1, C)),                             # fc2 weight, bias
            ],
            out_specs=pl.BlockSpec((1, ts, C), lambda b, i: (b, i, 0)),
            compiler_params=pltpu.CompilerParams(
                dimension_semantics=("parallel", "parallel"),
                vmem_limit_bytes=_vmem_limit()),
        )

    args = (x_p, params["n2g"], params["n2b"], w1_b, params["b1"], w2_b,
            params["b2"])
    try:
        out = build(True)(*args)
    except Exception:  # fallback if this JAX build rejects Buffered(buffer_count=1)
        out = build(False)(*args)
    return out[:, :S, :]


# ----------------------------------------------------------------------------
# Full SelectBlock forward
# ----------------------------------------------------------------------------
def select_block_forward(x, params, *, num_heads, rate=0.5, grid_h=32, grid_w=32,
                         keep_indices_old=None):
    x_attn, scores = attention_stage(x, params, num_heads)
    x_sel, positions, keep_indices = select_patches(
        x_attn, scores, rate=rate, grid_h=grid_h, grid_w=grid_w,
        keep_indices_old=keep_indices_old)
    x_out = mlp_stage(x_sel, params)
    return x_out, positions, keep_indices


# ----------------------------------------------------------------------------
# Pure-JAX f32 reference (mirrors the PyTorch SelectBlock.forward, eval mode)
# ----------------------------------------------------------------------------
def reference_select_block(x, p, num_heads, rate, grid_h, grid_w,
                           keep_indices_old=None, scores_for_topk=None):
    """`scores_for_topk` optionally overrides the scores used for the discrete
    top-k choice, so near-ties don't make the tolerance-based comparison flaky;
    the scores themselves are checked separately against this reference."""
    def ln(t, g, b):
        mu = t.mean(-1, keepdims=True)
        var = ((t - mu) ** 2).mean(-1, keepdims=True)
        return (t - mu) / jnp.sqrt(var + 1e-5) * g + b

    B, Nt, C = x.shape
    hd = C // num_heads
    xn = ln(x, p["n1g"][0], p["n1b"][0])
    qkv = (xn @ p["wqkv"]).reshape(B, Nt, 3, num_heads, hd).transpose(2, 0, 3, 1, 4)
    q, k, v = qkv[0], qkv[1], qkv[2]
    attn = (q @ k.transpose(0, 1, 3, 2)) * (hd ** -0.5)
    attn = jax.nn.softmax(attn, axis=-1)
    scores = attn[:, :, 0, :].mean(axis=1)                          # (B, Nt)
    o = (attn @ v).transpose(0, 2, 1, 3).reshape(B, Nt, C)
    o = o @ p["wproj"] + p["bproj"][0]
    x_attn = x + o

    sel_scores = scores if scores_for_topk is None else scores_for_topk
    x_sel, positions, keep_indices = select_patches(
        x_attn, sel_scores, rate=rate, grid_h=grid_h, grid_w=grid_w,
        keep_indices_old=keep_indices_old)

    xn2 = ln(x_sel, p["n2g"][0], p["n2b"][0])
    h = jax.nn.gelu(xn2 @ p["w1"] + p["b1"][0], approximate=False)
    y = h @ p["w2"] + p["b2"][0]
    return x_sel + y, positions, keep_indices, x_attn, scores


def init_params(key, dim, num_heads, mlp_ratio=4.0, dtype=jnp.float32):
    hidden = int(dim * mlp_ratio)
    ks = jax.random.split(key, 6)
    s = 0.02
    return {
        # LayerNorm params stored as (1, C) so they broadcast inside the kernels.
        "n1g": jnp.ones((1, dim), dtype),
        "n1b": jnp.zeros((1, dim), dtype),
        "n2g": jnp.ones((1, dim), dtype),
        "n2b": jnp.zeros((1, dim), dtype),
        # Linear weights pre-transposed (y = x @ W); f32 masters, cast to bf16
        # (with the attention scale folded into q) in the stage wrappers.
        "wqkv": jax.random.normal(ks[0], (dim, 3 * dim), dtype) * s,   # qkv_bias=False
        "wproj": jax.random.normal(ks[1], (dim, dim), dtype) * s,
        "bproj": jax.random.normal(ks[2], (1, dim), dtype) * s,
        "w1": jax.random.normal(ks[3], (dim, hidden), dtype) * s,
        "b1": jax.random.normal(ks[4], (1, hidden), dtype) * s,
        "w2": jax.random.normal(ks[5], (hidden, dim), dtype) * s,
        "b2": jnp.zeros((1, dim), dtype),
    }


if __name__ == "__main__":
    B = 2
    grid_h = grid_w = 4               # 16 patches + 1 CLS token
    Nt = grid_h * grid_w + 1          # 17 tokens
    C = 32
    num_heads = 4
    rate = 0.5

    key = jax.random.PRNGKey(0)
    kx, kp = jax.random.split(key)
    x = jax.random.normal(kx, (B, Nt, C), jnp.float32)
    params = init_params(kp, C, num_heads)

    x_out, positions, keep_idx = select_block_forward(
        x, params, num_heads=num_heads, rate=rate, grid_h=grid_h, grid_w=grid_w)
    x_out = jax.block_until_ready(x_out)

    # ---------------- verification against the pure-JAX f32 reference ----------
    x_attn_k, scores_k = attention_stage(x, params, num_heads)
    ref_out, ref_pos, ref_idx, ref_x_attn, ref_scores = reference_select_block(
        x, params, num_heads, rate, grid_h, grid_w, scores_for_topk=scores_k)

    def f32(a):
        return np.asarray(jnp.asarray(a, jnp.float32))

    np.testing.assert_allclose(f32(scores_k), f32(ref_scores), rtol=2e-2, atol=2e-3)
    np.testing.assert_allclose(f32(x_attn_k), f32(ref_x_attn), rtol=2e-2, atol=2e-2)
    np.testing.assert_array_equal(np.asarray(keep_idx), np.asarray(ref_idx))
    np.testing.assert_allclose(f32(positions), f32(ref_pos))
    np.testing.assert_allclose(f32(x_out), f32(ref_out), rtol=2e-2, atol=2e-2)
    print("KERNEL_OK")
</pallas_src>

<mosaic_0001>
module attributes {stable_mosaic.version = 11 : i64} {
  func.func @_attn_kernel(%arg0: i32, %arg1: i32, %arg2: memref<1x24x32xbf16, #tpu.memory_space<vmem>>, %arg3: memref<1x32xf32, #tpu.memory_space<vmem>>, %arg4: memref<1x32xf32, #tpu.memory_space<vmem>>, %arg5: memref<32x96xbf16, #tpu.memory_space<vmem>>, %arg6: memref<4x8x32xbf16, #tpu.memory_space<vmem>>, %arg7: memref<1x32xf32, #tpu.memory_space<vmem>>, %arg8: memref<1x24x32xbf16, #tpu.memory_space<vmem>>, %arg9: memref<1x1x24xf32, #tpu.memory_space<vmem>>, %arg10: memref<24x32xbf16, #tpu.memory_space<vmem>>, %arg11: memref<24x32xbf16, #tpu.memory_space<vmem>>, %arg12: memref<24x32xbf16, #tpu.memory_space<vmem>>) attributes {dimension_semantics = [#tpu.dimension_semantics<parallel>, #tpu.dimension_semantics<arbitrary>], iteration_bounds = array<i64: 2, 1>, scalar_prefetch = 0 : i64, scratch_operands = 3 : i64, tpu.core_type = #tpu.core_type<tc>, window_params = [{transform_indices = @transform_0, window_bounds = array<i64: 1, 24, 32>}, {pipeline_mode = #tpu.pipeline_mode<synchronous>, transform_indices = @transform_1, window_bounds = array<i64: 1, 32>}, {pipeline_mode = #tpu.pipeline_mode<synchronous>, transform_indices = @transform_2, window_bounds = array<i64: 1, 32>}, {pipeline_mode = #tpu.pipeline_mode<synchronous>, transform_indices = @transform_3, window_bounds = array<i64: 32, 96>}, {pipeline_mode = #tpu.pipeline_mode<synchronous>, transform_indices = @transform_4, window_bounds = array<i64: 4, 8, 32>}, {pipeline_mode = #tpu.pipeline_mode<synchronous>, transform_indices = @transform_5, window_bounds = array<i64: 1, 32>}, {transform_indices = @transform_6, window_bounds = array<i64: 1, 24, 32>}, {transform_indices = @transform_7, window_bounds = array<i64: 1, 1, 24>}]} {
    %c0_i32 = arith.constant 0 : i32
    %0 = arith.cmpi eq, %arg1, %c0_i32 : i32
    %1 = arith.extui %0 : i1 to i32
    %c0_i32_0 = arith.constant 0 : i32
    %2 = arith.cmpi ne, %1, %c0_i32_0 : i32
    scf.if %2 {
      %c0_58 = arith.constant 0 : index
      %c0_59 = arith.constant 0 : index
      %c0_60 = arith.constant 0 : index
      %175 = vector.load %arg2[%c0_58, %c0_59, %c0_60] : memref<1x24x32xbf16, #tpu.memory_space<vmem>>, vector<1x24x32xbf16>
      %176 = vector.shape_cast %175 : vector<1x24x32xbf16> to vector<24x32xbf16>
      %177 = arith.extf %176 : vector<24x32xbf16> to vector<24x32xf32>
      %c0_61 = arith.constant 0 : index
      %c0_62 = arith.constant 0 : index
      %178 = vector.load %arg3[%c0_61, %c0_62] : memref<1x32xf32, #tpu.memory_space<vmem>>, vector<1x32xf32>
      %c0_63 = arith.constant 0 : index
      %c0_64 = arith.constant 0 : index
      %179 = vector.load %arg4[%c0_63, %c0_64] : memref<1x32xf32, #tpu.memory_space<vmem>>, vector<1x32xf32>
      %cst_65 = arith.constant dense<0.000000e+00> : vector<24xf32>
      %180 = vector.multi_reduction <add>, %177, %cst_65 [1] : vector<24x32xf32> to vector<24xf32>
      %181 = vector.shape_cast %180 : vector<24xf32> to vector<24x1xf32>
      %cst_66 = arith.constant 3.200000e+01 : f32
      %182 = vector.broadcast %cst_66 : f32 to vector<24x1xf32>
      %183 = arith.divf %181, %182 : vector<24x1xf32>
      %184 = vector.broadcast %183 : vector<24x1xf32> to vector<24x32xf32>
      %185 = arith.subf %177, %184 : vector<24x32xf32>
      %186 = arith.mulf %185, %185 : vector<24x32xf32>
      %cst_67 = arith.constant dense<0.000000e+00> : vector<24xf32>
      %187 = vector.multi_reduction <add>, %186, %cst_67 [1] : vector<24x32xf32> to vector<24xf32>
      %188 = vector.shape_cast %187 : vector<24xf32> to vector<24x1xf32>
      %cst_68 = arith.constant 3.200000e+01 : f32
      %189 = vector.broadcast %cst_68 : f32 to vector<24x1xf32>
      %190 = arith.divf %188, %189 : vector<24x1xf32>
      %191 = vector.broadcast %183 : vector<24x1xf32> to vector<24x32xf32>
      %192 = arith.subf %177, %191 : vector<24x32xf32>
      %cst_69 = arith.constant 9.99999974E-6 : f32
      %193 = vector.broadcast %cst_69 : f32 to vector<24x1xf32>
      %194 = arith.addf %190, %193 : vector<24x1xf32>
      %195 = math.rsqrt %194 : vector<24x1xf32>
      %196 = vector.broadcast %195 : vector<24x1xf32> to vector<24x32xf32>
      %197 = arith.mulf %192, %196 : vector<24x32xf32>
      %198 = vector.broadcast %178 : vector<1x32xf32> to vector<24x32xf32>
      %199 = arith.mulf %197, %198 : vector<24x32xf32>
      %200 = vector.broadcast %179 : vector<1x32xf32> to vector<24x32xf32>
      %201 = arith.addf %199, %200 : vector<24x32xf32>
      %202 = arith.truncf %201 : vector<24x32xf32> to vector<24x32xbf16>
      %c0_70 = arith.constant 0 : index
      %c0_71 = arith.constant 0 : index
      %203 = vector.load %arg5[%c0_70, %c0_71] : memref<32x96xbf16, #tpu.memory_space<vmem>>, vector<32x96xbf16>
      %cst_72 = arith.constant dense<0.000000e+00> : vector<24x96xf32>
      %204 = tpu.matmul %202, %203, %cst_72 {dimension_numbers = #tpu.dot_dimension_numbers<[1], [0], [0], [1], [0, 0, 1, 1], [], []>} : vector<24x32xbf16>, vector<32x96xbf16>, vector<24x96xf32> -> vector<24x96xf32>
      %205 = vector.extract_strided_slice %204 {offsets = [0, 0], sizes = [24, 32], strides = [1, 1]} : vector<24x96xf32> to vector<24x32xf32>
      %206 = arith.truncf %205 : vector<24x32xf32> to vector<24x32xbf16>
      %207 = vector.extract_strided_slice %204 {offsets = [0, 32], sizes = [24, 32], strides = [1, 1]} : vector<24x96xf32> to vector<24x32xf32>
      %208 = arith.truncf %207 : vector<24x32xf32> to vector<24x32xbf16>
      %209 = vector.extract_strided_slice %204 {offsets = [0, 64], sizes = [24, 32], strides = [1, 1]} : vector<24x96xf32> to vector<24x32xf32>
      %210 = arith.truncf %209 : vector<24x32xf32> to vector<24x32xbf16>
      %c0_73 = arith.constant 0 : index
      %c0_74 = arith.constant 0 : index
      %211 = vector.load %arg10[%c0_73, %c0_74] : memref<24x32xbf16, #tpu.memory_space<vmem>>, vector<24x32xbf16>
      tpu.vector_store %arg10[%c0_73, %c0_74], %206 {strides = array<i32>} : memref<24x32xbf16, #tpu.memory_space<vmem>>, vector<24x32xbf16>,
      %c0_75 = arith.constant 0 : index
      %c0_76 = arith.constant 0 : index
      %212 = vector.load %arg11[%c0_75, %c0_76] : memref<24x32xbf16, #tpu.memory_space<vmem>>, vector<24x32xbf16>
      tpu.vector_store %arg11[%c0_75, %c0_76], %208 {strides = array<i32>} : memref<24x32xbf16, #tpu.memory_space<vmem>>, vector<24x32xbf16>,
      %c0_77 = arith.constant 0 : index
      %c0_78 = arith.constant 0 : index
      %213 = vector.load %arg12[%c0_77, %c0_78] : memref<24x32xbf16, #tpu.memory_space<vmem>>, vector<24x32xbf16>
      tpu.vector_store %arg12[%c0_77, %c0_78], %210 {strides = array<i32>} : memref<24x32xbf16, #tpu.memory_space<vmem>>, vector<24x32xbf16>,
      %214 = tpu.iota {dimensions = array<i32: 1>} : vector<1x24xi32>
      %c17_i32_79 = arith.constant 17 : i32
      %215 = vector.broadcast %c17_i32_79 : i32 to vector<1x24xi32>
      %216 = arith.cmpi slt, %214, %215 : vector<1x24xi32>
      %cst_80 = arith.constant 0.000000e+00 : f32
      %217 = vector.broadcast %cst_80 : f32 to vector<1x24xf32>
      %218 = vector.extract_strided_slice %206 {offsets = [0, 0], sizes = [1, 8], strides = [1, 1]} : vector<24x32xbf16> to vector<1x8xbf16>
      %219 = vector.extract_strided_slice %208 {offsets = [0, 0], sizes = [24, 8], strides = [1, 1]} : vector<24x32xbf16> to vector<24x8xbf16>
      %cst_81 = arith.constant dense<0.000000e+00> : vector<1x24xf32>
      %220 = tpu.matmul %218, %219, %cst_81 {dimension_numbers = #tpu.dot_dimension_numbers<[1], [1], [0], [0], [0, 0, 1, 0], [], []>} : vector<1x8xbf16>, vector<24x8xbf16>, vector<1x24xf32> -> vector<1x24xf32>
      %cst_82 = arith.constant -1.000000e+30 : f32
      %221 = vector.broadcast %cst_82 : f32 to vector<1x24xf32>
      %222 = arith.select %216, %220, %221 : vector<1x24xi1>, vector<1x24xf32>
      %cst_83 = arith.constant dense<0xFF800000> : vector<1xf32>
      %223 = vector.multi_reduction <maximumf>, %222, %cst_83 [1] : vector<1x24xf32> to vector<1xf32>
      %224 = vector.shape_cast %223 : vector<1xf32> to vector<1x1xf32>
      %225 = vector.broadcast %224 : vector<1x1xf32> to vector<1x24xf32>
      %226 = arith.subf %222, %225 : vector<1x24xf32>
      %227 = math.exp %226 : vector<1x24xf32>
      %cst_84 = arith.constant dense<0.000000e+00> : vector<1xf32>
      %228 = vector.multi_reduction <add>, %227, %cst_84 [1] : vector<1x24xf32> to vector<1xf32>
      %229 = vector.shape_cast %228 : vector<1xf32> to vector<1x1xf32>
      %230 = vector.broadcast %229 : vector<1x1xf32> to vector<1x24xf32>
      %231 = arith.divf %227, %230 : vector<1x24xf32>
      %232 = arith.addf %217, %231 : vector<1x24xf32>
      %233 = vector.extract_strided_slice %206 {offsets = [0, 8], sizes = [1, 8], strides = [1, 1]} : vector<24x32xbf16> to vector<1x8xbf16>
      %234 = vector.extract_strided_slice %208 {offsets = [0, 8], sizes = [24, 8], strides = [1, 1]} : vector<24x32xbf16> to vector<24x8xbf16>
      %cst_85 = arith.constant dense<0.000000e+00> : vector<1x24xf32>
      %235 = tpu.matmul %233, %234, %cst_85 {dimension_numbers = #tpu.dot_dimension_numbers<[1], [1], [0], [0], [0, 0, 1, 0], [], []>} : vector<1x8xbf16>, vector<24x8xbf16>, vector<1x24xf32> -> vector<1x24xf32>
      %cst_86 = arith.constant -1.000000e+30 : f32
      %236 = vector.broadcast %cst_86 : f32 to vector<1x24xf32>
      %237 = arith.select %216, %235, %236 : vector<1x24xi1>, vector<1x24xf32>
      %cst_87 = arith.constant dense<0xFF800000> : vector<1xf32>
      %238 = vector.multi_reduction <maximumf>, %237, %cst_87 [1] : vector<1x24xf32> to vector<1xf32>
      %239 = vector.shape_cast %238 : vector<1xf32> to vector<1x1xf32>
      %240 = vector.broadcast %239 : vector<1x1xf32> to vector<1x24xf32>
      %241 = arith.subf %237, %240 : vector<1x24xf32>
      %242 = math.exp %241 : vector<1x24xf32>
      %cst_88 = arith.constant dense<0.000000e+00> : vector<1xf32>
      %243 = vector.multi_reduction <add>, %242, %cst_88 [1] : vector<1x24xf32> to vector<1xf32>
      %244 = vector.shape_cast %243 : vector<1xf32> to vector<1x1xf32>
      %245 = vector.broadcast %244 : vector<1x1xf32> to vector<1x24xf32>
      %246 = arith.divf %242, %245 : vector<1x24xf32>
      %247 = arith.addf %232, %246 : vector<1x24xf32>
      %248 = vector.extract_strided_slice %206 {offsets = [0, 16], sizes = [1, 8], strides = [1, 1]} : vector<24x32xbf16> to vector<1x8xbf16>
      %249 = vector.extract_strided_slice %208 {offsets = [0, 16], sizes = [24, 8], strides = [1, 1]} : vector<24x32xbf16> to vector<24x8xbf16>
      %cst_89 = arith.constant dense<0.000000e+00> : vector<1x24xf32>
      %250 = tpu.matmul %248, %249, %cst_89 {dimension_numbers = #tpu.dot_dimension_numbers<[1], [1], [0], [0], [0, 0, 1, 0], [], []>} : vector<1x8xbf16>, vector<24x8xbf16>, vector<1x24xf32> -> vector<1x24xf32>
      %cst_90 = arith.constant -1.000000e+30 : f32
      %251 = vector.broadcast %cst_90 : f32 to vector<1x24xf32>
      %252 = arith.select %216, %250, %251 : vector<1x24xi1>, vector<1x24xf32>
      %cst_91 = arith.constant dense<0xFF800000> : vector<1xf32>
      %253 = vector.multi_reduction <maximumf>, %252, %cst_91 [1] : vector<1x24xf32> to vector<1xf32>
      %254 = vector.shape_cast %253 : vector<1xf32> to vector<1x1xf32>
      %255 = vector.broadcast %254 : vector<1x1xf32> to vector<1x24xf32>
      %256 = arith.subf %252, %255 : vector<1x24xf32>
      %257 = math.exp %256 : vector<1x24xf32>
      %cst_92 = arith.constant dense<0.000000e+00> : vector<1xf32>
      %258 = vector.multi_reduction <add>, %257, %cst_92 [1] : vector<1x24xf32> to vector<1xf32>
      %259 = vector.shape_cast %258 : vector<1xf32> to vector<1x1xf32>
      %260 = vector.broadcast %259 : vector<1x1xf32> to vector<1x24xf32>
      %261 = arith.divf %257, %260 : vector<1x24xf32>
      %262 = arith.addf %247, %261 : vector<1x24xf32>
      %263 = vector.extract_strided_slice %206 {offsets = [0, 24], sizes = [1, 8], strides = [1, 1]} : vector<24x32xbf16> to vector<1x8xbf16>
      %264 = vector.extract_strided_slice %208 {offsets = [0, 24], sizes = [24, 8], strides = [1, 1]} : vector<24x32xbf16> to vector<24x8xbf16>
      %cst_93 = arith.constant dense<0.000000e+00> : vector<1x24xf32>
      %265 = tpu.matmul %263, %264, %cst_93 {dimension_numbers = #tpu.dot_dimension_numbers<[1], [1], [0], [0], [0, 0, 1, 0], [], []>} : vector<1x8xbf16>, vector<24x8xbf16>, vector<1x24xf32> -> vector<1x24xf32>
      %cst_94 = arith.constant -1.000000e+30 : f32
      %266 = vector.broadcast %cst_94 : f32 to vector<1x24xf32>
      %267 = arith.select %216, %265, %266 : vector<1x24xi1>, vector<1x24xf32>
      %cst_95 = arith.constant dense<0xFF800000> : vector<1xf32>
      %268 = vector.multi_reduction <maximumf>, %267, %cst_95 [1] : vector<1x24xf32> to vector<1xf32>
      %269 = vector.shape_cast %268 : vector<1xf32> to vector<1x1xf32>
      %270 = vector.broadcast %269 : vector<1x1xf32> to vector<1x24xf32>
      %271 = arith.subf %267, %270 : vector<1x24xf32>
      %272 = math.exp %271 : vector<1x24xf32>
      %cst_96 = arith.constant dense<0.000000e+00> : vector<1xf32>
      %273 = vector.multi_reduction <add>, %272, %cst_96 [1] : vector<1x24xf32> to vector<1xf32>
      %274 = vector.shape_cast %273 : vector<1xf32> to vector<1x1xf32>
      %275 = vector.broadcast %274 : vector<1x1xf32> to vector<1x24xf32>
      %276 = arith.divf %272, %275 : vector<1x24xf32>
      %277 = arith.addf %262, %276 : vector<1x24xf32>
      %cst_97 = arith.constant 2.500000e-01 : f32
      %278 = vector.broadcast %cst_97 : f32 to vector<1x24xf32>
      %279 = arith.mulf %277, %278 : vector<1x24xf32>
      %c0_98 = arith.constant 0 : index
      %c0_99 = arith.constant 0 : index
      %c0_100 = arith.constant 0 : index
      %280 = vector.load %arg9[%c0_98, %c0_99, %c0_100] : memref<1x1x24xf32, #tpu.memory_space<vmem>>, vector<1x1x24xf32>
      %281 = vector.shape_cast %280 : vector<1x1x24xf32> to vector<1x24xf32>
      %282 = vector.shape_cast %279 : vector<1x24xf32> to vector<1x1x24xf32>
      tpu.vector_store %arg9[%c0_98, %c0_99, %c0_100], %282 {strides = array<i32>} : memref<1x1x24xf32, #tpu.memory_space<vmem>>, vector<1x1x24xf32>,
    } else {
    }
    %c24_i32 = arith.constant 24 : i32
    %3 = arith.muli %arg1, %c24_i32 : i32
    %4 = tpu.assume_multiple %3, 8 : i32
    %5 = arith.index_cast %4 : i32 to index
    %c0 = arith.constant 0 : index
    %6 = vector.load %arg10[%5, %c0] : memref<24x32xbf16, #tpu.memory_space<vmem>>, vector<24x32xbf16>
    %7 = vector.extract_strided_slice %6 {offsets = [0, 0], sizes = [24, 8], strides = [1, 1]} : vector<24x32xbf16> to vector<24x8xbf16>
    %8 = vector.extract_strided_slice %6 {offsets = [0, 8], sizes = [24, 8], strides = [1, 1]} : vector<24x32xbf16> to vector<24x8xbf16>
    %9 = vector.extract_strided_slice %6 {offsets = [0, 16], sizes = [24, 8], strides = [1, 1]} : vector<24x32xbf16> to vector<24x8xbf16>
    %10 = vector.extract_strided_slice %6 {offsets = [0, 24], sizes = [24, 8], strides = [1, 1]} : vector<24x32xbf16> to vector<24x8xbf16>
    %cst = arith.constant -1.000000e+30 : f32
    %11 = vector.broadcast %cst : f32 to vector<24x1xf32>
    %cst_1 = arith.constant -1.000000e+30 : f32
    %12 = vector.broadcast %cst_1 : f32 to vector<24x1xf32>
    %cst_2 = arith.constant -1.000000e+30 : f32
    %13 = vector.broadcast %cst_2 : f32 to vector<24x1xf32>
    %cst_3 = arith.constant -1.000000e+30 : f32
    %14 = vector.broadcast %cst_3 : f32 to vector<24x1xf32>
    %cst_4 = arith.constant 0.000000e+00 : f32
    %15 = vector.broadcast %cst_4 : f32 to vector<24x1xf32>
    %cst_5 = arith.constant 0.000000e+00 : f32
    %16 = vector.broadcast %cst_5 : f32 to vector<24x1xf32>
    %cst_6 = arith.constant 0.000000e+00 : f32
    %17 = vector.broadcast %cst_6 : f32 to vector<24x1xf32>
    %cst_7 = arith.constant 0.000000e+00 : f32
    %18 = vector.broadcast %cst_7 : f32 to vector<24x1xf32>
    %cst_8 = arith.constant 0.000000e+00 : f32
    %19 = vector.broadcast %cst_8 : f32 to vector<24x8xf32>
    %cst_9 = arith.constant 0.000000e+00 : f32
    %20 = vector.broadcast %cst_9 : f32 to vector<24x8xf32>
    %cst_10 = arith.constant 0.000000e+00 : f32
    %21 = vector.broadcast %cst_10 : f32 to vector<24x8xf32>
    %cst_11 = arith.constant 0.000000e+00 : f32
    %22 = vector.broadcast %cst_11 : f32 to vector<24x8xf32>
    %c0_12 = arith.constant 0 : index
    %c0_13 = arith.constant 0 : index
    %23 = vector.load %arg11[%c0_12, %c0_13] : memref<24x32xbf16, #tpu.memory_space<vmem>>, vector<24x32xbf16>
    %c0_14 = arith.constant 0 : index
    %c0_15 = arith.constant 0 : index
    %24 = vector.load %arg12[%c0_14, %c0_15] : memref<24x32xbf16, #tpu.memory_space<vmem>>, vector<24x32xbf16>
    %25 = tpu.iota {dimensions = array<i32: 1>} : vector<1x24xi32>
    %c0_i32_16 = arith.constant 0 : i32
    %26 = vector.broadcast %c0_i32_16 : i32 to vector<1x24xi32>
    %27 = arith.addi %26, %25 : vector<1x24xi32>
    %c17_i32 = arith.constant 17 : i32
    %28 = vector.broadcast %c17_i32 : i32 to vector<1x24xi32>
    %29 = arith.cmpi slt, %27, %28 : vector<1x24xi32>
    %30 = vector.extract_strided_slice %23 {offsets = [0, 0], sizes = [24, 8], strides = [1, 1]} : vector<24x32xbf16> to vector<24x8xbf16>
    %cst_17 = arith.constant dense<0.000000e+00> : vector<24x24xf32>
    %31 = tpu.matmul %7, %30, %cst_17 {dimension_numbers = #tpu.dot_dimension_numbers<[1], [1], [0], [0], [0, 0, 1, 0], [], []>} : vector<24x8xbf16>, vector<24x8xbf16>, vector<24x24xf32> -> vector<24x24xf32>
    %cst_18 = arith.constant -1.000000e+30 : f32
    %32 = vector.shape_cast %29 : vector<1x24xi1> to vector<1x24xi1>
    %33 = vector.broadcast %32 : vector<1x24xi1> to vector<24x24xi1>
    %34 = vector.broadcast %cst_18 : f32 to vector<24x24xf32>
    %35 = arith.select %33, %31, %34 : vector<24x24xi1>, vector<24x24xf32>
    %cst_19 = arith.constant dense<0xFF800000> : vector<24xf32>
    %36 = vector.multi_reduction <maximumf>, %35, %cst_19 [1] : vector<24x24xf32> to vector<24xf32>
    %37 = vector.shape_cast %36 : vector<24xf32> to vector<24x1xf32>
    %38 = arith.maximumf %11, %37 : vector<24x1xf32>
    %39 = arith.subf %11, %38 : vector<24x1xf32>
    %40 = math.exp %39 : vector<24x1xf32>
    %41 = vector.broadcast %38 : vector<24x1xf32> to vector<24x24xf32>
    %42 = arith.subf %35, %41 : vector<24x24xf32>
    %43 = arith.truncf %42 : vector<24x24xf32> to vector<24x24xbf16>
    %44 = math.exp %43 : vector<24x24xbf16>
    %45 = arith.mulf %40, %15 : vector<24x1xf32>
    %46 = arith.extf %44 : vector<24x24xbf16> to vector<24x24xf32>
    %cst_20 = arith.constant dense<0.000000e+00> : vector<24xf32>
    %47 = vector.multi_reduction <add>, %46, %cst_20 [1] : vector<24x24xf32> to vector<24xf32>
    %48 = vector.shape_cast %47 : vector<24xf32> to vector<24x1xf32>
    %49 = arith.addf %45, %48 : vector<24x1xf32>
    %50 = vector.broadcast %40 : vector<24x1xf32> to vector<24x8xf32>
    %51 = arith.mulf %50, %19 : vector<24x8xf32>
    %52 = vector.extract_strided_slice %24 {offsets = [0, 0], sizes = [24, 8], strides = [1, 1]} : vector<24x32xbf16> to vector<24x8xbf16>
    %cst_21 = arith.constant dense<0.000000e+00> : vector<24x8xf32>
    %53 = tpu.matmul %44, %52, %cst_21 {dimension_numbers = #tpu.dot_dimension_numbers<[1], [0], [0], [1], [0, 0, 1, 1], [], []>} : vector<24x24xbf16>, vector<24x8xbf16>, vector<24x8xf32> -> vector<24x8xf32>
    %54 = arith.addf %51, %53 : vector<24x8xf32>
    %55 = vector.extract_strided_slice %23 {offsets = [0, 8], sizes = [24, 8], strides = [1, 1]} : vector<24x32xbf16> to vector<24x8xbf16>
    %cst_22 = arith.constant dense<0.000000e+00> : vector<24x24xf32>
    %56 = tpu.matmul %8, %55, %cst_22 {dimension_numbers = #tpu.dot_dimension_numbers<[1], [1], [0], [0], [0, 0, 1, 0], [], []>} : vector<24x8xbf16>, vector<24x8xbf16>, vector<24x24xf32> -> vector<24x24xf32>
    %cst_23 = arith.constant -1.000000e+30 : f32
    %57 = vector.shape_cast %29 : vector<1x24xi1> to vector<1x24xi1>
    %58 = vector.broadcast %57 : vector<1x24xi1> to vector<24x24xi1>
    %59 = vector.broadcast %cst_23 : f32 to vector<24x24xf32>
    %60 = arith.select %58, %56, %59 : vector<24x24xi1>, vector<24x24xf32>
    %cst_24 = arith.constant dense<0xFF800000> : vector<24xf32>
    %61 = vector.multi_reduction <maximumf>, %60, %cst_24 [1] : vector<24x24xf32> to vector<24xf32>
    %62 = vector.shape_cast %61 : vector<24xf32> to vector<24x1xf32>
    %63 = arith.maximumf %12, %62 : vector<24x1xf32>
    %64 = arith.subf %12, %63 : vector<24x1xf32>
    %65 = math.exp %64 : vector<24x1xf32>
    %66 = vector.broadcast %63 : vector<24x1xf32> to vector<24x24xf32>
    %67 = arith.subf %60, %66 : vector<24x24xf32>
    %68 = arith.truncf %67 : vector<24x24xf32> to vector<24x24xbf16>
    %69 = math.exp %68 : vector<24x24xbf16>
    %70 = arith.mulf %65, %16 : vector<24x1xf32>
    %71 = arith.extf %69 : vector<24x24xbf16> to vector<24x24xf32>
    %cst_25 = arith.constant dense<0.000000e+00> : vector<24xf32>
    %72 = vector.multi_reduction <add>, %71, %cst_25 [1] : vector<24x24xf32> to vector<24xf32>
    %73 = vector.shape_cast %72 : vector<24xf32> to vector<24x1xf32>
    %74 = arith.addf %70, %73 : vector<24x1xf32>
    %75 = vector.broadcast %65 : vector<24x1xf32> to vector<24x8xf32>
    %76 = arith.mulf %75, %20 : vector<24x8xf32>
    %77 = vector.extract_strided_slice %24 {offsets = [0, 8], sizes = [24, 8], strides = [1, 1]} : vector<24x32xbf16> to vector<24x8xbf16>
    %cst_26 = arith.constant dense<0.000000e+00> : vector<24x8xf32>
    %78 = tpu.matmul %69, %77, %cst_26 {dimension_numbers = #tpu.dot_dimension_numbers<[1], [0], [0], [1], [0, 0, 1, 1], [], []>} : vector<24x24xbf16>, vector<24x8xbf16>, vector<24x8xf32> -> vector<24x8xf32>
    %79 = arith.addf %76, %78 : vector<24x8xf32>
    %80 = vector.extract_strided_slice %23 {offsets = [0, 16], sizes = [24, 8], strides = [1, 1]} : vector<24x32xbf16> to vector<24x8xbf16>
    %cst_27 = arith.constant dense<0.000000e+00> : vector<24x24xf32>
    %81 = tpu.matmul %9, %80, %cst_27 {dimension_numbers = #tpu.dot_dimension_numbers<[1], [1], [0], [0], [0, 0, 1, 0], [], []>} : vector<24x8xbf16>, vector<24x8xbf16>, vector<24x24xf32> -> vector<24x24xf32>
    %cst_28 = arith.constant -1.000000e+30 : f32
    %82 = vector.shape_cast %29 : vector<1x24xi1> to vector<1x24xi1>
    %83 = vector.broadcast %82 : vector<1x24xi1> to vector<24x24xi1>
    %84 = vector.broadcast %cst_28 : f32 to vector<24x24xf32>
    %85 = arith.select %83, %81, %84 : vector<24x24xi1>, vector<24x24xf32>
    %cst_29 = arith.constant dense<0xFF800000> : vector<24xf32>
    %86 = vector.multi_reduction <maximumf>, %85, %cst_29 [1] : vector<24x24xf32> to vector<24xf32>
    %87 = vector.shape_cast %86 : vector<24xf32> to vector<24x1xf32>
    %88 = arith.maximumf %13, %87 : vector<24x1xf32>
    %89 = arith.subf %13, %88 : vector<24x1xf32>
    %90 = math.exp %89 : vector<24x1xf32>
    %91 = vector.broadcast %88 : vector<24x1xf32> to vector<24x24xf32>
    %92 = arith.subf %85, %91 : vector<24x24xf32>
    %93 = arith.truncf %92 : vector<24x24xf32> to vector<24x24xbf16>
    %94 = math.exp %93 : vector<24x24xbf16>
    %95 = arith.mulf %90, %17 : vector<24x1xf32>
    %96 = arith.extf %94 : vector<24x24xbf16> to vector<24x24xf32>
    %cst_30 = arith.constant dense<0.000000e+00> : vector<24xf32>
    %97 = vector.multi_reduction <add>, %96, %cst_30 [1] : vector<24x24xf32> to vector<24xf32>
    %98 = vector.shape_cast %97 : vector<24xf32> to vector<24x1xf32>
    %99 = arith.addf %95, %98 : vector<24x1xf32>
    %100 = vector.broadcast %90 : vector<24x1xf32> to vector<24x8xf32>
    %101 = arith.mulf %100, %21 : vector<24x8xf32>
    %102 = vector.extract_strided_slice %24 {offsets = [0, 16], sizes = [24, 8], strides = [1, 1]} : vector<24x32xbf16> to vector<24x8xbf16>
    %cst_31 = arith.constant dense<0.000000e+00> : vector<24x8xf32>
    %103 = tpu.matmul %94, %102, %cst_31 {dimension_numbers = #tpu.dot_dimension_numbers<[1], [0], [0], [1], [0, 0, 1, 1], [], []>} : vector<24x24xbf16>, vector<24x8xbf16>, vector<24x8xf32> -> vector<24x8xf32>
    %104 = arith.addf %101, %103 : vector<24x8xf32>
    %105 = vector.extract_strided_slice %23 {offsets = [0, 24], sizes = [24, 8], strides = [1, 1]} : vector<24x32xbf16> to vector<24x8xbf16>
    %cst_32 = arith.constant dense<0.000000e+00> : vector<24x24xf32>
    %106 = tpu.matmul %10, %105, %cst_32 {dimension_numbers = #tpu.dot_dimension_numbers<[1], [1], [0], [0], [0, 0, 1, 0], [], []>} : vector<24x8xbf16>, vector<24x8xbf16>, vector<24x24xf32> -> vector<24x24xf32>
    %cst_33 = arith.constant -1.000000e+30 : f32
    %107 = vector.shape_cast %29 : vector<1x24xi1> to vector<1x24xi1>
    %108 = vector.broadcast %107 : vector<1x24xi1> to vector<24x24xi1>
    %109 = vector.broadcast %cst_33 : f32 to vector<24x24xf32>
    %110 = arith.select %108, %106, %109 : vector<24x24xi1>, vector<24x24xf32>
    %cst_34 = arith.constant dense<0xFF800000> : vector<24xf32>
    %111 = vector.multi_reduction <maximumf>, %110, %cst_34 [1] : vector<24x24xf32> to vector<24xf32>
    %112 = vector.shape_cast %111 : vector<24xf32> to vector<24x1xf32>
    %113 = arith.maximumf %14, %112 : vector<24x1xf32>
    %114 = arith.subf %14, %113 : vector<24x1xf32>
    %115 = math.exp %114 : vector<24x1xf32>
    %116 = vector.broadcast %113 : vector<24x1xf32> to vector<24x24xf32>
    %117 = arith.subf %110, %116 : vector<24x24xf32>
    %118 = arith.truncf %117 : vector<24x24xf32> to vector<24x24xbf16>
    %119 = math.exp %118 : vector<24x24xbf16>
    %120 = arith.mulf %115, %18 : vector<24x1xf32>
    %121 = arith.extf %119 : vector<24x24xbf16> to vector<24x24xf32>
    %cst_35 = arith.constant dense<0.000000e+00> : vector<24xf32>
    %122 = vector.multi_reduction <add>, %121, %cst_35 [1] : vector<24x24xf32> to vector<24xf32>
    %123 = vector.shape_cast %122 : vector<24xf32> to vector<24x1xf32>
    %124 = arith.addf %120, %123 : vector<24x1xf32>
    %125 = vector.broadcast %115 : vector<24x1xf32> to vector<24x8xf32>
    %126 = arith.mulf %125, %22 : vector<24x8xf32>
    %127 = vector.extract_strided_slice %24 {offsets = [0, 24], sizes = [24, 8], strides = [1, 1]} : vector<24x32xbf16> to vector<24x8xbf16>
    %cst_36 = arith.constant dense<0.000000e+00> : vector<24x8xf32>
    %128 = tpu.matmul %119, %127, %cst_36 {dimension_numbers = #tpu.dot_dimension_numbers<[1], [0], [0], [1], [0, 0, 1, 1], [], []>} : vector<24x24xbf16>, vector<24x8xbf16>, vector<24x8xf32> -> vector<24x8xf32>
    %129 = arith.addf %126, %128 : vector<24x8xf32>
    %cst_37 = arith.constant 0.000000e+00 : f32
    %130 = vector.broadcast %cst_37 : f32 to vector<24x32xf32>
    %131 = tpu.reciprocal %49 {approx = true} : vector<24x1xf32> -> vector<24x1xf32>
    %132 = vector.broadcast %131 : vector<24x1xf32> to vector<24x8xf32>
    %133 = arith.mulf %54, %132 : vector<24x8xf32>
    %134 = arith.truncf %133 : vector<24x8xf32> to vector<24x8xbf16>
    %c0_38 = arith.constant 0 : index
    %c0_39 = arith.constant 0 : index
    %c0_40 = arith.constant 0 : index
    %135 = vector.load %arg6[%c0_38, %c0_39, %c0_40] : memref<4x8x32xbf16, #tpu.memory_space<vmem>>, vector<1x8x32xbf16>
    %136 = vector.shape_cast %135 : vector<1x8x32xbf16> to vector<8x32xbf16>
    %cst_41 = arith.constant dense<0.000000e+00> : vector<24x32xf32>
    %137 = tpu.matmul %134, %136, %cst_41 {dimension_numbers = #tpu.dot_dimension_numbers<[1], [0], [0], [1], [0, 0, 1, 1], [], []>} : vector<24x8xbf16>, vector<8x32xbf16>, vector<24x32xf32> -> vector<24x32xf32>
    %138 = arith.addf %130, %137 : vector<24x32xf32>
    %139 = tpu.reciprocal %74 {approx = true} : vector<24x1xf32> -> vector<24x1xf32>
    %140 = vector.broadcast %139 : vector<24x1xf32> to vector<24x8xf32>
    %141 = arith.mulf %79, %140 : vector<24x8xf32>
    %142 = arith.truncf %141 : vector<24x8xf32> to vector<24x8xbf16>
    %c1 = arith.constant 1 : index
    %c0_42 = arith.constant 0 : index
    %c0_43 = arith.constant 0 : index
    %143 = vector.load %arg6[%c1, %c0_42, %c0_43] : memref<4x8x32xbf16, #tpu.memory_space<vmem>>, vector<1x8x32xbf16>
    %144 = vector.shape_cast %143 : vector<1x8x32xbf16> to vector<8x32xbf16>
    %cst_44 = arith.constant dense<0.000000e+00> : vector<24x32xf32>
    %145 = tpu.matmul %142, %144, %cst_44 {dimension_numbers = #tpu.dot_dimension_numbers<[1], [0], [0], [1], [0, 0, 1, 1], [], []>} : vector<24x8xbf16>, vector<8x32xbf16>, vector<24x32xf32> -> vector<24x32xf32>
    %146 = arith.addf %138, %145 : vector<24x32xf32>
    %147 = tpu.reciprocal %99 {approx = true} : vector<24x1xf32> -> vector<24x1xf32>
    %148 = vector.broadcast %147 : vector<24x1xf32> to vector<24x8xf32>
    %149 = arith.mulf %104, %148 : vector<24x8xf32>
    %150 = arith.truncf %149 : vector<24x8xf32> to vector<24x8xbf16>
    %c2 = arith.constant 2 : index
    %c0_45 = arith.constant 0 : index
    %c0_46 = arith.constant 0 : index
    %151 = vector.load %arg6[%c2, %c0_45, %c0_46] : memref<4x8x32xbf16, #tpu.memory_space<vmem>>, vector<1x8x32xbf16>
    %152 = vector.shape_cast %151 : vector<1x8x32xbf16> to vector<8x32xbf16>
    %cst_47 = arith.constant dense<0.000000e+00> : vector<24x32xf32>
    %153 = tpu.matmul %150, %152, %cst_47 {dimension_numbers = #tpu.dot_dimension_numbers<[1], [0], [0], [1], [0, 0, 1, 1], [], []>} : vector<24x8xbf16>, vector<8x32xbf16>, vector<24x32xf32> -> vector<24x32xf32>
    %154 = arith.addf %146, %153 : vector<24x32xf32>
    %155 = tpu.reciprocal %124 {approx = true} : vector<24x1xf32> -> vector<24x1xf32>
    %156 = vector.broadcast %155 : vector<24x1xf32> to vector<24x8xf32>
    %157 = arith.mulf %129, %156 : vector<24x8xf32>
    %158 = arith.truncf %157 : vector<24x8xf32> to vector<24x8xbf16>
    %c3 = arith.constant 3 : index
    %c0_48 = arith.constant 0 : index
    %c0_49 = arith.constant 0 : index
    %159 = vector.load %arg6[%c3, %c0_48, %c0_49] : memref<4x8x32xbf16, #tpu.memory_space<vmem>>, vector<1x8x32xbf16>
    %160 = vector.shape_cast %159 : vector<1x8x32xbf16> to vector<8x32xbf16>
    %cst_50 = arith.constant dense<0.000000e+00> : vector<24x32xf32>
    %161 = tpu.matmul %158, %160, %cst_50 {dimension_numbers = #tpu.dot_dimension_numbers<[1], [0], [0], [1], [0, 0, 1, 1], [], []>} : vector<24x8xbf16>, vector<8x32xbf16>, vector<24x32xf32> -> vector<24x32xf32>
    %162 = arith.addf %154, %161 : vector<24x32xf32>
    %c0_51 = arith.constant 0 : index
    %c0_52 = arith.constant 0 : index
    %163 = vector.load %arg7[%c0_51, %c0_52] : memref<1x32xf32, #tpu.memory_space<vmem>>, vector<1x32xf32>
    %164 = vector.broadcast %163 : vector<1x32xf32> to vector<24x32xf32>
    %165 = arith.addf %162, %164 : vector<24x32xf32>
    %c0_53 = arith.constant 0 : index
    %166 = arith.index_cast %4 : i32 to index
    %c0_54 = arith.constant 0 : index
    %167 = vector.load %arg2[%c0_53, %166, %c0_54] : memref<1x24x32xbf16, #tpu.memory_space<vmem>>, vector<1x24x32xbf16>
    %168 = vector.shape_cast %167 : vector<1x24x32xbf16> to vector<24x32xbf16>
    %169 = arith.extf %168 : vector<24x32xbf16> to vector<24x32xf32>
    %170 = arith.addf %169, %165 : vector<24x32xf32>
    %171 = arith.truncf %170 : vector<24x32xf32> to vector<24x32xbf16>
    %c0_55 = arith.constant 0 : index
    %c0_56 = arith.constant 0 : index
    %c0_57 = arith.constant 0 : index
    %172 = vector.load %arg8[%c0_55, %c0_56, %c0_57] : memref<1x24x32xbf16, #tpu.memory_space<vmem>>, vector<1x24x32xbf16>
    %173 = vector.shape_cast %172 : vector<1x24x32xbf16> to vector<24x32xbf16>
    %174 = vector.shape_cast %171 : vector<24x32xbf16> to vector<1x24x32xbf16>
    tpu.vector_store %arg8[%c0_55, %c0_56, %c0_57], %174 {strides = array<i32>} : memref<1x24x32xbf16, #tpu.memory_space<vmem>>, vector<1x24x32xbf16>,
    return
  }
  func.func @transform_0(%arg0: i32, %arg1: i32) -> (i32, i32, i32) {
    %c0_i32 = arith.constant 0 : i32
    %c0_i32_0 = arith.constant 0 : i32
    %c0_i32_1 = arith.constant 0 : i32
    return %arg0, %c0_i32, %c0_i32_0 : i32, i32, i32
  }
  func.func @transform_1(%arg0: i32, %arg1: i32) -> (i32, i32) {
    %c0_i32 = arith.constant 0 : i32
    %c0_i32_0 = arith.constant 0 : i32
    %c0_i32_1 = arith.constant 0 : i32
    return %c0_i32, %c0_i32_0 : i32, i32
  }
  func.func @transform_2(%arg0: i32, %arg1: i32) -> (i32, i32) {
    %c0_i32 = arith.constant 0 : i32
    %c0_i32_0 = arith.constant 0 : i32
    %c0_i32_1 = arith.constant 0 : i32
    return %c0_i32, %c0_i32_0 : i32, i32
  }
  func.func @transform_3(%arg0: i32, %arg1: i32) -> (i32, i32) {
    %c0_i32 = arith.constant 0 : i32
    %c0_i32_0 = arith.constant 0 : i32
    %c0_i32_1 = arith.constant 0 : i32
    return %c0_i32, %c0_i32_0 : i32, i32
  }
  func.func @transform_4(%arg0: i32, %arg1: i32) -> (i32, i32, i32) {
    %c0_i32 = arith.constant 0 : i32
    %c0_i32_0 = arith.constant 0 : i32
    %c0_i32_1 = arith.constant 0 : i32
    %c0_i32_2 = arith.constant 0 : i32
    return %c0_i32, %c0_i32_0, %c0_i32_1 : i32, i32, i32
  }
  func.func @transform_5(%arg0: i32, %arg1: i32) -> (i32, i32) {
    %c0_i32 = arith.constant 0 : i32
    %c0_i32_0 = arith.constant 0 : i32
    %c0_i32_1 = arith.constant 0 : i32
    return %c0_i32, %c0_i32_0 : i32, i32
  }
  func.func @transform_6(%arg0: i32, %arg1: i32) -> (i32, i32, i32) {
    %c0_i32 = arith.constant 0 : i32
    %c0_i32_0 = arith.constant 0 : i32
    return %arg0, %arg1, %c0_i32 : i32, i32, i32
  }
  func.func @transform_7(%arg0: i32, %arg1: i32) -> (i32, i32, i32) {
    %c0_i32 = arith.constant 0 : i32
    %c0_i32_0 = arith.constant 0 : i32
    %c0_i32_1 = arith.constant 0 : i32
    return %arg0, %c0_i32, %c0_i32_0 : i32, i32, i32
  }
}

module attributes {stable_mosaic.version = 11 : i64} {
  func.func @_attn_kernel(%arg0: i32, %arg1: i32, %arg2: memref<1x24x32xbf16, #tpu.memory_space<vmem>>, %arg3: memref<1x32xf32, #tpu.memory_space<vmem>>, %arg4: memref<1x32xf32, #tpu.memory_space<vmem>>, %arg5: memref<32x96xbf16, #tpu.memory_space<vmem>>, %arg6: memref<4x8x32xbf16, #tpu.memory_space<vmem>>, %arg7: memref<1x32xf32, #tpu.memory_space<vmem>>, %arg8: memref<1x24x32xbf16, #tpu.memory_space<vmem>>, %arg9: memref<1x1x24xf32, #tpu.memory_space<vmem>>, %arg10: memref<24x32xbf16, #tpu.memory_space<vmem>>, %arg11: memref<24x32xbf16, #tpu.memory_space<vmem>>, %arg12: memref<24x32xbf16, #tpu.memory_space<vmem>>) attributes {dimension_semantics = [#tpu.dimension_semantics<parallel>, #tpu.dimension_semantics<arbitrary>], iteration_bounds = array<i64: 2, 1>, scalar_prefetch = 0 : i64, scratch_operands = 3 : i64, tpu.core_type = #tpu.core_type<tc>, window_params = [{transform_indices = @transform_0, window_bounds = array<i64: 1, 24, 32>}, {pipeline_mode = #tpu.pipeline_mode<synchronous>, transform_indices = @transform_1, window_bounds = array<i64: 1, 32>}, {pipeline_mode = #tpu.pipeline_mode<synchronous>, transform_indices = @transform_2, window_bounds = array<i64: 1, 32>}, {pipeline_mode = #tpu.pipeline_mode<synchronous>, transform_indices = @transform_3, window_bounds = array<i64: 32, 96>}, {pipeline_mode = #tpu.pipeline_mode<synchronous>, transform_indices = @transform_4, window_bounds = array<i64: 4, 8, 32>}, {pipeline_mode = #tpu.pipeline_mode<synchronous>, transform_indices = @transform_5, window_bounds = array<i64: 1, 32>}, {transform_indices = @transform_6, window_bounds = array<i64: 1, 24, 32>}, {transform_indices = @transform_7, window_bounds = array<i64: 1, 1, 24>}]} {
    %c0_i32 = arith.constant 0 : i32
    %0 = arith.cmpi eq, %arg1, %c0_i32 : i32
    %1 = arith.extui %0 : i1 to i32
    %c0_i32_0 = arith.constant 0 : i32
    %2 = arith.cmpi ne, %1, %c0_i32_0 : i32
    scf.if %2 {
      %c0_58 = arith.constant 0 : index
      %c0_59 = arith.constant 0 : index
      %c0_60 = arith.constant 0 : index
      %175 = vector.load %arg2[%c0_58, %c0_59, %c0_60] : memref<1x24x32xbf16, #tpu.memory_space<vmem>>, vector<1x24x32xbf16>
      %176 = vector.shape_cast %175 : vector<1x24x32xbf16> to vector<24x32xbf16>
      %177 = arith.extf %176 : vector<24x32xbf16> to vector<24x32xf32>
      %c0_61 = arith.constant 0 : index
      %c0_62 = arith.constant 0 : index
      %178 = vector.load %arg3[%c0_61, %c0_62] : memref<1x32xf32, #tpu.memory_space<vmem>>, vector<1x32xf32>
      %c0_63 = arith.constant 0 : index
      %c0_64 = arith.constant 0 : index
      %179 = vector.load %arg4[%c0_63, %c0_64] : memref<1x32xf32, #tpu.memory_space<vmem>>, vector<1x32xf32>
      %cst_65 = arith.constant dense<0.000000e+00> : vector<24xf32>
      %180 = vector.multi_reduction <add>, %177, %cst_65 [1] : vector<24x32xf32> to vector<24xf32>
      %181 = vector.shape_cast %180 : vector<24xf32> to vector<24x1xf32>
      %cst_66 = arith.constant 3.200000e+01 : f32
      %182 = vector.broadcast %cst_66 : f32 to vector<24x1xf32>
      %183 = arith.divf %181, %182 : vector<24x1xf32>
      %184 = vector.broadcast %183 : vector<24x1xf32> to vector<24x32xf32>
      %185 = arith.subf %177, %184 : vector<24x32xf32>
      %186 = arith.mulf %185, %185 : vector<24x32xf32>
      %cst_67 = arith.constant dense<0.000000e+00> : vector<24xf32>
      %187 = vector.multi_reduction <add>, %186, %cst_67 [1] : vector<24x32xf32> to vector<24xf32>
      %188 = vector.shape_cast %187 : vector<24xf32> to vector<24x1xf32>
      %cst_68 = arith.constant 3.200000e+01 : f32
      %189 = vector.broadcast %cst_68 : f32 to vector<24x1xf32>
      %190 = arith.divf %188, %189 : vector<24x1xf32>
      %191 = vector.broadcast %183 : vector<24x1xf32> to vector<24x32xf32>
      %192 = arith.subf %177, %191 : vector<24x32xf32>
      %cst_69 = arith.constant 9.99999974E-6 : f32
      %193 = vector.broadcast %cst_69 : f32 to vector<24x1xf32>
      %194 = arith.addf %190, %193 : vector<24x1xf32>
      %195 = math.rsqrt %194 : vector<24x1xf32>
      %196 = vector.broadcast %195 : vector<24x1xf32> to vector<24x32xf32>
      %197 = arith.mulf %192, %196 : vector<24x32xf32>
      %198 = vector.broadcast %178 : vector<1x32xf32> to vector<24x32xf32>
      %199 = arith.mulf %197, %198 : vector<24x32xf32>
      %200 = vector.broadcast %179 : vector<1x32xf32> to vector<24x32xf32>
      %201 = arith.addf %199, %200 : vector<24x32xf32>
      %202 = arith.truncf %201 : vector<24x32xf32> to vector<24x32xbf16>
      %c0_70 = arith.constant 0 : index
      %c0_71 = arith.constant 0 : index
      %203 = vector.load %arg5[%c0_70, %c0_71] : memref<32x96xbf16, #tpu.memory_space<vmem>>, vector<32x96xbf16>
      %cst_72 = arith.constant dense<0.000000e+00> : vector<24x96xf32>
      %204 = tpu.matmul %202, %203, %cst_72 {dimension_numbers = #tpu.dot_dimension_numbers<[1], [0], [0], [1], [0, 0, 1, 1], [], []>} : vector<24x32xbf16>, vector<32x96xbf16>, vector<24x96xf32> -> vector<24x96xf32>
      %205 = vector.extract_strided_slice %204 {offsets = [0, 0], sizes = [24, 32], strides = [1, 1]} : vector<24x96xf32> to vector<24x32xf32>
      %206 = arith.truncf %205 : vector<24x32xf32> to vector<24x32xbf16>
      %207 = vector.extract_strided_slice %204 {offsets = [0, 32], sizes = [24, 32], strides = [1, 1]} : vector<24x96xf32> to vector<24x32xf32>
      %208 = arith.truncf %207 : vector<24x32xf32> to vector<24x32xbf16>
      %209 = vector.extract_strided_slice %204 {offsets = [0, 64], sizes = [24, 32], strides = [1, 1]} : vector<24x96xf32> to vector<24x32xf32>
      %210 = arith.truncf %209 : vector<24x32xf32> to vector<24x32xbf16>
      %c0_73 = arith.constant 0 : index
      %c0_74 = arith.constant 0 : index
      %211 = vector.load %arg10[%c0_73, %c0_74] : memref<24x32xbf16, #tpu.memory_space<vmem>>, vector<24x32xbf16>
      tpu.vector_store %arg10[%c0_73, %c0_74], %206 {strides = array<i32>} : memref<24x32xbf16, #tpu.memory_space<vmem>>, vector<24x32xbf16>,
      %c0_75 = arith.constant 0 : index
      %c0_76 = arith.constant 0 : index
      %212 = vector.load %arg11[%c0_75, %c0_76] : memref<24x32xbf16, #tpu.memory_space<vmem>>, vector<24x32xbf16>
      tpu.vector_store %arg11[%c0_75, %c0_76], %208 {strides = array<i32>} : memref<24x32xbf16, #tpu.memory_space<vmem>>, vector<24x32xbf16>,
      %c0_77 = arith.constant 0 : index
      %c0_78 = arith.constant 0 : index
      %213 = vector.load %arg12[%c0_77, %c0_78] : memref<24x32xbf16, #tpu.memory_space<vmem>>, vector<24x32xbf16>
      tpu.vector_store %arg12[%c0_77, %c0_78], %210 {strides = array<i32>} : memref<24x32xbf16, #tpu.memory_space<vmem>>, vector<24x32xbf16>,
      %214 = tpu.iota {dimensions = array<i32: 1>} : vector<1x24xi32>
      %c17_i32_79 = arith.constant 17 : i32
      %215 = vector.broadcast %c17_i32_79 : i32 to vector<1x24xi32>
      %216 = arith.cmpi slt, %214, %215 : vector<1x24xi32>
      %cst_80 = arith.constant 0.000000e+00 : f32
      %217 = vector.broadcast %cst_80 : f32 to vector<1x24xf32>
      %218 = vector.extract_strided_slice %206 {offsets = [0, 0], sizes = [1, 8], strides = [1, 1]} : vector<24x32xbf16> to vector<1x8xbf16>
      %219 = vector.extract_strided_slice %208 {offsets = [0, 0], sizes = [24, 8], strides = [1, 1]} : vector<24x32xbf16> to vector<24x8xbf16>
      %cst_81 = arith.constant dense<0.000000e+00> : vector<1x24xf32>
      %220 = tpu.matmul %218, %219, %cst_81 {dimension_numbers = #tpu.dot_dimension_numbers<[1], [1], [0], [0], [0, 0, 1, 0], [], []>} : vector<1x8xbf16>, vector<24x8xbf16>, vector<1x24xf32> -> vector<1x24xf32>
      %cst_82 = arith.constant -1.000000e+30 : f32
      %221 = vector.broadcast %cst_82 : f32 to vector<1x24xf32>
      %222 = arith.select %216, %220, %221 : vector<1x24xi1>, vector<1x24xf32>
      %cst_83 = arith.constant dense<0xFF800000> : vector<1xf32>
      %223 = vector.multi_reduction <maximumf>, %222, %cst_83 [1] : vector<1x24xf32> to vector<1xf32>
      %224 = vector.shape_cast %223 : vector<1xf32> to vector<1x1xf32>
      %225 = vector.broadcast %224 : vector<1x1xf32> to vector<1x24xf32>
      %226 = arith.subf %222, %225 : vector<1x24xf32>
      %227 = math.exp %226 : vector<1x24xf32>
      %cst_84 = arith.constant dense<0.000000e+00> : vector<1xf32>
      %228 = vector.multi_reduction <add>, %227, %cst_84 [1] : vector<1x24xf32> to vector<1xf32>
      %229 = vector.shape_cast %228 : vector<1xf32> to vector<1x1xf32>
      %230 = vector.broadcast %229 : vector<1x1xf32> to vector<1x24xf32>
      %231 = arith.divf %227, %230 : vector<1x24xf32>
      %232 = arith.addf %217, %231 : vector<1x24xf32>
      %233 = vector.extract_strided_slice %206 {offsets = [0, 8], sizes = [1, 8], strides = [1, 1]} : vector<24x32xbf16> to vector<1x8xbf16>
      %234 = vector.extract_strided_slice %208 {offsets = [0, 8], sizes = [24, 8], strides = [1, 1]} : vector<24x32xbf16> to vector<24x8xbf16>
      %cst_85 = arith.constant dense<0.000000e+00> : vector<1x24xf32>
      %235 = tpu.matmul %233, %234, %cst_85 {dimension_numbers = #tpu.dot_dimension_numbers<[1], [1], [0], [0], [0, 0, 1, 0], [], []>} : vector<1x8xbf16>, vector<24x8xbf16>, vector<1x24xf32> -> vector<1x24xf32>
      %cst_86 = arith.constant -1.000000e+30 : f32
      %236 = vector.broadcast %cst_86 : f32 to vector<1x24xf32>
      %237 = arith.select %216, %235, %236 : vector<1x24xi1>, vector<1x24xf32>
      %cst_87 = arith.constant dense<0xFF800000> : vector<1xf32>
      %238 = vector.multi_reduction <maximumf>, %237, %cst_87 [1] : vector<1x24xf32> to vector<1xf32>
      %239 = vector.shape_cast %238 : vector<1xf32> to vector<1x1xf32>
      %240 = vector.broadcast %239 : vector<1x1xf32> to vector<1x24xf32>
      %241 = arith.subf %237, %240 : vector<1x24xf32>
      %242 = math.exp %241 : vector<1x24xf32>
      %cst_88 = arith.constant dense<0.000000e+00> : vector<1xf32>
      %243 = vector.multi_reduction <add>, %242, %cst_88 [1] : vector<1x24xf32> to vector<1xf32>
      %244 = vector.shape_cast %243 : vector<1xf32> to vector<1x1xf32>
      %245 = vector.broadcast %244 : vector<1x1xf32> to vector<1x24xf32>
      %246 = arith.divf %242, %245 : vector<1x24xf32>
      %247 = arith.addf %232, %246 : vector<1x24xf32>
      %248 = vector.extract_strided_slice %206 {offsets = [0, 16], sizes = [1, 8], strides = [1, 1]} : vector<24x32xbf16> to vector<1x8xbf16>
      %249 = vector.extract_strided_slice %208 {offsets = [0, 16], sizes = [24, 8], strides = [1, 1]} : vector<24x32xbf16> to vector<24x8xbf16>
      %cst_89 = arith.constant dense<0.000000e+00> : vector<1x24xf32>
      %250 = tpu.matmul %248, %249, %cst_89 {dimension_numbers = #tpu.dot_dimension_numbers<[1], [1], [0], [0], [0, 0, 1, 0], [], []>} : vector<1x8xbf16>, vector<24x8xbf16>, vector<1x24xf32> -> vector<1x24xf32>
      %cst_90 = arith.constant -1.000000e+30 : f32
      %251 = vector.broadcast %cst_90 : f32 to vector<1x24xf32>
      %252 = arith.select %216, %250, %251 : vector<1x24xi1>, vector<1x24xf32>
      %cst_91 = arith.constant dense<0xFF800000> : vector<1xf32>
      %253 = vector.multi_reduction <maximumf>, %252, %cst_91 [1] : vector<1x24xf32> to vector<1xf32>
      %254 = vector.shape_cast %253 : vector<1xf32> to vector<1x1xf32>
      %255 = vector.broadcast %254 : vector<1x1xf32> to vector<1x24xf32>
      %256 = arith.subf %252, %255 : vector<1x24xf32>
      %257 = math.exp %256 : vector<1x24xf32>
      %cst_92 = arith.constant dense<0.000000e+00> : vector<1xf32>
      %258 = vector.multi_reduction <add>, %257, %cst_92 [1] : vector<1x24xf32> to vector<1xf32>
      %259 = vector.shape_cast %258 : vector<1xf32> to vector<1x1xf32>
      %260 = vector.broadcast %259 : vector<1x1xf32> to vector<1x24xf32>
      %261 = arith.divf %257, %260 : vector<1x24xf32>
      %262 = arith.addf %247, %261 : vector<1x24xf32>
      %263 = vector.extract_strided_slice %206 {offsets = [0, 24], sizes = [1, 8], strides = [1, 1]} : vector<24x32xbf16> to vector<1x8xbf16>
      %264 = vector.extract_strided_slice %208 {offsets = [0, 24], sizes = [24, 8], strides = [1, 1]} : vector<24x32xbf16> to vector<24x8xbf16>
      %cst_93 = arith.constant dense<0.000000e+00> : vector<1x24xf32>
      %265 = tpu.matmul %263, %264, %cst_93 {dimension_numbers = #tpu.dot_dimension_numbers<[1], [1], [0], [0], [0, 0, 1, 0], [], []>} : vector<1x8xbf16>, vector<24x8xbf16>, vector<1x24xf32> -> vector<1x24xf32>
      %cst_94 = arith.constant -1.000000e+30 : f32
      %266 = vector.broadcast %cst_94 : f32 to vector<1x24xf32>
      %267 = arith.select %216, %265, %266 : vector<1x24xi1>, vector<1x24xf32>
      %cst_95 = arith.constant dense<0xFF800000> : vector<1xf32>
      %268 = vector.multi_reduction <maximumf>, %267, %cst_95 [1] : vector<1x24xf32> to vector<1xf32>
      %269 = vector.shape_cast %268 : vector<1xf32> to vector<1x1xf32>
      %270 = vector.broadcast %269 : vector<1x1xf32> to vector<1x24xf32>
      %271 = arith.subf %267, %270 : vector<1x24xf32>
      %272 = math.exp %271 : vector<1x24xf32>
      %cst_96 = arith.constant dense<0.000000e+00> : vector<1xf32>
      %273 = vector.multi_reduction <add>, %272, %cst_96 [1] : vector<1x24xf32> to vector<1xf32>
      %274 = vector.shape_cast %273 : vector<1xf32> to vector<1x1xf32>
      %275 = vector.broadcast %274 : vector<1x1xf32> to vector<1x24xf32>
      %276 = arith.divf %272, %275 : vector<1x24xf32>
      %277 = arith.addf %262, %276 : vector<1x24xf32>
      %cst_97 = arith.constant 2.500000e-01 : f32
      %278 = vector.broadcast %cst_97 : f32 to vector<1x24xf32>
      %279 = arith.mulf %277, %278 : vector<1x24xf32>
      %c0_98 = arith.constant 0 : index
      %c0_99 = arith.constant 0 : index
      %c0_100 = arith.constant 0 : index
      %280 = vector.load %arg9[%c0_98, %c0_99, %c0_100] : memref<1x1x24xf32, #tpu.memory_space<vmem>>, vector<1x1x24xf32>
      %281 = vector.shape_cast %280 : vector<1x1x24xf32> to vector<1x24xf32>
      %282 = vector.shape_cast %279 : vector<1x24xf32> to vector<1x1x24xf32>
      tpu.vector_store %arg9[%c0_98, %c0_99, %c0_100], %282 {strides = array<i32>} : memref<1x1x24xf32, #tpu.memory_space<vmem>>, vector<1x1x24xf32>,
    } else {
    }
    %c24_i32 = arith.constant 24 : i32
    %3 = arith.muli %arg1, %c24_i32 : i32
    %4 = tpu.assume_multiple %3, 8 : i32
    %5 = arith.index_cast %4 : i32 to index
    %c0 = arith.constant 0 : index
    %6 = vector.load %arg10[%5, %c0] : memref<24x32xbf16, #tpu.memory_space<vmem>>, vector<24x32xbf16>
    %7 = vector.extract_strided_slice %6 {offsets = [0, 0], sizes = [24, 8], strides = [1, 1]} : vector<24x32xbf16> to vector<24x8xbf16>
    %8 = vector.extract_strided_slice %6 {offsets = [0, 8], sizes = [24, 8], strides = [1, 1]} : vector<24x32xbf16> to vector<24x8xbf16>
    %9 = vector.extract_strided_slice %6 {offsets = [0, 16], sizes = [24, 8], strides = [1, 1]} : vector<24x32xbf16> to vector<24x8xbf16>
    %10 = vector.extract_strided_slice %6 {offsets = [0, 24], sizes = [24, 8], strides = [1, 1]} : vector<24x32xbf16> to vector<24x8xbf16>
    %cst = arith.constant -1.000000e+30 : f32
    %11 = vector.broadcast %cst : f32 to vector<24x1xf32>
    %cst_1 = arith.constant -1.000000e+30 : f32
    %12 = vector.broadcast %cst_1 : f32 to vector<24x1xf32>
    %cst_2 = arith.constant -1.000000e+30 : f32
    %13 = vector.broadcast %cst_2 : f32 to vector<24x1xf32>
    %cst_3 = arith.constant -1.000000e+30 : f32
    %14 = vector.broadcast %cst_3 : f32 to vector<24x1xf32>
    %cst_4 = arith.constant 0.000000e+00 : f32
    %15 = vector.broadcast %cst_4 : f32 to vector<24x1xf32>
    %cst_5 = arith.constant 0.000000e+00 : f32
    %16 = vector.broadcast %cst_5 : f32 to vector<24x1xf32>
    %cst_6 = arith.constant 0.000000e+00 : f32
    %17 = vector.broadcast %cst_6 : f32 to vector<24x1xf32>
    %cst_7 = arith.constant 0.000000e+00 : f32
    %18 = vector.broadcast %cst_7 : f32 to vector<24x1xf32>
    %cst_8 = arith.constant 0.000000e+00 : f32
    %19 = vector.broadcast %cst_8 : f32 to vector<24x8xf32>
    %cst_9 = arith.constant 0.000000e+00 : f32
    %20 = vector.broadcast %cst_9 : f32 to vector<24x8xf32>
    %cst_10 = arith.constant 0.000000e+00 : f32
    %21 = vector.broadcast %cst_10 : f32 to vector<24x8xf32>
    %cst_11 = arith.constant 0.000000e+00 : f32
    %22 = vector.broadcast %cst_11 : f32 to vector<24x8xf32>
    %c0_12 = arith.constant 0 : index
    %c0_13 = arith.constant 0 : index
    %23 = vector.load %arg11[%c0_12, %c0_13] : memref<24x32xbf16, #tpu.memory_space<vmem>>, vector<24x32xbf16>
    %c0_14 = arith.constant 0 : index
    %c0_15 = arith.constant 0 : index
    %24 = vector.load %arg12[%c0_14, %c0_15] : memref<24x32xbf16, #tpu.memory_space<vmem>>, vector<24x32xbf16>
    %25 = tpu.iota {dimensions = array<i32: 1>} : vector<1x24xi32>
    %c0_i32_16 = arith.constant 0 : i32
    %26 = vector.broadcast %c0_i32_16 : i32 to vector<1x24xi32>
    %27 = arith.addi %26, %25 : vector<1x24xi32>
    %c17_i32 = arith.constant 17 : i32
    %28 = vector.broadcast %c17_i32 : i32 to vector<1x24xi32>
    %29 = arith.cmpi slt, %27, %28 : vector<1x24xi32>
    %30 = vector.extract_strided_slice %23 {offsets = [0, 0], sizes = [24, 8], strides = [1, 1]} : vector<24x32xbf16> to vector<24x8xbf16>
    %cst_17 = arith.constant dense<0.000000e+00> : vector<24x24xf32>
    %31 = tpu.matmul %7, %30, %cst_17 {dimension_numbers = #tpu.dot_dimension_numbers<[1], [1], [0], [0], [0, 0, 1, 0], [], []>} : vector<24x8xbf16>, vector<24x8xbf16>, vector<24x24xf32> -> vector<24x24xf32>
    %cst_18 = arith.constant -1.000000e+30 : f32
    %32 = vector.shape_cast %29 : vector<1x24xi1> to vector<1x24xi1>
    %33 = vector.broadcast %32 : vector<1x24xi1> to vector<24x24xi1>
    %34 = vector.broadcast %cst_18 : f32 to vector<24x24xf32>
    %35 = arith.select %33, %31, %34 : vector<24x24xi1>, vector<24x24xf32>
    %cst_19 = arith.constant dense<0xFF800000> : vector<24xf32>
    %36 = vector.multi_reduction <maximumf>, %35, %cst_19 [1] : vector<24x24xf32> to vector<24xf32>
    %37 = vector.shape_cast %36 : vector<24xf32> to vector<24x1xf32>
    %38 = arith.maximumf %11, %37 : vector<24x1xf32>
    %39 = arith.subf %11, %38 : vector<24x1xf32>
    %40 = math.exp %39 : vector<24x1xf32>
    %41 = vector.broadcast %38 : vector<24x1xf32> to vector<24x24xf32>
    %42 = arith.subf %35, %41 : vector<24x24xf32>
    %43 = arith.truncf %42 : vector<24x24xf32> to vector<24x24xbf16>
    %44 = math.exp %43 : vector<24x24xbf16>
    %45 = arith.mulf %40, %15 : vector<24x1xf32>
    %46 = arith.extf %44 : vector<24x24xbf16> to vector<24x24xf32>
    %cst_20 = arith.constant dense<0.000000e+00> : vector<24xf32>
    %47 = vector.multi_reduction <add>, %46, %cst_20 [1] : vector<24x24xf32> to vector<24xf32>
    %48 = vector.shape_cast %47 : vector<24xf32> to vector<24x1xf32>
    %49 = arith.addf %45, %48 : vector<24x1xf32>
    %50 = vector.broadcast %40 : vector<24x1xf32> to vector<24x8xf32>
    %51 = arith.mulf %50, %19 : vector<24x8xf32>
    %52 = vector.extract_strided_slice %24 {offsets = [0, 0], sizes = [24, 8], strides = [1, 1]} : vector<24x32xbf16> to vector<24x8xbf16>
    %cst_21 = arith.constant dense<0.000000e+00> : vector<24x8xf32>
    %53 = tpu.matmul %44, %52, %cst_21 {dimension_numbers = #tpu.dot_dimension_numbers<[1], [0], [0], [1], [0, 0, 1, 1], [], []>} : vector<24x24xbf16>, vector<24x8xbf16>, vector<24x8xf32> -> vector<24x8xf32>
    %54 = arith.addf %51, %53 : vector<24x8xf32>
    %55 = vector.extract_strided_slice %23 {offsets = [0, 8], sizes = [24, 8], strides = [1, 1]} : vector<24x32xbf16> to vector<24x8xbf16>
    %cst_22 = arith.constant dense<0.000000e+00> : vector<24x24xf32>
    %56 = tpu.matmul %8, %55, %cst_22 {dimension_numbers = #tpu.dot_dimension_numbers<[1], [1], [0], [0], [0, 0, 1, 0], [], []>} : vector<24x8xbf16>, vector<24x8xbf16>, vector<24x24xf32> -> vector<24x24xf32>
    %cst_23 = arith.constant -1.000000e+30 : f32
    %57 = vector.shape_cast %29 : vector<1x24xi1> to vector<1x24xi1>
    %58 = vector.broadcast %57 : vector<1x24xi1> to vector<24x24xi1>
    %59 = vector.broadcast %cst_23 : f32 to vector<24x24xf32>
    %60 = arith.select %58, %56, %59 : vector<24x24xi1>, vector<24x24xf32>
    %cst_24 = arith.constant dense<0xFF800000> : vector<24xf32>
    %61 = vector.multi_reduction <maximumf>, %60, %cst_24 [1] : vector<24x24xf32> to vector<24xf32>
    %62 = vector.shape_cast %61 : vector<24xf32> to vector<24x1xf32>
    %63 = arith.maximumf %12, %62 : vector<24x1xf32>
    %64 = arith.subf %12, %63 : vector<24x1xf32>
    %65 = math.exp %64 : vector<24x1xf32>
    %66 = vector.broadcast %63 : vector<24x1xf32> to vector<24x24xf32>
    %67 = arith.subf %60, %66 : vector<24x24xf32>
    %68 = arith.truncf %67 : vector<24x24xf32> to vector<24x24xbf16>
    %69 = math.exp %68 : vector<24x24xbf16>
    %70 = arith.mulf %65, %16 : vector<24x1xf32>
    %71 = arith.extf %69 : vector<24x24xbf16> to vector<24x24xf32>
    %cst_25 = arith.constant dense<0.000000e+00> : vector<24xf32>
    %72 = vector.multi_reduction <add>, %71, %cst_25 [1] : vector<24x24xf32> to vector<24xf32>
    %73 = vector.shape_cast %72 : vector<24xf32> to vector<24x1xf32>
    %74 = arith.addf %70, %73 : vector<24x1xf32>
    %75 = vector.broadcast %65 : vector<24x1xf32> to vector<24x8xf32>
    %76 = arith.mulf %75, %20 : vector<24x8xf32>
    %77 = vector.extract_strided_slice %24 {offsets = [0, 8], sizes = [24, 8], strides = [1, 1]} : vector<24x32xbf16> to vector<24x8xbf16>
    %cst_26 = arith.constant dense<0.000000e+00> : vector<24x8xf32>
    %78 = tpu.matmul %69, %77, %cst_26 {dimension_numbers = #tpu.dot_dimension_numbers<[1], [0], [0], [1], [0, 0, 1, 1], [], []>} : vector<24x24xbf16>, vector<24x8xbf16>, vector<24x8xf32> -> vector<24x8xf32>
    %79 = arith.addf %76, %78 : vector<24x8xf32>
    %80 = vector.extract_strided_slice %23 {offsets = [0, 16], sizes = [24, 8], strides = [1, 1]} : vector<24x32xbf16> to vector<24x8xbf16>
    %cst_27 = arith.constant dense<0.000000e+00> : vector<24x24xf32>
    %81 = tpu.matmul %9, %80, %cst_27 {dimension_numbers = #tpu.dot_dimension_numbers<[1], [1], [0], [0], [0, 0, 1, 0], [], []>} : vector<24x8xbf16>, vector<24x8xbf16>, vector<24x24xf32> -> vector<24x24xf32>
    %cst_28 = arith.constant -1.000000e+30 : f32
    %82 = vector.shape_cast %29 : vector<1x24xi1> to vector<1x24xi1>
    %83 = vector.broadcast %82 : vector<1x24xi1> to vector<24x24xi1>
    %84 = vector.broadcast %cst_28 : f32 to vector<24x24xf32>
    %85 = arith.select %83, %81, %84 : vector<24x24xi1>, vector<24x24xf32>
    %cst_29 = arith.constant dense<0xFF800000> : vector<24xf32>
    %86 = vector.multi_reduction <maximumf>, %85, %cst_29 [1] : vector<24x24xf32> to vector<24xf32>
    %87 = vector.shape_cast %86 : vector<24xf32> to vector<24x1xf32>
    %88 = arith.maximumf %13, %87 : vector<24x1xf32>
    %89 = arith.subf %13, %88 : vector<24x1xf32>
    %90 = math.exp %89 : vector<24x1xf32>
    %91 = vector.broadcast %88 : vector<24x1xf32> to vector<24x24xf32>
    %92 = arith.subf %85, %91 : vector<24x24xf32>
    %93 = arith.truncf %92 : vector<24x24xf32> to vector<24x24xbf16>
    %94 = math.exp %93 : vector<24x24xbf16>
    %95 = arith.mulf %90, %17 : vector<24x1xf32>
    %96 = arith.extf %94 : vector<24x24xbf16> to vector<24x24xf32>
    %cst_30 = arith.constant dense<0.000000e+00> : vector<24xf32>
    %97 = vector.multi_reduction <add>, %96, %cst_30 [1] : vector<24x24xf32> to vector<24xf32>
    %98 = vector.shape_cast %97 : vector<24xf32> to vector<24x1xf32>
    %99 = arith.addf %95, %98 : vector<24x1xf32>
    %100 = vector.broadcast %90 : vector<24x1xf32> to vector<24x8xf32>
    %101 = arith.mulf %100, %21 : vector<24x8xf32>
    %102 = vector.extract_strided_slice %24 {offsets = [0, 16], sizes = [24, 8], strides = [1, 1]} : vector<24x32xbf16> to vector<24x8xbf16>
    %cst_31 = arith.constant dense<0.000000e+00> : vector<24x8xf32>
    %103 = tpu.matmul %94, %102, %cst_31 {dimension_numbers = #tpu.dot_dimension_numbers<[1], [0], [0], [1], [0, 0, 1, 1], [], []>} : vector<24x24xbf16>, vector<24x8xbf16>, vector<24x8xf32> -> vector<24x8xf32>
    %104 = arith.addf %101, %103 : vector<24x8xf32>
    %105 = vector.extract_strided_slice %23 {offsets = [0, 24], sizes = [24, 8], strides = [1, 1]} : vector<24x32xbf16> to vector<24x8xbf16>
    %cst_32 = arith.constant dense<0.000000e+00> : vector<24x24xf32>
    %106 = tpu.matmul %10, %105, %cst_32 {dimension_numbers = #tpu.dot_dimension_numbers<[1], [1], [0], [0], [0, 0, 1, 0], [], []>} : vector<24x8xbf16>, vector<24x8xbf16>, vector<24x24xf32> -> vector<24x24xf32>
    %cst_33 = arith.constant -1.000000e+30 : f32
    %107 = vector.shape_cast %29 : vector<1x24xi1> to vector<1x24xi1>
    %108 = vector.broadcast %107 : vector<1x24xi1> to vector<24x24xi1>
    %109 = vector.broadcast %cst_33 : f32 to vector<24x24xf32>
    %110 = arith.select %108, %106, %109 : vector<24x24xi1>, vector<24x24xf32>
    %cst_34 = arith.constant dense<0xFF800000> : vector<24xf32>
    %111 = vector.multi_reduction <maximumf>, %110, %cst_34 [1] : vector<24x24xf32> to vector<24xf32>
    %112 = vector.shape_cast %111 : vector<24xf32> to vector<24x1xf32>
    %113 = arith.maximumf %14, %112 : vector<24x1xf32>
    %114 = arith.subf %14, %113 : vector<24x1xf32>
    %115 = math.exp %114 : vector<24x1xf32>
    %116 = vector.broadcast %113 : vector<24x1xf32> to vector<24x24xf32>
    %117 = arith.subf %110, %116 : vector<24x24xf32>
    %118 = arith.truncf %117 : vector<24x24xf32> to vector<24x24xbf16>
    %119 = math.exp %118 : vector<24x24xbf16>
    %120 = arith.mulf %115, %18 : vector<24x1xf32>
    %121 = arith.extf %119 : vector<24x24xbf16> to vector<24x24xf32>
    %cst_35 = arith.constant dense<0.000000e+00> : vector<24xf32>
    %122 = vector.multi_reduction <add>, %121, %cst_35 [1] : vector<24x24xf32> to vector<24xf32>
    %123 = vector.shape_cast %122 : vector<24xf32> to vector<24x1xf32>
    %124 = arith.addf %120, %123 : vector<24x1xf32>
    %125 = vector.broadcast %115 : vector<24x1xf32> to vector<24x8xf32>
    %126 = arith.mulf %125, %22 : vector<24x8xf32>
    %127 = vector.extract_strided_slice %24 {offsets = [0, 24], sizes = [24, 8], strides = [1, 1]} : vector<24x32xbf16> to vector<24x8xbf16>
    %cst_36 = arith.constant dense<0.000000e+00> : vector<24x8xf32>
    %128 = tpu.matmul %119, %127, %cst_36 {dimension_numbers = #tpu.dot_dimension_numbers<[1], [0], [0], [1], [0, 0, 1, 1], [], []>} : vector<24x24xbf16>, vector<24x8xbf16>, vector<24x8xf32> -> vector<24x8xf32>
    %129 = arith.addf %126, %128 : vector<24x8xf32>
    %cst_37 = arith.constant 0.000000e+00 : f32
    %130 = vector.broadcast %cst_37 : f32 to vector<24x32xf32>
    %131 = tpu.reciprocal %49 {approx = true} : vector<24x1xf32> -> vector<24x1xf32>
    %132 = vector.broadcast %131 : vector<24x1xf32> to vector<24x8xf32>
    %133 = arith.mulf %54, %132 : vector<24x8xf32>
    %134 = arith.truncf %133 : vector<24x8xf32> to vector<24x8xbf16>
    %c0_38 = arith.constant 0 : index
    %c0_39 = arith.constant 0 : index
    %c0_40 = arith.constant 0 : index
    %135 = vector.load %arg6[%c0_38, %c0_39, %c0_40] : memref<4x8x32xbf16, #tpu.memory_space<vmem>>, vector<1x8x32xbf16>
    %136 = vector.shape_cast %135 : vector<1x8x32xbf16> to vector<8x32xbf16>
    %cst_41 = arith.constant dense<0.000000e+00> : vector<24x32xf32>
    %137 = tpu.matmul %134, %136, %cst_41 {dimension_numbers = #tpu.dot_dimension_numbers<[1], [0], [0], [1], [0, 0, 1, 1], [], []>} : vector<24x8xbf16>, vector<8x32xbf16>, vector<24x32xf32> -> vector<24x32xf32>
    %138 = arith.addf %130, %137 : vector<24x32xf32>
    %139 = tpu.reciprocal %74 {approx = true} : vector<24x1xf32> -> vector<24x1xf32>
    %140 = vector.broadcast %139 : vector<24x1xf32> to vector<24x8xf32>
    %141 = arith.mulf %79, %140 : vector<24x8xf32>
    %142 = arith.truncf %141 : vector<24x8xf32> to vector<24x8xbf16>
    %c1 = arith.constant 1 : index
    %c0_42 = arith.constant 0 : index
    %c0_43 = arith.constant 0 : index
    %143 = vector.load %arg6[%c1, %c0_42, %c0_43] : memref<4x8x32xbf16, #tpu.memory_space<vmem>>, vector<1x8x32xbf16>
    %144 = vector.shape_cast %143 : vector<1x8x32xbf16> to vector<8x32xbf16>
    %cst_44 = arith.constant dense<0.000000e+00> : vector<24x32xf32>
    %145 = tpu.matmul %142, %144, %cst_44 {dimension_numbers = #tpu.dot_dimension_numbers<[1], [0], [0], [1], [0, 0, 1, 1], [], []>} : vector<24x8xbf16>, vector<8x32xbf16>, vector<24x32xf32> -> vector<24x32xf32>
    %146 = arith.addf %138, %145 : vector<24x32xf32>
    %147 = tpu.reciprocal %99 {approx = true} : vector<24x1xf32> -> vector<24x1xf32>
    %148 = vector.broadcast %147 : vector<24x1xf32> to vector<24x8xf32>
    %149 = arith.mulf %104, %148 : vector<24x8xf32>
    %150 = arith.truncf %149 : vector<24x8xf32> to vector<24x8xbf16>
    %c2 = arith.constant 2 : index
    %c0_45 = arith.constant 0 : index
    %c0_46 = arith.constant 0 : index
    %151 = vector.load %arg6[%c2, %c0_45, %c0_46] : memref<4x8x32xbf16, #tpu.memory_space<vmem>>, vector<1x8x32xbf16>
    %152 = vector.shape_cast %151 : vector<1x8x32xbf16> to vector<8x32xbf16>
    %cst_47 = arith.constant dense<0.000000e+00> : vector<24x32xf32>
    %153 = tpu.matmul %150, %152, %cst_47 {dimension_numbers = #tpu.dot_dimension_numbers<[1], [0], [0], [1], [0, 0, 1, 1], [], []>} : vector<24x8xbf16>, vector<8x32xbf16>, vector<24x32xf32> -> vector<24x32xf32>
    %154 = arith.addf %146, %153 : vector<24x32xf32>
    %155 = tpu.reciprocal %124 {approx = true} : vector<24x1xf32> -> vector<24x1xf32>
    %156 = vector.broadcast %155 : vector<24x1xf32> to vector<24x8xf32>
    %157 = arith.mulf %129, %156 : vector<24x8xf32>
    %158 = arith.truncf %157 : vector<24x8xf32> to vector<24x8xbf16>
    %c3 = arith.constant 3 : index
    %c0_48 = arith.constant 0 : index
    %c0_49 = arith.constant 0 : index
    %159 = vector.load %arg6[%c3, %c0_48, %c0_49] : memref<4x8x32xbf16, #tpu.memory_space<vmem>>, vector<1x8x32xbf16>
    %160 = vector.shape_cast %159 : vector<1x8x32xbf16> to vector<8x32xbf16>
    %cst_50 = arith.constant dense<0.000000e+00> : vector<24x32xf32>
    %161 = tpu.matmul %158, %160, %cst_50 {dimension_numbers = #tpu.dot_dimension_numbers<[1], [0], [0], [1], [0, 0, 1, 1], [], []>} : vector<24x8xbf16>, vector<8x32xbf16>, vector<24x32xf32> -> vector<24x32xf32>
    %162 = arith.addf %154, %161 : vector<24x32xf32>
    %c0_51 = arith.constant 0 : index
    %c0_52 = arith.constant 0 : index
    %163 = vector.load %arg7[%c0_51, %c0_52] : memref<1x32xf32, #tpu.memory_space<vmem>>, vector<1x32xf32>
    %164 = vector.broadcast %163 : vector<1x32xf32> to vector<24x32xf32>
    %165 = arith.addf %162, %164 : vector<24x32xf32>
    %c0_53 = arith.constant 0 : index
    %166 = arith.index_cast %4 : i32 to index
    %c0_54 = arith.constant 0 : index
    %167 = vector.load %arg2[%c0_53, %166, %c0_54] : memref<1x24x32xbf16, #tpu.memory_space<vmem>>, vector<1x24x32xbf16>
    %168 = vector.shape_cast %167 : vector<1x24x32xbf16> to vector<24x32xbf16>
    %169 = arith.extf %168 : vector<24x32xbf16> to vector<24x32xf32>
    %170 = arith.addf %169, %165 : vector<24x32xf32>
    %171 = arith.truncf %170 : vector<24x32xf32> to vector<24x32xbf16>
    %c0_55 = arith.constant 0 : index
    %c0_56 = arith.constant 0 : index
    %c0_57 = arith.constant 0 : index
    %172 = vector.load %arg8[%c0_55, %c0_56, %c0_57] : memref<1x24x32xbf16, #tpu.memory_space<vmem>>, vector<1x24x32xbf16>
    %173 = vector.shape_cast %172 : vector<1x24x32xbf16> to vector<24x32xbf16>
    %174 = vector.shape_cast %171 : vector<24x32xbf16> to vector<1x24x32xbf16>
    tpu.vector_store %arg8[%c0_55, %c0_56, %c0_57], %174 {strides = array<i32>} : memref<1x24x32xbf16, #tpu.memory_space<vmem>>, vector<1x24x32xbf16>,
    return
  }
  func.func @transform_0(%arg0: i32, %arg1: i32) -> (i32, i32, i32) {
    %c0_i32 = arith.constant 0 : i32
    %c0_i32_0 = arith.constant 0 : i32
    %c0_i32_1 = arith.constant 0 : i32
    return %arg0, %c0_i32, %c0_i32_0 : i32, i32, i32
  }
  func.func @transform_1(%arg0: i32, %arg1: i32) -> (i32, i32) {
    %c0_i32 = arith.constant 0 : i32
    %c0_i32_0 = arith.constant 0 : i32
    %c0_i32_1 = arith.constant 0 : i32
    return %c0_i32, %c0_i32_0 : i32, i32
  }
  func.func @transform_2(%arg0: i32, %arg1: i32) -> (i32, i32) {
    %c0_i32 = arith.constant 0 : i32
    %c0_i32_0 = arith.constant 0 : i32
    %c0_i32_1 = arith.constant 0 : i32
    return %c0_i32, %c0_i32_0 : i32, i32
  }
  func.func @transform_3(%arg0: i32, %arg1: i32) -> (i32, i32) {
    %c0_i32 = arith.constant 0 : i32
    %c0_i32_0 = arith.constant 0 : i32
    %c0_i32_1 = arith.constant 0 : i32
    return %c0_i32, %c0_i32_0 : i32, i32
  }
  func.func @transform_4(%arg0: i32, %arg1: i32) -> (i32, i32, i32) {
    %c0_i32 = arith.constant 0 : i32
    %c0_i32_0 = arith.constant 0 : i32
    %c0_i32_1 = arith.constant 0 : i32
    %c0_i32_2 = arith.constant 0 : i32
    return %c0_i32, %c0_i32_0, %c0_i32_1 : i32, i32, i32
  }
  func.func @transform_5(%arg0: i32, %arg1: i32) -> (i32, i32) {
    %c0_i32 = arith.constant 0 : i32
    %c0_i32_0 = arith.constant 0 : i32
    %c0_i32_1 = arith.constant 0 : i32
    return %c0_i32, %c0_i32_0 : i32, i32
  }
  func.func @transform_6(%arg0: i32, %arg1: i32) -> (i32, i32, i32) {
    %c0_i32 = arith.constant 0 : i32
    %c0_i32_0 = arith.constant 0 : i32
    return %arg0, %arg1, %c0_i32 : i32, i32, i32
  }
  func.func @transform_7(%arg0: i32, %arg1: i32) -> (i32, i32, i32) {
    %c0_i32 = arith.constant 0 : i32
    %c0_i32_0 = arith.constant 0 : i32
    %c0_i32_1 = arith.constant 0 : i32
    return %arg0, %c0_i32, %c0_i32_0 : i32, i32, i32
  }
}

</mosaic_0001>

<llo_original>
// kernel: tpu_custom_call.1
$region0: #{tpu_custom_call.1}
  #allocation0 [shape = 'u32[]', space=smem, size = 0x4, offset = 0x4, fixed_abs, tag = 'smem constant byte address 0x4 - core index']
  #allocation1 [shape = 'u32[144,128]{1,0:T(1,128)}', space=vmem, size = 0x12000, scoped, tag = 'internal scratch']
  #allocation2 [shape = 'bf16[24,32]{1,0:T(8,128)(2,1)}', space=vmem, size = 0x1800, scoped, tag = 'scratch operand']
  #allocation3 [shape = 'bf16[24,32]{1,0:T(8,128)(2,1)}', space=vmem, size = 0x1800, scoped, tag = 'scratch operand']
  #allocation4 [shape = 'bf16[24,32]{1,0:T(8,128)(2,1)}', space=vmem, size = 0x1800, scoped, tag = 'scratch operand']
  %s0 = inlined_call_operand.hbm [shape: bf16[2,24,32], index: 0, kind: input, shape index: {}]
  %s1 = inlined_call_operand.vmem [shape: f32[1,32], index: 1, kind: input, shape index: {}]
  %s2 = inlined_call_operand.vmem [shape: f32[1,32], index: 2, kind: input, shape index: {}]
  %s3 = inlined_call_operand.hbm [shape: bf16[32,96], index: 3, kind: input, shape index: {}]
  %s4 = inlined_call_operand.hbm [shape: bf16[4,8,32], index: 4, kind: input, shape index: {}]
  %s5 = inlined_call_operand.vmem [shape: f32[1,32], index: 5, kind: input, shape index: {}]
  %s6 = inlined_call_operand.hbm [shape: bf16[2,24,32], index: 6, kind: output, shape index: {0}]
  %s7 = inlined_call_operand.hbm [shape: f32[2,1,24], index: 7, kind: output, shape index: {1}]
  %8 = xla_tuple %s6, %s7
  %s9 = sld [smem:[#allocation0]]
  $region81: #{tpu_custom_call.1} parent=0
    _
  %s11 = ssub.s32 1, %s9
  %s12 = scalar_select 0, %s11, %s9
  $region1: #{tpu_custom_call.1} parent=0
    #allocation5 [shape = 'u8[12288]{0}', space=vmem, size = 0x3000, scoped, tag = 'input window, operand 0']
    #allocation6 [shape = 's32[2]{0}', space=sflag, size = 0x8, scoped, tag = 'scoped memory for tpu_custom_call.1']
    #allocation7 [shape = 's32[2]{0}', space=sflag, size = 0x8, scoped, tag = 'scoped memory for tpu_custom_call.1']
    #allocation8 [shape = 'u8[8192]{0}', space=vmem, size = 0x2000, scoped, tag = 'input window, operand 3, single buffered']
    #allocation9 [shape = 's32[1]{0}', space=sflag, size = 0x4, scoped, tag = 'scoped memory for tpu_custom_call.1']
    #allocation10 [shape = 'u8[8192]{0}', space=vmem, size = 0x2000, scoped, tag = 'input window, operand 4, single buffered']
    #allocation11 [shape = 'u8[12288]{0}', space=vmem, size = 0x3000, scoped, tag = 'output window, operand 0']
    #allocation12 [shape = 'u8[1024]{0}', space=vmem, size = 0x400, scoped, tag = 'output window, operand 1']
    #allocation13 [shape = 's32[2]{0}', space=sflag, size = 0x8, scoped, tag = 'scoped memory for tpu_custom_call.1']
    %13 = vsyncpa [#allocation6], 0
    %s14 = scalar_lea.sflag [#allocation6], 1
    %15 = vsyncpa %s14, 0
    %16 = vsyncpa [#allocation9], 0
    %17 = vsyncpa [#allocation7], 0
    %s18 = scalar_lea.sflag [#allocation7], 1
    %19 = vsyncpa %s18, 0
    %20 = vsyncpa [#allocation13], 0
    %s21 = scalar_lea.sflag [#allocation13], 1
    %22 = vsyncpa %s21, 0
    loop: start=0, step=1, limit=4
    $region2: #{tpu_custom_call.1} parent=1 // loop_pre_header
      _
    $region3: #{tpu_custom_call.1} parent=1 // loop_header
      %s24 = sphi 0, %s28
      %p25 = scmp.ge.s32.totalorder %s24, 4
      %s31 = sphi 0, %s43
      %s32 = sphi 0, %s39
      %s33 = sphi 0, %s31
      %s34 = sphi 0, %s32
      %s35 = sphi 0, %s33
      %s36 = sphi 0, %s34
      %s46 = sphi 0, %s48
      %s49 = sphi 0, %s46
      %s50 = sphi 0, %s49
      %s66 = sphi 0, %s50
      %s70 = sphi 0, %s70
      %s72 = sphi 0, %s70
      %s73 = sphi 0, %s72
      %s87 = sphi 0, %s73
      %s91 = sphi 0, %s91
      %s93 = sphi 0, %s91
      %s94 = sphi 0, %s93
      %s108 = sphi 0, %s94
      %s112 = sphi 0, %s112
      %s114 = sphi 0, %s112
      %s115 = sphi 0, %s114
      %s129 = sphi 0, %s115
      %s133 = sphi 0, %s133
      %s135 = sphi 0, %s133
      %s136 = sphi 0, %s135
      %s150 = sphi 0, %s136
      %s154 = sphi 0, %s154
      %s156 = sphi 0, %s154
      %s157 = sphi 0, %s156
      %s171 = sphi 0, %s157
      %s179 = sphi 0, %s181
      %s182 = sphi 0, %s179
      %s183 = sphi 0, %s182
      %s199 = sphi 0, %s183
      %s205 = sphi 0, %s207
      %s208 = sphi 0, %s205
      %s209 = sphi 0, %s208
      %s225 = sphi 0, %s209
    $region4: #{tpu_custom_call.1} parent=1 // loop_header_branch
      %27 = sbr.rel (%p25) target = $region8
    $region5: #{tpu_custom_call.1} parent=1 // loop_body
      %s29 = ssub.s32 %s24, 1
      %s30 = ssub.s32 %s24, 2
      %s37 = sadd.s32 1, %s32
      %p38 = scmp.ge.s32.totalorder %s37, 1
      %s39 = scalar_select %p38, 0, %s37
      %s40 = sadd.s32 1, %s31
      %s41 = scalar_select %p38, %s40, %s31
      %p42 = scmp.ge.s32.totalorder %s41, 2
      %s43 = scalar_select %p42, 0, %s41
      %s44 = ssub.s32 %s31, %s43
      %p45 = scmp.eq.s32.totalorder %s44, 0
      %s47 = sadd.s32 %s46, 1
      %s48 = scalar_select %p45, %s46, %s47
      %p51 = pneg %p45
      %p52 = scmp.eq.s32.totalorder %s24, 1
      %p53 = por %p51, %p52
      %p54 = scmp.ne.s32.totalorder %s46, %s49
      %p55 = scmp.eq.s32.totalorder %s24, 0
      %p56 = por %p54, %p55
      %p57 = scmp.ne.s32.totalorder %s46, %s49
      %p58 = scmp.eq.s32.totalorder %s29, 1
      %p59 = por %p57, %p58
      %p60 = scmp.ne.s32.totalorder %s49, %s50
      %p61 = scmp.eq.s32.totalorder %s29, 0
      %p62 = por %p60, %p61
      %p63 = scmp.ne.s32.totalorder %s49, %s50
      %p64 = scmp.eq.s32.totalorder %s30, 1
      %p65 = por %p63, %p64
      %p67 = scmp.ne.s32.totalorder %s50, %s66
      %p68 = scmp.eq.s32.totalorder %s30, 0
      %p69 = por %p67, %p68
      %s71 = sadd.s32 %s70, 1
      %p74 = scmp.eq.s32.totalorder %s24, 1
      %p75 = scmp.ne.s32.totalorder %s70, %s72
      %p76 = scmp.eq.s32.totalorder %s24, 0
      %p77 = por %p75, %p76
      %p78 = scmp.ne.s32.totalorder %s70, %s72
      %p79 = scmp.eq.s32.totalorder %s29, 1
      %p80 = por %p78, %p79
      %p81 = scmp.ne.s32.totalorder %s72, %s73
      %p82 = scmp.eq.s32.totalorder %s29, 0
      %p83 = por %p81, %p82
      %p84 = scmp.ne.s32.totalorder %s72, %s73
      %p85 = scmp.eq.s32.totalorder %s30, 1
      %p86 = por %p84, %p85
      %p88 = scmp.ne.s32.totalorder %s73, %s87
      %p89 = scmp.eq.s32.totalorder %s30, 0
      %p90 = por %p88, %p89
      %s92 = sadd.s32 %s91, 1
      %p95 = scmp.eq.s32.totalorder %s24, 1
      %p96 = scmp.ne.s32.totalorder %s91, %s93
      %p97 = scmp.eq.s32.totalorder %s24, 0
      %p98 = por %p96, %p97
      %p99 = scmp.ne.s32.totalorder %s91, %s93
      %p100 = scmp.eq.s32.totalorder %s29, 1
      %p101 = por %p99, %p100
      %p102 = scmp.ne.s32.totalorder %s93, %s94
      %p103 = scmp.eq.s32.totalorder %s29, 0
      %p104 = por %p102, %p103
      %p105 = scmp.ne.s32.totalorder %s93, %s94
      %p106 = scmp.eq.s32.totalorder %s30, 1
      %p107 = por %p105, %p106
      %p109 = scmp.ne.s32.totalorder %s94, %s108
      %p110 = scmp.eq.s32.totalorder %s30, 0
      %p111 = por %p109, %p110
      %s113 = sadd.s32 %s112, 1
      %p116 = scmp.eq.s32.totalorder %s24, 1
      %p117 = scmp.ne.s32.totalorder %s112, %s114
      %p118 = scmp.eq.s32.totalorder %s24, 0
      %p119 = por %p117, %p118
      %p120 = scmp.ne.s32.totalorder %s112, %s114
      %p121 = scmp.eq.s32.totalorder %s29, 1
      %p122 = por %p120, %p121
      %p123 = scmp.ne.s32.totalorder %s114, %s115
      %p124 = scmp.eq.s32.totalorder %s29, 0
      %p125 = por %p123, %p124
      %p126 = scmp.ne.s32.totalorder %s114, %s115
      %p127 = scmp.eq.s32.totalorder %s30, 1
      %p128 = por %p126, %p127
      %p130 = scmp.ne.s32.totalorder %s115, %s129
      %p131 = scmp.eq.s32.totalorder %s30, 0
      %p132 = por %p130, %p131
      %s134 = sadd.s32 %s133, 1
      %p137 = scmp.eq.s32.totalorder %s24, 1
      %p138 = scmp.ne.s32.totalorder %s133, %s135
      %p139 = scmp.eq.s32.totalorder %s24, 0
      %p140 = por %p138, %p139
      %p141 = scmp.ne.s32.totalorder %s133, %s135
      %p142 = scmp.eq.s32.totalorder %s29, 1
      %p143 = por %p141, %p142
      %p144 = scmp.ne.s32.totalorder %s135, %s136
      %p145 = scmp.eq.s32.totalorder %s29, 0
      %p146 = por %p144, %p145
      %p147 = scmp.ne.s32.totalorder %s135, %s136
      %p148 = scmp.eq.s32.totalorder %s30, 1
      %p149 = por %p147, %p148
      %p151 = scmp.ne.s32.totalorder %s136, %s150
      %p152 = scmp.eq.s32.totalorder %s30, 0
      %p153 = por %p151, %p152
      %s155 = sadd.s32 %s154, 1
      %p158 = scmp.eq.s32.totalorder %s24, 1
      %p159 = scmp.ne.s32.totalorder %s154, %s156
      %p160 = scmp.eq.s32.totalorder %s24, 0
      %p161 = por %p159, %p160
      %p162 = scmp.ne.s32.totalorder %s154, %s156
      %p163 = scmp.eq.s32.totalorder %s29, 1
      %p164 = por %p162, %p163
      %p165 = scmp.ne.s32.totalorder %s156, %s157
      %p166 = scmp.eq.s32.totalorder %s29, 0
      %p167 = por %p165, %p166
      %p168 = scmp.ne.s32.totalorder %s156, %s157
      %p169 = scmp.eq.s32.totalorder %s30, 1
      %p170 = por %p168, %p169
      %p172 = scmp.ne.s32.totalorder %s157, %s171
      %p173 = scmp.eq.s32.totalorder %s30, 0
      %p174 = por %p172, %p173
      %s175 = ssub.s32 %s31, %s43
      %s176 = ssub.s32 %s32, %s39
      %s177 = sor.u32 %s175, %s176
      %p178 = scmp.eq.s32.totalorder %s177, 0
      %s180 = sadd.s32 %s179, 1
      %s181 = scalar_select %p178, %s179, %s180
      %p184 = pneg %p178
      %p185 = scmp.eq.s32.totalorder %s24, 1
      %p186 = por %p184, %p185
      %p187 = scmp.ne.s32.totalorder %s179, %s182
      %p188 = scmp.eq.s32.totalorder %s24, 0
      %p189 = por %p187, %p188
      %p190 = scmp.ne.s32.totalorder %s179, %s182
      %p191 = scmp.eq.s32.totalorder %s29, 1
      %p192 = por %p190, %p191
      %p193 = scmp.ne.s32.totalorder %s182, %s183
      %p194 = scmp.eq.s32.totalorder %s29, 0
      %p195 = por %p193, %p194
      %p196 = scmp.ne.s32.totalorder %s182, %s183
      %p197 = scmp.eq.s32.totalorder %s30, 1
      %p198 = por %p196, %p197
      %p200 = scmp.ne.s32.totalorder %s183, %s199
      %p201 = scmp.eq.s32.totalorder %s30, 0
      %p202 = por %p200, %p201
      %s203 = ssub.s32 %s31, %s43
      %p204 = scmp.eq.s32.totalorder %s203, 0
      %s206 = sadd.s32 %s205, 1
      %s207 = scalar_select %p204, %s205, %s206
      %p210 = pneg %p204
      %p211 = scmp.eq.s32.totalorder %s24, 1
      %p212 = por %p210, %p211
      %p213 = scmp.ne.s32.totalorder %s205, %s208
      %p214 = scmp.eq.s32.totalorder %s24, 0
      %p215 = por %p213, %p214
      %p216 = scmp.ne.s32.totalorder %s205, %s208
      %p217 = scmp.eq.s32.totalorder %s29, 1
      %p218 = por %p216, %p217
      %p219 = scmp.ne.s32.totalorder %s208, %s209
      %p220 = scmp.eq.s32.totalorder %s29, 0
      %p221 = por %p219, %p220
      %p222 = scmp.ne.s32.totalorder %s208, %s209
      %p223 = scmp.eq.s32.totalorder %s30, 1
      %p224 = por %p222, %p223
      %p226 = scmp.ne.s32.totalorder %s209, %s225
      %p227 = scmp.eq.s32.totalorder %s30, 0
      %p228 = por %p226, %p227
      %p229 = scmp.le.s32.totalorder 1, %s24
      %p230 = scmp.lt.s32.totalorder %s24, 3
      %p231 = pnand %p229, %p230
      %p232 = pneg %p231
      // Predicated region
      $region9: #{tpu_custom_call.1} parent=5 // pred_check
        _
      $region10: #{tpu_custom_call.1} parent=5 // pred_check_branch
        %234 = sbr.rel (%p231) target = $region12
      $region11: #{tpu_custom_call.1} parent=5 // pred_region
        %s235 = ssub.s32 %s24, 1
        // Predicated region
        $region13: #{tpu_custom_call.1} parent=11 // pred_check
          %p236 = pneg %p83
        $region14: #{tpu_custom_call.1} parent=11 // pred_check_branch
          %238 = sbr.rel (%p236) target = $region16
        $region15: #{tpu_custom_call.1} parent=11 // pred_region
          _
        $region16: #{tpu_custom_call.1} parent=11 // pred_fallthru
          _
        // Predicated region
        $region17: #{tpu_custom_call.1} parent=11 // pred_check
          %p239 = pneg %p104
        $region18: #{tpu_custom_call.1} parent=11 // pred_check_branch
          %241 = sbr.rel (%p239) target = $region20
        $region19: #{tpu_custom_call.1} parent=11 // pred_region
          _
        $region20: #{tpu_custom_call.1} parent=11 // pred_fallthru
          _
        // Predicated region
        $region21: #{tpu_custom_call.1} parent=11 // pred_check
          %p242 = pneg %p125
        $region22: #{tpu_custom_call.1} parent=11 // pred_check_branch
          %244 = sbr.rel (%p242) target = $region24
        $region23: #{tpu_custom_call.1} parent=11 // pred_region
          %s246 = ssub.s32 256, 256
          %247 = vsyncadd [#allocation9], %s246
          %s248 = sshll.u32 [#allocation8], 4
          %s249 = int_to_ptr.vmem [resolvable:$true] %s248
          %254 = dma.hbm_to_vmem [thread:$0]  %s3, 256, %s249, [#allocation9], 64, 64, 4
        $region24: #{tpu_custom_call.1} parent=11 // pred_fallthru
          _
        // Predicated region
        $region25: #{tpu_custom_call.1} parent=11 // pred_check
          %p255 = pneg %p146
        $region26: #{tpu_custom_call.1} parent=11 // pred_check_branch
          %257 = sbr.rel (%p255) target = $region28
        $region27: #{tpu_custom_call.1} parent=11 // pred_region
          %s259 = ssub.s32 256, 256
          %260 = vsyncadd [#allocation9], %s259
          %s261 = sshll.u32 [#allocation10], 4
          %s262 = int_to_ptr.vmem [resolvable:$true] %s261
          %267 = dma.hbm_to_vmem [thread:$0]  %s4, 256, %s262, [#allocation9], 64, 64, 4
        $region28: #{tpu_custom_call.1} parent=11 // pred_fallthru
          _
        // Predicated region
        $region29: #{tpu_custom_call.1} parent=11 // pred_check
          %p268 = pneg %p167
        $region30: #{tpu_custom_call.1} parent=11 // pred_check_branch
          %270 = sbr.rel (%p268) target = $region32
        $region31: #{tpu_custom_call.1} parent=11 // pred_region
          _
        $region32: #{tpu_custom_call.1} parent=11 // pred_fallthru
          _
      $region12: #{tpu_custom_call.1} parent=5 // pred_fallthru
        _
      %p271 = scmp.lt.s32.totalorder %s24, 2
      // Predicated region
      $region33: #{tpu_custom_call.1} parent=5 // pred_check
        %p272 = pneg %p271
      $region34: #{tpu_custom_call.1} parent=5 // pred_check_branch
        %274 = sbr.rel (%p272) target = $region36
      $region35: #{tpu_custom_call.1} parent=5 // pred_region
        // Predicated region
        $region37: #{tpu_custom_call.1} parent=35 // pred_check
          %p275 = pneg %p56
        $region38: #{tpu_custom_call.1} parent=35 // pred_check_branch
          %277 = sbr.rel (%p275) target = $region40
        $region39: #{tpu_custom_call.1} parent=35 // pred_region
          %s278 = sand.u32 %s46, 1
          %s279 = scalar_lea.sflag [#allocation6], %s278
          %s280 = sand.u32 %s46, 1
          %s281 = smul.addr %s280, 12
          %s282 = scalar_lea.vmem [#allocation5], %s281
          %s284 = ssub.s32 192, 192
          %285 = vsyncadd %s279, %s284
          %s286 = smul.addr %s31, 3
          %s287 = smul.addr %s286, 64
          %s288 = scalar_lea.hbm %s0, %s287
          %s289 = sshll.u32 %s282, 4
          %s290 = int_to_ptr.vmem [resolvable:$true] %s289
          %295 = dma.hbm_to_vmem [thread:$0]  %s288, 192, %s290, %s279, 64, 64, 4
        $region40: #{tpu_custom_call.1} parent=35 // pred_fallthru
          _
      $region36: #{tpu_custom_call.1} parent=5 // pred_fallthru
        _
      %p296 = scmp.le.s32.totalorder 1, %s24
      %p297 = scmp.lt.s32.totalorder %s24, 3
      %p298 = pnand %p296, %p297
      %p299 = pneg %p298
      // Predicated region
      $region41: #{tpu_custom_call.1} parent=5 // pred_check
        _
      $region42: #{tpu_custom_call.1} parent=5 // pred_check_branch
        %301 = sbr.rel (%p298) target = $region44
      $region43: #{tpu_custom_call.1} parent=5 // pred_region
        %s302 = ssub.s32 %s24, 1
        %s303 = sand.u32 %s49, 1
        %s304 = scalar_lea.sflag [#allocation6], %s303
        %s305 = sand.u32 %s49, 1
        %s306 = smul.addr %s305, 12
        %s307 = scalar_lea.vmem [#allocation5], %s306
        // Predicated region
        $region45: #{tpu_custom_call.1} parent=43 // pred_check
          %p308 = pneg %p62
        $region46: #{tpu_custom_call.1} parent=43 // pred_check_branch
          %310 = sbr.rel (%p308) target = $region48
        $region47: #{tpu_custom_call.1} parent=43 // pred_region
          %311 = dma.done %s304, 192
        $region48: #{tpu_custom_call.1} parent=43 // pred_fallthru
          _
        // Predicated region
        $region49: #{tpu_custom_call.1} parent=43 // pred_check
          %p312 = pneg %p125
        $region50: #{tpu_custom_call.1} parent=43 // pred_check_branch
          %314 = sbr.rel (%p312) target = $region52
        $region51: #{tpu_custom_call.1} parent=43 // pred_region
          %315 = dma.done [#allocation9], 256
        $region52: #{tpu_custom_call.1} parent=43 // pred_fallthru
          _
        // Predicated region
        $region53: #{tpu_custom_call.1} parent=43 // pred_check
          %p316 = pneg %p146
        $region54: #{tpu_custom_call.1} parent=43 // pred_check_branch
          %318 = sbr.rel (%p316) target = $region56
        $region55: #{tpu_custom_call.1} parent=43 // pred_region
          %319 = dma.done [#allocation9], 256
        $region56: #{tpu_custom_call.1} parent=43 // pred_fallthru
          _
        %s320 = sand.u32 %s49, 1
        %s321 = scalar_lea.sflag [#allocation6], %s320
        %s322 = sand.u32 %s49, 1
        %s323 = smul.addr %s322, 12
        %s324 = scalar_lea.vmem [#allocation5], %s323
        %p325 = pneg %p62
        %p326 = pneg %p59
        %p327 = pneg %p83
        %p328 = pneg %p80
        %p329 = pneg %p104
        %p330 = pneg %p101
        %p331 = pneg %p125
        %p332 = pneg %p122
        %p333 = pneg %p146
        %p334 = pneg %p143
        %p335 = pneg %p167
        %p336 = pneg %p164
        %p337 = pneg %p195
        %p338 = pneg %p192
        %s339 = sand.u32 %s182, 1
        %s340 = scalar_lea.sflag [#allocation7], %s339
        %s341 = sand.u32 %s182, 1
        %s342 = smul.addr %s341, 12
        %s343 = scalar_lea.vmem [#allocation11], %s342
        %p344 = pneg %p221
        %p345 = pneg %p218
        %s346 = sand.u32 %s208, 1
        %s347 = scalar_lea.sflag [#allocation13], %s346
        %s348 = sand.u32 %s208, 1
        %s349 = scalar_lea.vmem [#allocation12], %s348
        %s350 = smul.u32 3, %s34
        %p352 = scmp.eq.s32.totalorder %s34, 0
        // Predicated region
        $region57: #{tpu_custom_call.1} parent=43 // pred_check
          %p353 = pneg %p352
        $region58: #{tpu_custom_call.1} parent=43 // pred_check_branch
          %355 = sbr.rel (%p353) target = $region60
        $region59: #{tpu_custom_call.1} parent=43 // pred_region
          %v356 = vld [vmem:[%s307] sm:$0xf]
          %v357 = vld [vmem:[%s307 + $0x4] sm:$0xf]
          %v358 = vld [vmem:[%s307 + $0x8] sm:$0xf]
          %v359 = vunpack.c.l.bf16 %v356
          %v360 = vunpack.c.l.bf16 %v357
          %v361 = vunpack.c.l.bf16 %v358
          %v362 = vld [vmem:[%s1] sm:$0x1]
          %v363 = vld [vmem:[%s2] sm:$0x1]
          %vm364 = vcmask 261120
          %v365 = vsel %vm364, %v359, 0.0
          %366 = vadd.xlane.f32.xlu0 %v365
          %v367 = vpop.xlane.xlu0 %366
          %v368 = vsel %vm364, %v360, 0.0
          %369 = vadd.xlane.f32.xlu0 %v368
          %v370 = vpop.xlane.xlu0 %369
          %v371 = vsel %vm364, %v361, 0.0
          %372 = vadd.xlane.f32.xlu0 %v371
          %v373 = vpop.xlane.xlu0 %372
          %v374 = vrcp.pop 32.0
          %v375 = vmul.f32 %v367, %v374
          %v376 = vmul.f32 %v370, %v374
          %v377 = vmul.f32 %v373, %v374
          %v378 = vsub.f32 %v359, %v375
          %v379 = vsub.f32 %v360, %v376
          %v380 = vsub.f32 %v361, %v377
          %v381 = vmul.f32 %v378, %v378
          %v382 = vmul.f32 %v379, %v379
          %v383 = vmul.f32 %v380, %v380
          %v384 = vsel %vm364, %v381, 0.0
          %385 = vadd.xlane.f32.xlu0 %v384
          %v386 = vpop.xlane.xlu0 %385
          %v387 = vsel %vm364, %v382, 0.0
          %388 = vadd.xlane.f32.xlu0 %v387
          %v389 = vpop.xlane.xlu0 %388
          %v390 = vsel %vm364, %v383, 0.0
          %391 = vadd.xlane.f32.xlu0 %v390
          %v392 = vpop.xlane.xlu0 %391
          %v393 = vmul.f32 %v386, %v374
          %v394 = vmul.f32 %v389, %v374
          %v395 = vmul.f32 %v392, %v374
          %v396 = vadd.f32 %v393, 1e-05
          %v397 = vadd.f32 %v394, 1e-05
          %v398 = vadd.f32 %v395, 1e-05
          %v399 = vrsqrt.pop %v396
          %v400 = vrsqrt.pop %v397
          %v401 = vrsqrt.pop %v398
          %v402 = vmul.f32 %v378, %v399
          %v403 = vmul.f32 %v379, %v400
          %v404 = vmul.f32 %v380, %v401
          %v406 = vlaneseq
          %v407 = vshrl.u32 %v406, 7
          %v408 = vsub.s32 0, %v407
          %v409 = vrot.slane %v362, %v408
          %v411 = vmul.f32 %v402, %v409
          %v412 = vmul.f32 %v403, %v409
          %v413 = vmul.f32 %v404, %v409
          %v415 = vlaneseq
          %v416 = vshrl.u32 %v415, 7
          %v417 = vsub.s32 0, %v416
          %v418 = vrot.slane %v363, %v417
          %v420 = vadd.f32 %v411, %v418
          %v421 = vadd.f32 %v412, %v418
          %v422 = vadd.f32 %v413, %v418
          %v423 = vpack.c.bf16 %v421, %v420
          %v424 = vpack.c.bf16 %v422, %v422
          %v425 = vld [vmem:[#allocation8] sm:$0xf]
          %v426 = vld [vmem:[#allocation8 + $0x4] sm:$0xf]
          %v427 = vld [vmem:[#allocation8 + $0x8] sm:$0xf]
          %v428 = vld [vmem:[#allocation8 + $0xc] sm:$0xf]
          %v433 = vunpack.c.l.b16 %v425
          %v434 = vunpack.c.l.b16 %v426
          %v435 = vunpack.c.l.b16 %v427
          %v436 = vunpack.c.l.b16 %v428
          %v437 = vpack.c.b16 %v434, %v433
          %v438 = vpack.c.b16 %v436, %v435
          %v442 = vsel %vm364, %v423, 0
          %v445 = vsel %vm364, %v424, 0
          %447 = vmatprep.subr.bf16.mxu0 0
          %448 = vmatpush1.bf16.msra.mxu0 0
          %449 = vmatprep.subr.bf16.mxu0 0
          %450 = vmatpush1.bf16.msra.mxu0 0
          %451 = vmatprep.subr.bf16.mxu0 0
          %452 = vmatpush1.bf16.msra.mxu0 0
          %453 = vmatprep.subr.bf16.mxu0 0
          %454 = vmatpush1.bf16.msra.mxu0 0
          %455 = vmatprep.subr.bf16.mxu0 0
          %456 = vmatpush1.bf16.msra.mxu0 0
          %457 = vmatprep.subr.bf16.mxu0 0
          %458 = vmatpush1.bf16.msra.mxu0 0
          %459 = vmatprep.subr.bf16.mxu0 0
          %460 = vmatpush1.bf16.msra.mxu0 %v438
          %461 = vmatprep.subr.bf16.mxu0 0
          %462 = vmatpush1.bf16.msra.mxu0 %v437
          %463 = vmatprep.subr.bf16.mxu0 0
          %464 = vmatpush2.bf16.msra.mxu0 0
          %465 = vmatprep.subr.bf16.mxu0 0
          %466 = vmatpush2.bf16.msra.mxu0 0
          %467 = vmatprep.subr.bf16.mxu0 0
          %468 = vmatpush2.bf16.msra.mxu0 0
          %469 = vmatprep.subr.bf16.mxu0 0
          %470 = vmatpush2.bf16.msra.mxu0 0
          %471 = vmatprep.subr.bf16.mxu0 0
          %472 = vmatpush2.bf16.msra.mxu0 0
          %473 = vmatprep.subr.bf16.mxu0 0
          %474 = vmatpush2.bf16.msra.mxu0 0
          %475 = vmatprep.subr.bf16.mxu0 0
          %476 = vmatpush2.bf16.msra.mxu0 0
          %477 = vmatprep.subr.bf16.mxu0 0
          %478 = vmatpush2.bf16.msra.mxu0 0
          %479 = vmatprep.mubr.bf16.mxu0 0
          %480 = vmatmul.mubr.bf16.gmra.mxu0 %v442
          %v481 = vpop.f32.mrf.mxu0
          %v482 = vadd.f32 0.0, %v481
          %v483 = vpop.f32.mrf.mxu0
          %v484 = vpop.f32.mrf.mxu0
          %v485 = vadd.f32 0.0, %v484
          %v486 = vpop.f32.mrf.mxu0
          %487 = vmatprep.mubr.bf16.mxu0 0
          %488 = vmatmul.mubr.bf16.gmra.mxu0 %v445
          %v489 = vpop.f32.mrf.mxu0
          %v490 = vadd.f32 0.0, %v489
          %v491 = vpop.f32.mrf.mxu0
          %v492 = vpop.f32.mrf.mxu0
          %v493 = vpop.f32.mrf.mxu0
          %494 = vdwg.mxu0
          %v495 = vpack.c.bf16 %v485, %v482
          %v496 = vpack.c.bf16 %v490, %v490
          %v499 = vunpack.c.l.b16 %v495
          %v500 = vunpack.c.h.b16 %v495
          %v501 = vunpack.c.l.b16 %v496
          %v502 = vpack.c.b16 %v499, %v499
          %v503 = vpack.c.b16 %v500, %v500
          %v504 = vpack.c.b16 %v501, %v501
          %vm508 = vcmask 257024
          %509 = vst.msk [vmem:[#allocation2] sm:$0xf] %vm508, %v502
          %510 = vst.msk [vmem:[#allocation2 + $0x4] sm:$0xf] %vm508, %v503
          %511 = vst.msk [vmem:[#allocation2 + $0x8] sm:$0xf] %vm508, %v504
          %512 = vrot.lane.b32.xlu0 %v502, 96
          %v513 = vpop.permute.xlu0 %512
          %514 = vrot.lane.b32.xlu0 %v503, 96
          %v515 = vpop.permute.xlu0 %514
          %516 = vrot.lane.b32.xlu0 %v504, 96
          %v517 = vpop.permute.xlu0 %516
          %521 = vst.msk [vmem:[#allocation3] sm:$0xf] %vm508, %v513
          %522 = vst.msk [vmem:[#allocation3 + $0x4] sm:$0xf] %vm508, %v515
          %523 = vst.msk [vmem:[#allocation3 + $0x8] sm:$0xf] %vm508, %v517
          %524 = vrot.lane.b32.xlu0 %v502, 64
          %v525 = vpop.permute.xlu0 %524
          %526 = vrot.lane.b32.xlu0 %v503, 64
          %v527 = vpop.permute.xlu0 %526
          %528 = vrot.lane.b32.xlu0 %v504, 64
          %v529 = vpop.permute.xlu0 %528
          %533 = vst.msk [vmem:[#allocation4] sm:$0xf] %vm508, %v525
          %534 = vst.msk [vmem:[#allocation4 + $0x4] sm:$0xf] %vm508, %v527
          %535 = vst.msk [vmem:[#allocation4 + $0x8] sm:$0xf] %vm508, %v529
          %v536 = vlaneseq
          %v537 = vand.u32 %v536, 127
          %vm538 = vcmp.lt.s32.totalorder %v537, 17
          %539 = vrot.lane.b32.xlu0 %v495, 96
          %v540 = vpop.permute.xlu0 %539
          %541 = vrot.lane.b32.xlu0 %v496, 96
          %v542 = vpop.permute.xlu0 %541
          %vm543 = vcmask 64512
          %v545 = vsel %vm543, %v495, 0
          %v548 = vsel %vm543, %v540, 0
          %v551 = vsel %vm543, %v542, 0
          %553 = vmatprep.subr.bf16.mxu0 0
          %554 = vmatpush1.bf16.xpose.msra.mxu0 0
          %555 = vmatprep.subr.bf16.mxu0 0
          %556 = vmatpush1.bf16.xpose.msra.mxu0 0
          %557 = vmatprep.subr.bf16.mxu0 0
          %558 = vmatpush1.bf16.xpose.msra.mxu0 0
          %559 = vmatprep.subr.bf16.mxu0 0
          %560 = vmatpush1.bf16.xpose.msra.mxu0 0
          %561 = vmatprep.subr.bf16.mxu0 0
          %562 = vmatpush1.bf16.xpose.msra.mxu0 0
          %563 = vmatprep.subr.bf16.mxu0 0
          %564 = vmatpush1.bf16.xpose.msra.mxu0 0
          %565 = vmatprep.subr.bf16.mxu0 0
          %566 = vmatpush1.bf16.xpose.msra.mxu0 %v551
          %567 = vmatprep.subr.bf16.mxu0 0
          %568 = vmatpush1.bf16.xpose.msra.mxu0 %v548
          %569 = vmatprep.subr.bf16.mxu0 0
          %570 = vmatpush2.bf16.xpose.msra.mxu0 0
          %571 = vmatprep.subr.bf16.mxu0 0
          %572 = vmatpush2.bf16.xpose.msra.mxu0 0
          %573 = vmatprep.subr.bf16.mxu0 0
          %574 = vmatpush2.bf16.xpose.msra.mxu0 0
          %575 = vmatprep.subr.bf16.mxu0 0
          %576 = vmatpush2.bf16.xpose.msra.mxu0 0
          %577 = vmatprep.subr.bf16.mxu0 0
          %578 = vmatpush2.bf16.xpose.msra.mxu0 0
          %579 = vmatprep.subr.bf16.mxu0 0
          %580 = vmatpush2.bf16.xpose.msra.mxu0 0
          %581 = vmatprep.subr.bf16.mxu0 0
          %582 = vmatpush2.bf16.xpose.msra.mxu0 0
          %583 = vmatprep.subr.bf16.mxu0 0
          %584 = vmatpush2.bf16.xpose.msra.mxu0 0
          %585 = vmatprep.mubr.bf16.mxu0 0
          %586 = vmatmul.mubr.bf16.gmra.mxu0 %v545
          %v587 = vpop.f32.mrf.mxu0
          %v588 = vadd.f32 0.0, %v587
          %v589 = vpop.f32.mrf.mxu0
          %v590 = vpop.f32.mrf.mxu0
          %v591 = vpop.f32.mrf.mxu0
          %592 = vdwg.mxu0
          %v593 = vsel %vm538, %v588, -1e+30
          %vm594 = vcmask 188416
          %v595 = vsel %vm594, %v593, -inf
          %596 = vmax.xlane.f32.xlu0 %v595
          %v597 = vpop.xlane.xlu0 %596
          %v598 = vsub.f32 %v593, %v597
          %v599 = vmul.f32 %v598, 1.442695
          %v600 = vpow.pop %v599
          %v601 = vsel %vm594, %v600, 0.0
          %602 = vadd.xlane.f32.xlu0 %v601
          %v603 = vpop.xlane.xlu0 %602
          %v604 = vrcp.pop %v603
          %v605 = vmul.f32 %v600, %v604
          %v606 = vadd.f32 %v605, 0.0
          %607 = vrot.lane.b32.xlu0 %v495, 120
          %v608 = vpop.permute.xlu0 %607
          %609 = vrot.lane.b32.xlu0 %v495, 88
          %v610 = vpop.permute.xlu0 %609
          %611 = vrot.lane.b32.xlu0 %v496, 88
          %v612 = vpop.permute.xlu0 %611
          %v614 = vsel %vm543, %v608, 0
          %v617 = vsel %vm543, %v610, 0
          %v620 = vsel %vm543, %v612, 0
          %622 = vmatprep.subr.bf16.mxu0 0
          %623 = vmatpush1.bf16.xpose.msra.mxu0 0
          %624 = vmatprep.subr.bf16.mxu0 0
          %625 = vmatpush1.bf16.xpose.msra.mxu0 0
          %626 = vmatprep.subr.bf16.mxu0 0
          %627 = vmatpush1.bf16.xpose.msra.mxu0 0
          %628 = vmatprep.subr.bf16.mxu0 0
          %629 = vmatpush1.bf16.xpose.msra.mxu0 0
          %630 = vmatprep.subr.bf16.mxu0 0
          %631 = vmatpush1.bf16.xpose.msra.mxu0 0
          %632 = vmatprep.subr.bf16.mxu0 0
          %633 = vmatpush1.bf16.xpose.msra.mxu0 0
          %634 = vmatprep.subr.bf16.mxu0 0
          %635 = vmatpush1.bf16.xpose.msra.mxu0 %v620
          %636 = vmatprep.subr.bf16.mxu0 0
          %637 = vmatpush1.bf16.xpose.msra.mxu0 %v617
          %638 = vmatprep.subr.bf16.mxu0 0
          %639 = vmatpush2.bf16.xpose.msra.mxu0 0
          %640 = vmatprep.subr.bf16.mxu0 0
          %641 = vmatpush2.bf16.xpose.msra.mxu0 0
          %642 = vmatprep.subr.bf16.mxu0 0
          %643 = vmatpush2.bf16.xpose.msra.mxu0 0
          %644 = vmatprep.subr.bf16.mxu0 0
          %645 = vmatpush2.bf16.xpose.msra.mxu0 0
          %646 = vmatprep.subr.bf16.mxu0 0
          %647 = vmatpush2.bf16.xpose.msra.mxu0 0
          %648 = vmatprep.subr.bf16.mxu0 0
          %649 = vmatpush2.bf16.xpose.msra.mxu0 0
          %650 = vmatprep.subr.bf16.mxu0 0
          %651 = vmatpush2.bf16.xpose.msra.mxu0 0
          %652 = vmatprep.subr.bf16.mxu0 0
          %653 = vmatpush2.bf16.xpose.msra.mxu0 0
          %654 = vmatprep.mubr.bf16.mxu0 0
          %655 = vmatmul.mubr.bf16.gmra.mxu0 %v614
          %v656 = vpop.f32.mrf.mxu0
          %v657 = vadd.f32 0.0, %v656
          %v658 = vpop.f32.mrf.mxu0
          %v659 = vpop.f32.mrf.mxu0
          %v660 = vpop.f32.mrf.mxu0
          %661 = vdwg.mxu0
          %v662 = vsel %vm538, %v657, -1e+30
          %v663 = vsel %vm594, %v662, -inf
          %664 = vmax.xlane.f32.xlu0 %v663
          %v665 = vpop.xlane.xlu0 %664
          %v666 = vsub.f32 %v662, %v665
          %v667 = vmul.f32 %v666, 1.442695
          %v668 = vpow.pop %v667
          %v669 = vsel %vm594, %v668, 0.0
          %670 = vadd.xlane.f32.xlu0 %v669
          %v671 = vpop.xlane.xlu0 %670
          %v672 = vrcp.pop %v671
          %v673 = vmul.f32 %v668, %v672
          %v674 = vadd.f32 %v606, %v673
          %675 = vrot.lane.b32.xlu0 %v495, 112
          %v676 = vpop.permute.xlu0 %675
          %677 = vrot.lane.b32.xlu0 %v495, 80
          %v678 = vpop.permute.xlu0 %677
          %679 = vrot.lane.b32.xlu0 %v496, 80
          %v680 = vpop.permute.xlu0 %679
          %v682 = vsel %vm543, %v676, 0
          %v685 = vsel %vm543, %v678, 0
          %v688 = vsel %vm543, %v680, 0
          %690 = vmatprep.subr.bf16.mxu0 0
          %691 = vmatpush1.bf16.xpose.msra.mxu0 0
          %692 = vmatprep.subr.bf16.mxu0 0
          %693 = vmatpush1.bf16.xpose.msra.mxu0 0
          %694 = vmatprep.subr.bf16.mxu0 0
          %695 = vmatpush1.bf16.xpose.msra.mxu0 0
          %696 = vmatprep.subr.bf16.mxu0 0
          %697 = vmatpush1.bf16.xpose.msra.mxu0 0
          %698 = vmatprep.subr.bf16.mxu0 0
          %699 = vmatpush1.bf16.xpose.msra.mxu0 0
          %700 = vmatprep.subr.bf16.mxu0 0
          %701 = vmatpush1.bf16.xpose.msra.mxu0 0
          %702 = vmatprep.subr.bf16.mxu0 0
          %703 = vmatpush1.bf16.xpose.msra.mxu0 %v688
          %704 = vmatprep.subr.bf16.mxu0 0
          %705 = vmatpush1.bf16.xpose.msra.mxu0 %v685
          %706 = vmatprep.subr.bf16.mxu0 0
          %707 = vmatpush2.bf16.xpose.msra.mxu0 0
          %708 = vmatprep.subr.bf16.mxu0 0
          %709 = vmatpush2.bf16.xpose.msra.mxu0 0
          %710 = vmatprep.subr.bf16.mxu0 0
          %711 = vmatpush2.bf16.xpose.msra.mxu0 0
          %712 = vmatprep.subr.bf16.mxu0 0
          %713 = vmatpush2.bf16.xpose.msra.mxu0 0
          %714 = vmatprep.subr.bf16.mxu0 0
          %715 = vmatpush2.bf16.xpose.msra.mxu0 0
          %716 = vmatprep.subr.bf16.mxu0 0
          %717 = vmatpush2.bf16.xpose.msra.mxu0 0
          %718 = vmatprep.subr.bf16.mxu0 0
          %719 = vmatpush2.bf16.xpose.msra.mxu0 0
          %720 = vmatprep.subr.bf16.mxu0 0
          %721 = vmatpush2.bf16.xpose.msra.mxu0 0
          %722 = vmatprep.mubr.bf16.mxu0 0
          %723 = vmatmul.mubr.bf16.gmra.mxu0 %v682
          %v724 = vpop.f32.mrf.mxu0
          %v725 = vadd.f32 0.0, %v724
          %v726 = vpop.f32.mrf.mxu0
          %v727 = vpop.f32.mrf.mxu0
          %v728 = vpop.f32.mrf.mxu0
          %729 = vdwg.mxu0
          %v730 = vsel %vm538, %v725, -1e+30
          %v731 = vsel %vm594, %v730, -inf
          %732 = vmax.xlane.f32.xlu0 %v731
          %v733 = vpop.xlane.xlu0 %732
          %v734 = vsub.f32 %v730, %v733
          %v735 = vmul.f32 %v734, 1.442695
          %v736 = vpow.pop %v735
          %v737 = vsel %vm594, %v736, 0.0
          %738 = vadd.xlane.f32.xlu0 %v737
          %v739 = vpop.xlane.xlu0 %738
          %v740 = vrcp.pop %v739
          %v741 = vmul.f32 %v736, %v740
          %v742 = vadd.f32 %v674, %v741
          %743 = vrot.lane.b32.xlu0 %v495, 104
          %v744 = vpop.permute.xlu0 %743
          %745 = vrot.lane.b32.xlu0 %v495, 72
          %v746 = vpop.permute.xlu0 %745
          %747 = vrot.lane.b32.xlu0 %v496, 72
          %v748 = vpop.permute.xlu0 %747
          %v750 = vsel %vm543, %v744, 0
          %v753 = vsel %vm543, %v746, 0
          %v756 = vsel %vm543, %v748, 0
          %758 = vmatprep.subr.bf16.mxu0 0
          %759 = vmatpush1.bf16.xpose.msra.mxu0 0
          %760 = vmatprep.subr.bf16.mxu0 0
          %761 = vmatpush1.bf16.xpose.msra.mxu0 0
          %762 = vmatprep.subr.bf16.mxu0 0
          %763 = vmatpush1.bf16.xpose.msra.mxu0 0
          %764 = vmatprep.subr.bf16.mxu0 0
          %765 = vmatpush1.bf16.xpose.msra.mxu0 0
          %766 = vmatprep.subr.bf16.mxu0 0
          %767 = vmatpush1.bf16.xpose.msra.mxu0 0
          %768 = vmatprep.subr.bf16.mxu0 0
          %769 = vmatpush1.bf16.xpose.msra.mxu0 0
          %770 = vmatprep.subr.bf16.mxu0 0
          %771 = vmatpush1.bf16.xpose.msra.mxu0 %v756
          %772 = vmatprep.subr.bf16.mxu0 0
          %773 = vmatpush1.bf16.xpose.msra.mxu0 %v753
          %774 = vmatprep.subr.bf16.mxu0 0
          %775 = vmatpush2.bf16.xpose.msra.mxu0 0
          %776 = vmatprep.subr.bf16.mxu0 0
          %777 = vmatpush2.bf16.xpose.msra.mxu0 0
          %778 = vmatprep.subr.bf16.mxu0 0
          %779 = vmatpush2.bf16.xpose.msra.mxu0 0
          %780 = vmatprep.subr.bf16.mxu0 0
          %781 = vmatpush2.bf16.xpose.msra.mxu0 0
          %782 = vmatprep.subr.bf16.mxu0 0
          %783 = vmatpush2.bf16.xpose.msra.mxu0 0
          %784 = vmatprep.subr.bf16.mxu0 0
          %785 = vmatpush2.bf16.xpose.msra.mxu0 0
          %786 = vmatprep.subr.bf16.mxu0 0
          %787 = vmatpush2.bf16.xpose.msra.mxu0 0
          %788 = vmatprep.subr.bf16.mxu0 0
          %789 = vmatpush2.bf16.xpose.msra.mxu0 0
          %790 = vmatprep.mubr.bf16.mxu0 0
          %791 = vmatmul.mubr.bf16.gmra.mxu0 %v750
          %v792 = vpop.f32.mrf.mxu0
          %v793 = vadd.f32 0.0, %v792
          %v794 = vpop.f32.mrf.mxu0
          %v795 = vpop.f32.mrf.mxu0
          %v796 = vpop.f32.mrf.mxu0
          %797 = vdwg.mxu0
          %v798 = vsel %vm538, %v793, -1e+30
          %v799 = vsel %vm594, %v798, -inf
          %800 = vmax.xlane.f32.xlu0 %v799
          %v801 = vpop.xlane.xlu0 %800
          %v802 = vsub.f32 %v798, %v801
          %v803 = vmul.f32 %v802, 1.442695
          %v804 = vpow.pop %v803
          %v805 = vsel %vm594, %v804, 0.0
          %806 = vadd.xlane.f32.xlu0 %v805
          %v807 = vpop.xlane.xlu0 %806
          %v808 = vrcp.pop %v807
          %v809 = vmul.f32 %v804, %v808
          %v810 = vadd.f32 %v742, %v809
          %v811 = vmul.f32 %v810, 0.25
          %812 = vst.msk [vmem:[%s349] sm:$0x1] %vm594, %v811
        $region60: #{tpu_custom_call.1} parent=43 // pred_fallthru
          _
        %s813 = smul.u32 %s34, 24
        %s814 = sshra.s32 %s813, 3
        %s815 = sand.u32 %s813, 7
        %s816 = smul.addr %s814, 4
        %s817 = scalar_lea.vmem [#allocation2], %s816
        %v818 = vld [vmem:[%s817] sm:$0xf]
        %v819 = vld [vmem:[%s817 + $0x4] sm:$0xf]
        %v820 = vld [vmem:[%s817 + $0x8] sm:$0xf]
        %v821 = vld [vmem:[#allocation3] sm:$0xf]
        %v822 = vld [vmem:[#allocation3 + $0x4] sm:$0xf]
        %v823 = vld [vmem:[#allocation3 + $0x8] sm:$0xf]
        %v824 = vld [vmem:[#allocation4] sm:$0xf]
        %v825 = vld [vmem:[#allocation4 + $0x4] sm:$0xf]
        %v826 = vld [vmem:[#allocation4 + $0x8] sm:$0xf]
        %v827 = vlaneseq
        %v828 = vand.u32 %v827, 127
        %vm829 = vcmp.lt.s32.totalorder %v828, 17
        %v833 = vunpack.c.l.b16 %v818
        %v834 = vunpack.c.l.b16 %v819
        %v835 = vunpack.c.l.b16 %v820
        %v836 = vpack.c.b16 %v834, %v833
        %v837 = vpack.c.b16 %v835, %v835
        %v841 = vunpack.c.l.b16 %v821
        %v842 = vunpack.c.l.b16 %v822
        %v843 = vunpack.c.l.b16 %v823
        %v844 = vpack.c.b16 %v842, %v841
        %v845 = vpack.c.b16 %v843, %v843
        %vm846 = vcmask 64512
        %v848 = vsel %vm846, %v836, 0
        %v851 = vsel %vm846, %v837, 0
        %v854 = vsel %vm846, %v844, 0
        %v857 = vsel %vm846, %v845, 0
        %859 = vmatprep.subr.bf16.mxu0 0
        %860 = vmatpush1.bf16.xpose.msra.mxu0 0
        %861 = vmatprep.subr.bf16.mxu0 0
        %862 = vmatpush1.bf16.xpose.msra.mxu0 0
        %863 = vmatprep.subr.bf16.mxu0 0
        %864 = vmatpush1.bf16.xpose.msra.mxu0 0
        %865 = vmatprep.subr.bf16.mxu0 0
        %866 = vmatpush1.bf16.xpose.msra.mxu0 0
        %867 = vmatprep.subr.bf16.mxu0 0
        %868 = vmatpush1.bf16.xpose.msra.mxu0 0
        %869 = vmatprep.subr.bf16.mxu0 0
        %870 = vmatpush1.bf16.xpose.msra.mxu0 0
        %871 = vmatprep.subr.bf16.mxu0 0
        %872 = vmatpush1.bf16.xpose.msra.mxu0 %v857
        %873 = vmatprep.subr.bf16.mxu0 0
        %874 = vmatpush1.bf16.xpose.msra.mxu0 %v854
        %875 = vmatprep.subr.bf16.mxu0 0
        %876 = vmatpush2.bf16.xpose.msra.mxu0 0
        %877 = vmatprep.subr.bf16.mxu0 0
        %878 = vmatpush2.bf16.xpose.msra.mxu0 0
        %879 = vmatprep.subr.bf16.mxu0 0
        %880 = vmatpush2.bf16.xpose.msra.mxu0 0
        %881 = vmatprep.subr.bf16.mxu0 0
        %882 = vmatpush2.bf16.xpose.msra.mxu0 0
        %883 = vmatprep.subr.bf16.mxu0 0
        %884 = vmatpush2.bf16.xpose.msra.mxu0 0
        %885 = vmatprep.subr.bf16.mxu0 0
        %886 = vmatpush2.bf16.xpose.msra.mxu0 0
        %887 = vmatprep.subr.bf16.mxu0 0
        %888 = vmatpush2.bf16.xpose.msra.mxu0 0
        %889 = vmatprep.subr.bf16.mxu0 0
        %890 = vmatpush2.bf16.xpose.msra.mxu0 0
        %891 = vmatprep.mubr.bf16.mxu0 0
        %892 = vmatmul.mubr.bf16.gmra.mxu0 %v848
        %v893 = vpop.f32.mrf.mxu0
        %v894 = vadd.f32 0.0, %v893
        %v895 = vpop.f32.mrf.mxu0
        %v896 = vpop.f32.mrf.mxu0
        %v897 = vadd.f32 0.0, %v896
        %v898 = vpop.f32.mrf.mxu0
        %899 = vmatprep.mubr.bf16.mxu0 0
        %900 = vmatmul.mubr.bf16.gmra.mxu0 %v851
        %v901 = vpop.f32.mrf.mxu0
        %v902 = vadd.f32 0.0, %v901
        %v903 = vpop.f32.mrf.mxu0
        %v904 = vpop.f32.mrf.mxu0
        %v905 = vpop.f32.mrf.mxu0
        %906 = vdwg.mxu0
        %v907 = vsel %vm829, 1, 0
        %vm908 = vcmp.eq.s32.totalorder %v907, 1
        %v909 = vsel %vm908, %v894, -1e+30
        %v910 = vsel %vm908, %v897, -1e+30
        %v911 = vsel %vm908, %v902, -1e+30
        %vm912 = vcmask 195584
        %v913 = vsel %vm912, %v909, -inf
        %914 = vmax.xlane.f32.xlu0 %v913
        %v915 = vpop.xlane.xlu0 %914
        %v916 = vsel %vm912, %v910, -inf
        %917 = vmax.xlane.f32.xlu0 %v916
        %v918 = vpop.xlane.xlu0 %917
        %v919 = vsel %vm912, %v911, -inf
        %920 = vmax.xlane.f32.xlu0 %v919
        %v921 = vpop.xlane.xlu0 %920
        %v922 = vmax.f32 %v915, -1e+30
        %v923 = vmax.f32 %v918, -1e+30
        %v924 = vmax.f32 %v921, -1e+30
        %v925 = vsub.f32 -1e+30, %v922
        %v926 = vsub.f32 -1e+30, %v923
        %v927 = vsub.f32 -1e+30, %v924
        %v928 = vmul.f32 %v925, 1.442695
        %v929 = vpow.pop %v928
        %v930 = vmul.f32 %v926, 1.442695
        %v931 = vpow.pop %v930
        %v932 = vmul.f32 %v927, 1.442695
        %v933 = vpow.pop %v932
        %v934 = vsub.f32 %v909, %v922
        %v935 = vsub.f32 %v910, %v923
        %v936 = vsub.f32 %v911, %v924
        %v937 = vpack.c.bf16 %v935, %v934
        %v938 = vpack.c.bf16 %v936, %v936
        %v940 = vmul.bf16 %v937, 1069105081
        %v941 = vpow.bf16.pop %v940
        %v943 = vmul.bf16 %v938, 1069105081
        %v944 = vpow.bf16.pop %v943
        %v945 = vmul.f32 %v929, 0.0
        %v946 = vmul.f32 %v931, 0.0
        %v947 = vmul.f32 %v933, 0.0
        %v948 = vunpack.c.l.bf16 %v941
        %v949 = vunpack.c.h.bf16 %v941
        %v950 = vunpack.c.l.bf16 %v944
        %v951 = vsel %vm912, %v948, 0.0
        %952 = vadd.xlane.f32.xlu0 %v951
        %v953 = vpop.xlane.xlu0 %952
        %v954 = vsel %vm912, %v949, 0.0
        %955 = vadd.xlane.f32.xlu0 %v954
        %v956 = vpop.xlane.xlu0 %955
        %v957 = vsel %vm912, %v950, 0.0
        %958 = vadd.xlane.f32.xlu0 %v957
        %v959 = vpop.xlane.xlu0 %958
        %v960 = vadd.f32 %v945, %v953
        %v961 = vadd.f32 %v946, %v956
        %v962 = vadd.f32 %v947, %v959
        %v966 = vunpack.c.l.b16 %v824
        %v967 = vunpack.c.l.b16 %v825
        %v968 = vunpack.c.l.b16 %v826
        %v969 = vpack.c.b16 %v967, %v966
        %v970 = vpack.c.b16 %v968, %v968
        %v973 = vsel %vm912, %v941, 0
        %v976 = vsel %vm912, %v944, 0
        %vm978 = vcmask 1043456
        %v980 = vsel %vm978, %v970, 0
        %982 = vmatprep.subr.bf16.mxu0 0
        %983 = vmatpush1.bf16.msra.mxu0 0
        %984 = vmatprep.subr.bf16.mxu0 0
        %985 = vmatpush1.bf16.msra.mxu0 0
        %986 = vmatprep.subr.bf16.mxu0 0
        %987 = vmatpush1.bf16.msra.mxu0 0
        %988 = vmatprep.subr.bf16.mxu0 0
        %989 = vmatpush1.bf16.msra.mxu0 0
        %990 = vmatprep.subr.bf16.mxu0 0
        %991 = vmatpush1.bf16.msra.mxu0 0
        %992 = vmatprep.subr.bf16.mxu0 0
        %993 = vmatpush1.bf16.msra.mxu0 0
        %994 = vmatprep.subr.bf16.mxu0 0
        %995 = vmatpush1.bf16.msra.mxu0 %v980
        %996 = vmatprep.subr.bf16.mxu0 0
        %997 = vmatpush1.bf16.msra.mxu0 %v969
        %998 = vmatprep.subr.bf16.mxu0 0
        %999 = vmatpush2.bf16.msra.mxu0 0
        %1000 = vmatprep.subr.bf16.mxu0 0
        %1001 = vmatpush2.bf16.msra.mxu0 0
        %1002 = vmatprep.subr.bf16.mxu0 0
        %1003 = vmatpush2.bf16.msra.mxu0 0
        %1004 = vmatprep.subr.bf16.mxu0 0
        %1005 = vmatpush2.bf16.msra.mxu0 0
        %1006 = vmatprep.subr.bf16.mxu0 0
        %1007 = vmatpush2.bf16.msra.mxu0 0
        %1008 = vmatprep.subr.bf16.mxu0 0
        %1009 = vmatpush2.bf16.msra.mxu0 0
        %1010 = vmatprep.subr.bf16.mxu0 0
        %1011 = vmatpush2.bf16.msra.mxu0 0
        %1012 = vmatprep.subr.bf16.mxu0 0
        %1013 = vmatpush2.bf16.msra.mxu0 0
        %1014 = vmatprep.mubr.bf16.mxu0 0
        %1015 = vmatmul.mubr.bf16.gmra.mxu0 %v973
        %v1016 = vpop.f32.mrf.mxu0
        %v1017 = vadd.f32 0.0, %v1016
        %v1018 = vpop.f32.mrf.mxu0
        %v1019 = vpop.f32.mrf.mxu0
        %v1020 = vadd.f32 0.0, %v1019
        %v1021 = vpop.f32.mrf.mxu0
        %1022 = vmatprep.mubr.bf16.mxu0 0
        %1023 = vmatmul.mubr.bf16.gmra.mxu0 %v976
        %v1024 = vpop.f32.mrf.mxu0
        %v1025 = vadd.f32 0.0, %v1024
        %v1026 = vpop.f32.mrf.mxu0
        %v1027 = vpop.f32.mrf.mxu0
        %v1028 = vpop.f32.mrf.mxu0
        %1029 = vdwg.mxu0
        %v1030 = vadd.f32 %v945, %v1017
        %v1031 = vadd.f32 %v946, %v1020
        %v1032 = vadd.f32 %v947, %v1025
        %1033 = vrot.lane.b32.xlu0 %v836, 120
        %v1034 = vpop.permute.xlu0 %1033
        %1035 = vrot.lane.b32.xlu0 %v837, 120
        %v1036 = vpop.permute.xlu0 %1035
        %1037 = vrot.lane.b32.xlu0 %v844, 120
        %v1038 = vpop.permute.xlu0 %1037
        %1039 = vrot.lane.b32.xlu0 %v845, 120
        %v1040 = vpop.permute.xlu0 %1039
        %v1042 = vsel %vm846, %v1034, 0
        %v1045 = vsel %vm846, %v1036, 0
        %v1048 = vsel %vm846, %v1038, 0
        %v1051 = vsel %vm846, %v1040, 0
        %1053 = vmatprep.subr.bf16.mxu0 0
        %1054 = vmatpush1.bf16.xpose.msra.mxu0 0
        %1055 = vmatprep.subr.bf16.mxu0 0
        %1056 = vmatpush1.bf16.xpose.msra.mxu0 0
        %1057 = vmatprep.subr.bf16.mxu0 0
        %1058 = vmatpush1.bf16.xpose.msra.mxu0 0
        %1059 = vmatprep.subr.bf16.mxu0 0
        %1060 = vmatpush1.bf16.xpose.msra.mxu0 0
        %1061 = vmatprep.subr.bf16.mxu0 0
        %1062 = vmatpush1.bf16.xpose.msra.mxu0 0
        %1063 = vmatprep.subr.bf16.mxu0 0
        %1064 = vmatpush1.bf16.xpose.msra.mxu0 0
        %1065 = vmatprep.subr.bf16.mxu0 0
        %1066 = vmatpush1.bf16.xpose.msra.mxu0 %v1051
        %1067 = vmatprep.subr.bf16.mxu0 0
        %1068 = vmatpush1.bf16.xpose.msra.mxu0 %v1048
        %1069 = vmatprep.subr.bf16.mxu0 0
        %1070 = vmatpush2.bf16.xpose.msra.mxu0 0
        %1071 = vmatprep.subr.bf16.mxu0 0
        %1072 = vmatpush2.bf16.xpose.msra.mxu0 0
        %1073 = vmatprep.subr.bf16.mxu0 0
        %1074 = vmatpush2.bf16.xpose.msra.mxu0 0
        %1075 = vmatprep.subr.bf16.mxu0 0
        %1076 = vmatpush2.bf16.xpose.msra.mxu0 0
        %1077 = vmatprep.subr.bf16.mxu0 0
        %1078 = vmatpush2.bf16.xpose.msra.mxu0 0
        %1079 = vmatprep.subr.bf16.mxu0 0
        %1080 = vmatpush2.bf16.xpose.msra.mxu0 0
        %1081 = vmatprep.subr.bf16.mxu0 0
        %1082 = vmatpush2.bf16.xpose.msra.mxu0 0
        %1083 = vmatprep.subr.bf16.mxu0 0
        %1084 = vmatpush2.bf16.xpose.msra.mxu0 0
        %1085 = vmatprep.mubr.bf16.mxu0 0
        %1086 = vmatmul.mubr.bf16.gmra.mxu0 %v1042
        %v1087 = vpop.f32.mrf.mxu0
        %v1088 = vadd.f32 0.0, %v1087
        %v1089 = vpop.f32.mrf.mxu0
        %v1090 = vpop.f32.mrf.mxu0
        %v1091 = vadd.f32 0.0, %v1090
        %v1092 = vpop.f32.mrf.mxu0
        %1093 = vmatprep.mubr.bf16.mxu0 0
        %1094 = vmatmul.mubr.bf16.gmra.mxu0 %v1045
        %v1095 = vpop.f32.mrf.mxu0
        %v1096 = vadd.f32 0.0, %v1095
        %v1097 = vpop.f32.mrf.mxu0
        %v1098 = vpop.f32.mrf.mxu0
        %v1099 = vpop.f32.mrf.mxu0
        %1100 = vdwg.mxu0
        %v1101 = vsel %vm908, %v1088, -1e+30
        %v1102 = vsel %vm908, %v1091, -1e+30
        %v1103 = vsel %vm908, %v1096, -1e+30
        %v1104 = vsel %vm912, %v1101, -inf
        %1105 = vmax.xlane.f32.xlu0 %v1104
        %v1106 = vpop.xlane.xlu0 %1105
        %v1107 = vsel %vm912, %v1102, -inf
        %1108 = vmax.xlane.f32.xlu0 %v1107
        %v1109 = vpop.xlane.xlu0 %1108
        %v1110 = vsel %vm912, %v1103, -inf
        %1111 = vmax.xlane.f32.xlu0 %v1110
        %v1112 = vpop.xlane.xlu0 %1111
        %v1113 = vmax.f32 %v1106, -1e+30
        %v1114 = vmax.f32 %v1109, -1e+30
        %v1115 = vmax.f32 %v1112, -1e+30
        %v1116 = vsub.f32 -1e+30, %v1113
        %v1117 = vsub.f32 -1e+30, %v1114
        %v1118 = vsub.f32 -1e+30, %v1115
        %v1119 = vmul.f32 %v1116, 1.442695
        %v1120 = vpow.pop %v1119
        %v1121 = vmul.f32 %v1117, 1.442695
        %v1122 = vpow.pop %v1121
        %v1123 = vmul.f32 %v1118, 1.442695
        %v1124 = vpow.pop %v1123
        %v1125 = vsub.f32 %v1101, %v1113
        %v1126 = vsub.f32 %v1102, %v1114
        %v1127 = vsub.f32 %v1103, %v1115
        %v1128 = vpack.c.bf16 %v1126, %v1125
        %v1129 = vpack.c.bf16 %v1127, %v1127
        %v1131 = vmul.bf16 %v1128, 1069105081
        %v1132 = vpow.bf16.pop %v1131
        %v1134 = vmul.bf16 %v1129, 1069105081
        %v1135 = vpow.bf16.pop %v1134
        %v1136 = vmul.f32 %v1120, 0.0
        %v1137 = vmul.f32 %v1122, 0.0
        %v1138 = vmul.f32 %v1124, 0.0
        %v1139 = vunpack.c.l.bf16 %v1132
        %v1140 = vunpack.c.h.bf16 %v1132
        %v1141 = vunpack.c.l.bf16 %v1135
        %v1142 = vsel %vm912, %v1139, 0.0
        %1143 = vadd.xlane.f32.xlu0 %v1142
        %v1144 = vpop.xlane.xlu0 %1143
        %v1145 = vsel %vm912, %v1140, 0.0
        %1146 = vadd.xlane.f32.xlu0 %v1145
        %v1147 = vpop.xlane.xlu0 %1146
        %v1148 = vsel %vm912, %v1141, 0.0
        %1149 = vadd.xlane.f32.xlu0 %v1148
        %v1150 = vpop.xlane.xlu0 %1149
        %v1151 = vadd.f32 %v1136, %v1144
        %v1152 = vadd.f32 %v1137, %v1147
        %v1153 = vadd.f32 %v1138, %v1150
        %1154 = vrot.lane.b32.xlu0 %v969, 120
        %v1155 = vpop.permute.xlu0 %1154
        %1156 = vrot.lane.b32.xlu0 %v970, 120
        %v1157 = vpop.permute.xlu0 %1156
        %v1160 = vsel %vm912, %v1132, 0
        %v1163 = vsel %vm912, %v1135, 0
        %v1166 = vsel %vm978, %v1157, 0
        %1168 = vmatprep.subr.bf16.mxu0 0
        %1169 = vmatpush1.bf16.msra.mxu0 0
        %1170 = vmatprep.subr.bf16.mxu0 0
        %1171 = vmatpush1.bf16.msra.mxu0 0
        %1172 = vmatprep.subr.bf16.mxu0 0
        %1173 = vmatpush1.bf16.msra.mxu0 0
        %1174 = vmatprep.subr.bf16.mxu0 0
        %1175 = vmatpush1.bf16.msra.mxu0 0
        %1176 = vmatprep.subr.bf16.mxu0 0
        %1177 = vmatpush1.bf16.msra.mxu0 0
        %1178 = vmatprep.subr.bf16.mxu0 0
        %1179 = vmatpush1.bf16.msra.mxu0 0
        %1180 = vmatprep.subr.bf16.mxu0 0
        %1181 = vmatpush1.bf16.msra.mxu0 %v1166
        %1182 = vmatprep.subr.bf16.mxu0 0
        %1183 = vmatpush1.bf16.msra.mxu0 %v1155
        %1184 = vmatprep.subr.bf16.mxu0 0
        %1185 = vmatpush2.bf16.msra.mxu0 0
        %1186 = vmatprep.subr.bf16.mxu0 0
        %1187 = vmatpush2.bf16.msra.mxu0 0
        %1188 = vmatprep.subr.bf16.mxu0 0
        %1189 = vmatpush2.bf16.msra.mxu0 0
        %1190 = vmatprep.subr.bf16.mxu0 0
        %1191 = vmatpush2.bf16.msra.mxu0 0
        %1192 = vmatprep.subr.bf16.mxu0 0
        %1193 = vmatpush2.bf16.msra.mxu0 0
        %1194 = vmatprep.subr.bf16.mxu0 0
        %1195 = vmatpush2.bf16.msra.mxu0 0
        %1196 = vmatprep.subr.bf16.mxu0 0
        %1197 = vmatpush2.bf16.msra.mxu0 0
        %1198 = vmatprep.subr.bf16.mxu0 0
        %1199 = vmatpush2.bf16.msra.mxu0 0
        %1200 = vmatprep.mubr.bf16.mxu0 0
        %1201 = vmatmul.mubr.bf16.gmra.mxu0 %v1160
        %v1202 = vpop.f32.mrf.mxu0
        %v1203 = vadd.f32 0.0, %v1202
        %v1204 = vpop.f32.mrf.mxu0
        %v1205 = vpop.f32.mrf.mxu0
        %v1206 = vadd.f32 0.0, %v1205
        %v1207 = vpop.f32.mrf.mxu0
        %1208 = vmatprep.mubr.bf16.mxu0 0
        %1209 = vmatmul.mubr.bf16.gmra.mxu0 %v1163
        %v1210 = vpop.f32.mrf.mxu0
        %v1211 = vadd.f32 0.0, %v1210
        %v1212 = vpop.f32.mrf.mxu0
        %v1213 = vpop.f32.mrf.mxu0
        %v1214 = vpop.f32.mrf.mxu0
        %1215 = vdwg.mxu0
        %v1216 = vadd.f32 %v1136, %v1203
        %v1217 = vadd.f32 %v1137, %v1206
        %v1218 = vadd.f32 %v1138, %v1211
        %1219 = vrot.lane.b32.xlu0 %v836, 112
        %v1220 = vpop.permute.xlu0 %1219
        %1221 = vrot.lane.b32.xlu0 %v837, 112
        %v1222 = vpop.permute.xlu0 %1221
        %1223 = vrot.lane.b32.xlu0 %v844, 112
        %v1224 = vpop.permute.xlu0 %1223
        %1225 = vrot.lane.b32.xlu0 %v845, 112
        %v1226 = vpop.permute.xlu0 %1225
        %v1228 = vsel %vm846, %v1220, 0
        %v1231 = vsel %vm846, %v1222, 0
        %v1234 = vsel %vm846, %v1224, 0
        %v1237 = vsel %vm846, %v1226, 0
        %1239 = vmatprep.subr.bf16.mxu0 0
        %1240 = vmatpush1.bf16.xpose.msra.mxu0 0
        %1241 = vmatprep.subr.bf16.mxu0 0
        %1242 = vmatpush1.bf16.xpose.msra.mxu0 0
        %1243 = vmatprep.subr.bf16.mxu0 0
        %1244 = vmatpush1.bf16.xpose.msra.mxu0 0
        %1245 = vmatprep.subr.bf16.mxu0 0
        %1246 = vmatpush1.bf16.xpose.msra.mxu0 0
        %1247 = vmatprep.subr.bf16.mxu0 0
        %1248 = vmatpush1.bf16.xpose.msra.mxu0 0
        %1249 = vmatprep.subr.bf16.mxu0 0
        %1250 = vmatpush1.bf16.xpose.msra.mxu0 0
        %1251 = vmatprep.subr.bf16.mxu0 0
        %1252 = vmatpush1.bf16.xpose.msra.mxu0 %v1237
        %1253 = vmatprep.subr.bf16.mxu0 0
        %1254 = vmatpush1.bf16.xpose.msra.mxu0 %v1234
        %1255 = vmatprep.subr.bf16.mxu0 0
        %1256 = vmatpush2.bf16.xpose.msra.mxu0 0
        %1257 = vmatprep.subr.bf16.mxu0 0
        %1258 = vmatpush2.bf16.xpose.msra.mxu0 0
        %1259 = vmatprep.subr.bf16.mxu0 0
        %1260 = vmatpush2.bf16.xpose.msra.mxu0 0
        %1261 = vmatprep.subr.bf16.mxu0 0
        %1262 = vmatpush2.bf16.xpose.msra.mxu0 0
        %1263 = vmatprep.subr.bf16.mxu0 0
        %1264 = vmatpush2.bf16.xpose.msra.mxu0 0
        %1265 = vmatprep.subr.bf16.mxu0 0
        %1266 = vmatpush2.bf16.xpose.msra.mxu0 0
        %1267 = vmatprep.subr.bf16.mxu0 0
        %1268 = vmatpush2.bf16.xpose.msra.mxu0 0
        %1269 = vmatprep.subr.bf16.mxu0 0
        %1270 = vmatpush2.bf16.xpose.msra.mxu0 0
        %1271 = vmatprep.mubr.bf16.mxu0 0
        %1272 = vmatmul.mubr.bf16.gmra.mxu0 %v1228
        %v1273 = vpop.f32.mrf.mxu0
        %v1274 = vadd.f32 0.0, %v1273
        %v1275 = vpop.f32.mrf.mxu0
        %v1276 = vpop.f32.mrf.mxu0
        %v1277 = vadd.f32 0.0, %v1276
        %v1278 = vpop.f32.mrf.mxu0
        %1279 = vmatprep.mubr.bf16.mxu0 0
        %1280 = vmatmul.mubr.bf16.gmra.mxu0 %v1231
        %v1281 = vpop.f32.mrf.mxu0
        %v1282 = vadd.f32 0.0, %v1281
        %v1283 = vpop.f32.mrf.mxu0
        %v1284 = vpop.f32.mrf.mxu0
        %v1285 = vpop.f32.mrf.mxu0
        %1286 = vdwg.mxu0
        %v1287 = vsel %vm908, %v1274, -1e+30
        %v1288 = vsel %vm908, %v1277, -1e+30
        %v1289 = vsel %vm908, %v1282, -1e+30
        %v1290 = vsel %vm912, %v1287, -inf
        %1291 = vmax.xlane.f32.xlu0 %v1290
        %v1292 = vpop.xlane.xlu0 %1291
        %v1293 = vsel %vm912, %v1288, -inf
        %1294 = vmax.xlane.f32.xlu0 %v1293
        %v1295 = vpop.xlane.xlu0 %1294
        %v1296 = vsel %vm912, %v1289, -inf
        %1297 = vmax.xlane.f32.xlu0 %v1296
        %v1298 = vpop.xlane.xlu0 %1297
        %v1299 = vmax.f32 %v1292, -1e+30
        %v1300 = vmax.f32 %v1295, -1e+30
        %v1301 = vmax.f32 %v1298, -1e+30
        %v1302 = vsub.f32 -1e+30, %v1299
        %v1303 = vsub.f32 -1e+30, %v1300
        %v1304 = vsub.f32 -1e+30, %v1301
        %v1305 = vmul.f32 %v1302, 1.442695
        %v1306 = vpow.pop %v1305
        %v1307 = vmul.f32 %v1303, 1.442695
        %v1308 = vpow.pop %v1307
        %v1309 = vmul.f32 %v1304, 1.442695
        %v1310 = vpow.pop %v1309
        %v1311 = vsub.f32 %v1287, %v1299
        %v1312 = vsub.f32 %v1288, %v1300
        %v1313 = vsub.f32 %v1289, %v1301
        %v1314 = vpack.c.bf16 %v1312, %v1311
        %v1315 = vpack.c.bf16 %v1313, %v1313
        %v1317 = vmul.bf16 %v1314, 1069105081
        %v1318 = vpow.bf16.pop %v1317
        %v1320 = vmul.bf16 %v1315, 1069105081
        %v1321 = vpow.bf16.pop %v1320
        %v1322 = vmul.f32 %v1306, 0.0
        %v1323 = vmul.f32 %v1308, 0.0
        %v1324 = vmul.f32 %v1310, 0.0
        %v1325 = vunpack.c.l.bf16 %v1318
        %v1326 = vunpack.c.h.bf16 %v1318
        %v1327 = vunpack.c.l.bf16 %v1321
        %v1328 = vsel %vm912, %v1325, 0.0
        %1329 = vadd.xlane.f32.xlu0 %v1328
        %v1330 = vpop.xlane.xlu0 %1329
        %v1331 = vsel %vm912, %v1326, 0.0
        %1332 = vadd.xlane.f32.xlu0 %v1331
        %v1333 = vpop.xlane.xlu0 %1332
        %v1334 = vsel %vm912, %v1327, 0.0
        %1335 = vadd.xlane.f32.xlu0 %v1334
        %v1336 = vpop.xlane.xlu0 %1335
        %v1337 = vadd.f32 %v1322, %v1330
        %v1338 = vadd.f32 %v1323, %v1333
        %v1339 = vadd.f32 %v1324, %v1336
        %1340 = vrot.lane.b32.xlu0 %v969, 112
        %v1341 = vpop.permute.xlu0 %1340
        %1342 = vrot.lane.b32.xlu0 %v970, 112
        %v1343 = vpop.permute.xlu0 %1342
        %v1346 = vsel %vm912, %v1318, 0
        %v1349 = vsel %vm912, %v1321, 0
        %v1352 = vsel %vm978, %v1343, 0
        %1354 = vmatprep.subr.bf16.mxu0 0
        %1355 = vmatpush1.bf16.msra.mxu0 0
        %1356 = vmatprep.subr.bf16.mxu0 0
        %1357 = vmatpush1.bf16.msra.mxu0 0
        %1358 = vmatprep.subr.bf16.mxu0 0
        %1359 = vmatpush1.bf16.msra.mxu0 0
        %1360 = vmatprep.subr.bf16.mxu0 0
        %1361 = vmatpush1.bf16.msra.mxu0 0
        %1362 = vmatprep.subr.bf16.mxu0 0
        %1363 = vmatpush1.bf16.msra.mxu0 0
        %1364 = vmatprep.subr.bf16.mxu0 0
        %1365 = vmatpush1.bf16.msra.mxu0 0
        %1366 = vmatprep.subr.bf16.mxu0 0
        %1367 = vmatpush1.bf16.msra.mxu0 %v1352
        %1368 = vmatprep.subr.bf16.mxu0 0
        %1369 = vmatpush1.bf16.msra.mxu0 %v1341
        %1370 = vmatprep.subr.bf16.mxu0 0
        %1371 = vmatpush2.bf16.msra.mxu0 0
        %1372 = vmatprep.subr.bf16.mxu0 0
        %1373 = vmatpush2.bf16.msra.mxu0 0
        %1374 = vmatprep.subr.bf16.mxu0 0
        %1375 = vmatpush2.bf16.msra.mxu0 0
        %1376 = vmatprep.subr.bf16.mxu0 0
        %1377 = vmatpush2.bf16.msra.mxu0 0
        %1378 = vmatprep.subr.bf16.mxu0 0
        %1379 = vmatpush2.bf16.msra.mxu0 0
        %1380 = vmatprep.subr.bf16.mxu0 0
        %1381 = vmatpush2.bf16.msra.mxu0 0
        %1382 = vmatprep.subr.bf16.mxu0 0
        %1383 = vmatpush2.bf16.msra.mxu0 0
        %1384 = vmatprep.subr.bf16.mxu0 0
        %1385 = vmatpush2.bf16.msra.mxu0 0
        %1386 = vmatprep.mubr.bf16.mxu0 0
        %1387 = vmatmul.mubr.bf16.gmra.mxu0 %v1346
        %v1388 = vpop.f32.mrf.mxu0
        %v1389 = vadd.f32 0.0, %v1388
        %v1390 = vpop.f32.mrf.mxu0
        %v1391 = vpop.f32.mrf.mxu0
        %v1392 = vadd.f32 0.0, %v1391
        %v1393 = vpop.f32.mrf.mxu0
        %1394 = vmatprep.mubr.bf16.mxu0 0
        %1395 = vmatmul.mubr.bf16.gmra.mxu0 %v1349
        %v1396 = vpop.f32.mrf.mxu0
        %v1397 = vadd.f32 0.0, %v1396
        %v1398 = vpop.f32.mrf.mxu0
        %v1399 = vpop.f32.mrf.mxu0
        %v1400 = vpop.f32.mrf.mxu0
        %1401 = vdwg.mxu0
        %v1402 = vadd.f32 %v1322, %v1389
        %v1403 = vadd.f32 %v1323, %v1392
        %v1404 = vadd.f32 %v1324, %v1397
        %1405 = vrot.lane.b32.xlu0 %v836, 104
        %v1406 = vpop.permute.xlu0 %1405
        %1407 = vrot.lane.b32.xlu0 %v837, 104
        %v1408 = vpop.permute.xlu0 %1407
        %1409 = vrot.lane.b32.xlu0 %v844, 104
        %v1410 = vpop.permute.xlu0 %1409
        %1411 = vrot.lane.b32.xlu0 %v845, 104
        %v1412 = vpop.permute.xlu0 %1411
        %v1414 = vsel %vm846, %v1406, 0
        %v1417 = vsel %vm846, %v1408, 0
        %v1420 = vsel %vm846, %v1410, 0
        %v1423 = vsel %vm846, %v1412, 0
        %1425 = vmatprep.subr.bf16.mxu0 0
        %1426 = vmatpush1.bf16.xpose.msra.mxu0 0
        %1427 = vmatprep.subr.bf16.mxu0 0
        %1428 = vmatpush1.bf16.xpose.msra.mxu0 0
        %1429 = vmatprep.subr.bf16.mxu0 0
        %1430 = vmatpush1.bf16.xpose.msra.mxu0 0
        %1431 = vmatprep.subr.bf16.mxu0 0
        %1432 = vmatpush1.bf16.xpose.msra.mxu0 0
        %1433 = vmatprep.subr.bf16.mxu0 0
        %1434 = vmatpush1.bf16.xpose.msra.mxu0 0
        %1435 = vmatprep.subr.bf16.mxu0 0
        %1436 = vmatpush1.bf16.xpose.msra.mxu0 0
        %1437 = vmatprep.subr.bf16.mxu0 0
        %1438 = vmatpush1.bf16.xpose.msra.mxu0 %v1423
        %1439 = vmatprep.subr.bf16.mxu0 0
        %1440 = vmatpush1.bf16.xpose.msra.mxu0 %v1420
        %1441 = vmatprep.subr.bf16.mxu0 0
        %1442 = vmatpush2.bf16.xpose.msra.mxu0 0
        %1443 = vmatprep.subr.bf16.mxu0 0
        %1444 = vmatpush2.bf16.xpose.msra.mxu0 0
        %1445 = vmatprep.subr.bf16.mxu0 0
        %1446 = vmatpush2.bf16.xpose.msra.mxu0 0
        %1447 = vmatprep.subr.bf16.mxu0 0
        %1448 = vmatpush2.bf16.xpose.msra.mxu0 0
        %1449 = vmatprep.subr.bf16.mxu0 0
        %1450 = vmatpush2.bf16.xpose.msra.mxu0 0
        %1451 = vmatprep.subr.bf16.mxu0 0
        %1452 = vmatpush2.bf16.xpose.msra.mxu0 0
        %1453 = vmatprep.subr.bf16.mxu0 0
        %1454 = vmatpush2.bf16.xpose.msra.mxu0 0
        %1455 = vmatprep.subr.bf16.mxu0 0
        %1456 = vmatpush2.bf16.xpose.msra.mxu0 0
        %1457 = vmatprep.mubr.bf16.mxu0 0
        %1458 = vmatmul.mubr.bf16.gmra.mxu0 %v1414
        %v1459 = vpop.f32.mrf.mxu0
        %v1460 = vadd.f32 0.0, %v1459
        %v1461 = vpop.f32.mrf.mxu0
        %v1462 = vpop.f32.mrf.mxu0
        %v1463 = vadd.f32 0.0, %v1462
        %v1464 = vpop.f32.mrf.mxu0
        %1465 = vmatprep.mubr.bf16.mxu0 0
        %1466 = vmatmul.mubr.bf16.gmra.mxu0 %v1417
        %v1467 = vpop.f32.mrf.mxu0
        %v1468 = vadd.f32 0.0, %v1467
        %v1469 = vpop.f32.mrf.mxu0
        %v1470 = vpop.f32.mrf.mxu0
        %v1471 = vpop.f32.mrf.mxu0
        %1472 = vdwg.mxu0
        %v1473 = vsel %vm908, %v1460, -1e+30
        %v1474 = vsel %vm908, %v1463, -1e+30
        %v1475 = vsel %vm908, %v1468, -1e+30
        %v1476 = vsel %vm912, %v1473, -inf
        %1477 = vmax.xlane.f32.xlu0 %v1476
        %v1478 = vpop.xlane.xlu0 %1477
        %v1479 = vsel %vm912, %v1474, -inf
        %1480 = vmax.xlane.f32.xlu0 %v1479
        %v1481 = vpop.xlane.xlu0 %1480
        %v1482 = vsel %vm912, %v1475, -inf
        %1483 = vmax.xlane.f32.xlu0 %v1482
        %v1484 = vpop.xlane.xlu0 %1483
        %v1485 = vmax.f32 %v1478, -1e+30
        %v1486 = vmax.f32 %v1481, -1e+30
        %v1487 = vmax.f32 %v1484, -1e+30
        %v1488 = vsub.f32 -1e+30, %v1485
        %v1489 = vsub.f32 -1e+30, %v1486
        %v1490 = vsub.f32 -1e+30, %v1487
        %v1491 = vmul.f32 %v1488, 1.442695
        %v1492 = vpow.pop %v1491
        %v1493 = vmul.f32 %v1489, 1.442695
        %v1494 = vpow.pop %v1493
        %v1495 = vmul.f32 %v1490, 1.442695
        %v1496 = vpow.pop %v1495
        %v1497 = vsub.f32 %v1473, %v1485
        %v1498 = vsub.f32 %v1474, %v1486
        %v1499 = vsub.f32 %v1475, %v1487
        %v1500 = vpack.c.bf16 %v1498, %v1497
        %v1501 = vpack.c.bf16 %v1499, %v1499
        %v1503 = vmul.bf16 %v1500, 1069105081
        %v1504 = vpow.bf16.pop %v1503
        %v1506 = vmul.bf16 %v1501, 1069105081
        %v1507 = vpow.bf16.pop %v1506
        %v1508 = vmul.f32 %v1492, 0.0
        %v1509 = vmul.f32 %v1494, 0.0
        %v1510 = vmul.f32 %v1496, 0.0
        %v1511 = vunpack.c.l.bf16 %v1504
        %v1512 = vunpack.c.h.bf16 %v1504
        %v1513 = vunpack.c.l.bf16 %v1507
        %v1514 = vsel %vm912, %v1511, 0.0
        %1515 = vadd.xlane.f32.xlu0 %v1514
        %v1516 = vpop.xlane.xlu0 %1515
        %v1517 = vsel %vm912, %v1512, 0.0
        %1518 = vadd.xlane.f32.xlu0 %v1517
        %v1519 = vpop.xlane.xlu0 %1518
        %v1520 = vsel %vm912, %v1513, 0.0
        %1521 = vadd.xlane.f32.xlu0 %v1520
        %v1522 = vpop.xlane.xlu0 %1521
        %v1523 = vadd.f32 %v1508, %v1516
        %v1524 = vadd.f32 %v1509, %v1519
        %v1525 = vadd.f32 %v1510, %v1522
        %1526 = vrot.lane.b32.xlu0 %v969, 104
        %v1527 = vpop.permute.xlu0 %1526
        %1528 = vrot.lane.b32.xlu0 %v970, 104
        %v1529 = vpop.permute.xlu0 %1528
        %v1532 = vsel %vm912, %v1504, 0
        %v1535 = vsel %vm912, %v1507, 0
        %v1538 = vsel %vm978, %v1529, 0
        %1540 = vmatprep.subr.bf16.mxu0 0
        %1541 = vmatpush1.bf16.msra.mxu0 0
        %1542 = vmatprep.subr.bf16.mxu0 0
        %1543 = vmatpush1.bf16.msra.mxu0 0
        %1544 = vmatprep.subr.bf16.mxu0 0
        %1545 = vmatpush1.bf16.msra.mxu0 0
        %1546 = vmatprep.subr.bf16.mxu0 0
        %1547 = vmatpush1.bf16.msra.mxu0 0
        %1548 = vmatprep.subr.bf16.mxu0 0
        %1549 = vmatpush1.bf16.msra.mxu0 0
        %1550 = vmatprep.subr.bf16.mxu0 0
        %1551 = vmatpush1.bf16.msra.mxu0 0
        %1552 = vmatprep.subr.bf16.mxu0 0
        %1553 = vmatpush1.bf16.msra.mxu0 %v1538
        %1554 = vmatprep.subr.bf16.mxu0 0
        %1555 = vmatpush1.bf16.msra.mxu0 %v1527
        %1556 = vmatprep.subr.bf16.mxu0 0
        %1557 = vmatpush2.bf16.msra.mxu0 0
        %1558 = vmatprep.subr.bf16.mxu0 0
        %1559 = vmatpush2.bf16.msra.mxu0 0
        %1560 = vmatprep.subr.bf16.mxu0 0
        %1561 = vmatpush2.bf16.msra.mxu0 0
        %1562 = vmatprep.subr.bf16.mxu0 0
        %1563 = vmatpush2.bf16.msra.mxu0 0
        %1564 = vmatprep.subr.bf16.mxu0 0
        %1565 = vmatpush2.bf16.msra.mxu0 0
        %1566 = vmatprep.subr.bf16.mxu0 0
        %1567 = vmatpush2.bf16.msra.mxu0 0
        %1568 = vmatprep.subr.bf16.mxu0 0
        %1569 = vmatpush2.bf16.msra.mxu0 0
        %1570 = vmatprep.subr.bf16.mxu0 0
        %1571 = vmatpush2.bf16.msra.mxu0 0
        %1572 = vmatprep.mubr.bf16.mxu0 0
        %1573 = vmatmul.mubr.bf16.gmra.mxu0 %v1532
        %v1574 = vpop.f32.mrf.mxu0
        %v1575 = vadd.f32 0.0, %v1574
        %v1576 = vpop.f32.mrf.mxu0
        %v1577 = vpop.f32.mrf.mxu0
        %v1578 = vadd.f32 0.0, %v1577
        %v1579 = vpop.f32.mrf.mxu0
        %1580 = vmatprep.mubr.bf16.mxu0 0
        %1581 = vmatmul.mubr.bf16.gmra.mxu0 %v1535
        %v1582 = vpop.f32.mrf.mxu0
        %v1583 = vadd.f32 0.0, %v1582
        %v1584 = vpop.f32.mrf.mxu0
        %v1585 = vpop.f32.mrf.mxu0
        %v1586 = vpop.f32.mrf.mxu0
        %1587 = vdwg.mxu0
        %v1588 = vadd.f32 %v1508, %v1575
        %v1589 = vadd.f32 %v1509, %v1578
        %v1590 = vadd.f32 %v1510, %v1583
        %v1591 = vrcp.pop %v960
        %v1592 = vrcp.pop %v961
        %v1593 = vrcp.pop %v962
        %v1594 = vmul.f32 %v1030, %v1591
        %v1595 = vmul.f32 %v1031, %v1592
        %v1596 = vmul.f32 %v1032, %v1593
        %v1597 = vpack.c.bf16 %v1595, %v1594
        %v1598 = vpack.c.bf16 %v1596, %v1596
        %v1599 = vld [vmem:[#allocation10] sm:$0xf]
        %v1600 = vrcp.pop %v1151
        %v1601 = vrcp.pop %v1152
        %v1602 = vrcp.pop %v1153
        %v1603 = vmul.f32 %v1216, %v1600
        %v1604 = vmul.f32 %v1217, %v1601
        %v1605 = vmul.f32 %v1218, %v1602
        %v1606 = vpack.c.bf16 %v1604, %v1603
        %v1607 = vpack.c.bf16 %v1605, %v1605
        %s1608 = scalar_lea.vmem [#allocation10], 4
        %v1609 = vld [vmem:[%s1608] sm:$0xf]
        %v1611 = vsel %vm846, %v1606, 0
        %v1614 = vsel %vm846, %v1607, 0
        %v1617 = vsel %vm978, %v1609, 0
        %1619 = vmatprep.subr.bf16.mxu0 0
        %1620 = vmatpush1.bf16.msra.mxu0 0
        %1621 = vmatprep.subr.bf16.mxu0 0
        %1622 = vmatpush1.bf16.msra.mxu0 0
        %1623 = vmatprep.subr.bf16.mxu0 0
        %1624 = vmatpush1.bf16.msra.mxu0 0
        %1625 = vmatprep.subr.bf16.mxu0 0
        %1626 = vmatpush1.bf16.msra.mxu0 0
        %1627 = vmatprep.subr.bf16.mxu0 0
        %1628 = vmatpush1.bf16.msra.mxu0 0
        %1629 = vmatprep.subr.bf16.mxu0 0
        %1630 = vmatpush1.bf16.msra.mxu0 0
        %1631 = vmatprep.subr.bf16.mxu0 0
        %1632 = vmatpush1.bf16.msra.mxu0 0
        %1633 = vmatprep.subr.bf16.mxu0 0
        %1634 = vmatpush1.bf16.msra.mxu0 %v1617
        %1635 = vmatprep.subr.bf16.mxu0 0
        %1636 = vmatpush2.bf16.msra.mxu0 0
        %1637 = vmatprep.subr.bf16.mxu0 0
        %1638 = vmatpush2.bf16.msra.mxu0 0
        %1639 = vmatprep.subr.bf16.mxu0 0
        %1640 = vmatpush2.bf16.msra.mxu0 0
        %1641 = vmatprep.subr.bf16.mxu0 0
        %1642 = vmatpush2.bf16.msra.mxu0 0
        %1643 = vmatprep.subr.bf16.mxu0 0
        %1644 = vmatpush2.bf16.msra.mxu0 0
        %1645 = vmatprep.subr.bf16.mxu0 0
        %1646 = vmatpush2.bf16.msra.mxu0 0
        %1647 = vmatprep.subr.bf16.mxu0 0
        %1648 = vmatpush2.bf16.msra.mxu0 0
        %1649 = vmatprep.subr.bf16.mxu0 0
        %1650 = vmatpush2.bf16.msra.mxu0 0
        %1651 = vmatprep.mubr.bf16.mxu0 0
        %1652 = vmatmul.mubr.bf16.gmra.mxu0 %v1611
        %v1653 = vpop.f32.mrf.mxu0
        %v1654 = vadd.f32 0.0, %v1653
        %v1655 = vpop.f32.mrf.mxu0
        %v1656 = vpop.f32.mrf.mxu0
        %v1657 = vadd.f32 0.0, %v1656
        %v1658 = vpop.f32.mrf.mxu0
        %1659 = vmatprep.mubr.bf16.mxu0 0
        %1660 = vmatmul.mubr.bf16.gmra.mxu0 %v1614
        %v1661 = vpop.f32.mrf.mxu0
        %v1662 = vadd.f32 0.0, %v1661
        %v1663 = vpop.f32.mrf.mxu0
        %v1664 = vpop.f32.mrf.mxu0
        %v1665 = vpop.f32.mrf.mxu0
        %1666 = vdwg.mxu0
        %v1668 = vsel %vm846, %v1597, 0
        %v1671 = vsel %vm846, %v1598, 0
        %v1674 = vsel %vm978, %v1599, 0
        %1676 = vmatprep.subr.bf16.mxu0 0
        %1677 = vmatpush1.bf16.msra.mxu0 0
        %1678 = vmatprep.subr.bf16.mxu0 0
        %1679 = vmatpush1.bf16.msra.mxu0 0
        %1680 = vmatprep.subr.bf16.mxu0 0
        %1681 = vmatpush1.bf16.msra.mxu0 0
        %1682 = vmatprep.subr.bf16.mxu0 0
        %1683 = vmatpush1.bf16.msra.mxu0 0
        %1684 = vmatprep.subr.bf16.mxu0 0
        %1685 = vmatpush1.bf16.msra.mxu0 0
        %1686 = vmatprep.subr.bf16.mxu0 0
        %1687 = vmatpush1.bf16.msra.mxu0 0
        %1688 = vmatprep.subr.bf16.mxu0 0
        %1689 = vmatpush1.bf16.msra.mxu0 0
        %1690 = vmatprep.subr.bf16.mxu0 0
        %1691 = vmatpush1.bf16.msra.mxu0 %v1674
        %1692 = vmatprep.subr.bf16.mxu0 0
        %1693 = vmatpush2.bf16.msra.mxu0 0
        %1694 = vmatprep.subr.bf16.mxu0 0
        %1695 = vmatpush2.bf16.msra.mxu0 0
        %1696 = vmatprep.subr.bf16.mxu0 0
        %1697 = vmatpush2.bf16.msra.mxu0 0
        %1698 = vmatprep.subr.bf16.mxu0 0
        %1699 = vmatpush2.bf16.msra.mxu0 0
        %1700 = vmatprep.subr.bf16.mxu0 0
        %1701 = vmatpush2.bf16.msra.mxu0 0
        %1702 = vmatprep.subr.bf16.mxu0 0
        %1703 = vmatpush2.bf16.msra.mxu0 0
        %1704 = vmatprep.subr.bf16.mxu0 0
        %1705 = vmatpush2.bf16.msra.mxu0 0
        %1706 = vmatprep.subr.bf16.mxu0 0
        %1707 = vmatpush2.bf16.msra.mxu0 0
        %1708 = vmatprep.mubr.bf16.mxu0 0
        %1709 = vmatmul.mubr.bf16.gmra.mxu0 %v1668
        %v1710 = vpop.f32.mrf.mxu0
        %v1711 = vadd.f32 %v1654, %v1710
        %v1712 = vpop.f32.mrf.mxu0
        %v1713 = vpop.f32.mrf.mxu0
        %v1714 = vadd.f32 %v1657, %v1713
        %v1715 = vpop.f32.mrf.mxu0
        %1716 = vmatprep.mubr.bf16.mxu0 0
        %1717 = vmatmul.mubr.bf16.gmra.mxu0 %v1671
        %v1718 = vpop.f32.mrf.mxu0
        %v1719 = vadd.f32 %v1662, %v1718
        %v1720 = vpop.f32.mrf.mxu0
        %v1721 = vpop.f32.mrf.mxu0
        %v1722 = vpop.f32.mrf.mxu0
        %1723 = vdwg.mxu0
        %v1724 = vrcp.pop %v1337
        %v1725 = vrcp.pop %v1338
        %v1726 = vrcp.pop %v1339
        %v1727 = vmul.f32 %v1402, %v1724
        %v1728 = vmul.f32 %v1403, %v1725
        %v1729 = vmul.f32 %v1404, %v1726
        %v1730 = vpack.c.bf16 %v1728, %v1727
        %v1731 = vpack.c.bf16 %v1729, %v1729
        %s1732 = scalar_lea.vmem [#allocation10], 8
        %v1733 = vld [vmem:[%s1732] sm:$0xf]
        %v1735 = vsel %vm846, %v1730, 0
        %v1738 = vsel %vm846, %v1731, 0
        %v1741 = vsel %vm978, %v1733, 0
        %1743 = vmatprep.subr.bf16.mxu0 0
        %1744 = vmatpush1.bf16.msra.mxu0 0
        %1745 = vmatprep.subr.bf16.mxu0 0
        %1746 = vmatpush1.bf16.msra.mxu0 0
        %1747 = vmatprep.subr.bf16.mxu0 0
        %1748 = vmatpush1.bf16.msra.mxu0 0
        %1749 = vmatprep.subr.bf16.mxu0 0
        %1750 = vmatpush1.bf16.msra.mxu0 0
        %1751 = vmatprep.subr.bf16.mxu0 0
        %1752 = vmatpush1.bf16.msra.mxu0 0
        %1753 = vmatprep.subr.bf16.mxu0 0
        %1754 = vmatpush1.bf16.msra.mxu0 0
        %1755 = vmatprep.subr.bf16.mxu0 0
        %1756 = vmatpush1.bf16.msra.mxu0 0
        %1757 = vmatprep.subr.bf16.mxu0 0
        %1758 = vmatpush1.bf16.msra.mxu0 %v1741
        %1759 = vmatprep.subr.bf16.mxu0 0
        %1760 = vmatpush2.bf16.msra.mxu0 0
        %1761 = vmatprep.subr.bf16.mxu0 0
        %1762 = vmatpush2.bf16.msra.mxu0 0
        %1763 = vmatprep.subr.bf16.mxu0 0
        %1764 = vmatpush2.bf16.msra.mxu0 0
        %1765 = vmatprep.subr.bf16.mxu0 0
        %1766 = vmatpush2.bf16.msra.mxu0 0
        %1767 = vmatprep.subr.bf16.mxu0 0
        %1768 = vmatpush2.bf16.msra.mxu0 0
        %1769 = vmatprep.subr.bf16.mxu0 0
        %1770 = vmatpush2.bf16.msra.mxu0 0
        %1771 = vmatprep.subr.bf16.mxu0 0
        %1772 = vmatpush2.bf16.msra.mxu0 0
        %1773 = vmatprep.subr.bf16.mxu0 0
        %1774 = vmatpush2.bf16.msra.mxu0 0
        %1775 = vmatprep.mubr.bf16.mxu0 0
        %1776 = vmatmul.mubr.bf16.gmra.mxu0 %v1735
        %v1777 = vpop.f32.mrf.mxu0
        %v1778 = vadd.f32 0.0, %v1777
        %v1779 = vpop.f32.mrf.mxu0
        %v1780 = vpop.f32.mrf.mxu0
        %v1781 = vadd.f32 0.0, %v1780
        %v1782 = vpop.f32.mrf.mxu0
        %1783 = vmatprep.mubr.bf16.mxu0 0
        %1784 = vmatmul.mubr.bf16.gmra.mxu0 %v1738
        %v1785 = vpop.f32.mrf.mxu0
        %v1786 = vadd.f32 0.0, %v1785
        %v1787 = vpop.f32.mrf.mxu0
        %v1788 = vpop.f32.mrf.mxu0
        %v1789 = vpop.f32.mrf.mxu0
        %1790 = vdwg.mxu0
        %v1791 = vadd.f32 %v1711, %v1778
        %v1792 = vadd.f32 %v1714, %v1781
        %v1793 = vadd.f32 %v1719, %v1786
        %v1794 = vrcp.pop %v1523
        %v1795 = vrcp.pop %v1524
        %v1796 = vrcp.pop %v1525
        %v1797 = vmul.f32 %v1588, %v1794
        %v1798 = vmul.f32 %v1589, %v1795
        %v1799 = vmul.f32 %v1590, %v1796
        %v1800 = vpack.c.bf16 %v1798, %v1797
        %v1801 = vpack.c.bf16 %v1799, %v1799
        %s1802 = scalar_lea.vmem [#allocation10], 12
        %v1803 = vld [vmem:[%s1802] sm:$0xf]
        %v1805 = vsel %vm846, %v1800, 0
        %v1808 = vsel %vm846, %v1801, 0
        %v1811 = vsel %vm978, %v1803, 0
        %1813 = vmatprep.subr.bf16.mxu0 0
        %1814 = vmatpush1.bf16.msra.mxu0 0
        %1815 = vmatprep.subr.bf16.mxu0 0
        %1816 = vmatpush1.bf16.msra.mxu0 0
        %1817 = vmatprep.subr.bf16.mxu0 0
        %1818 = vmatpush1.bf16.msra.mxu0 0
        %1819 = vmatprep.subr.bf16.mxu0 0
        %1820 = vmatpush1.bf16.msra.mxu0 0
        %1821 = vmatprep.subr.bf16.mxu0 0
        %1822 = vmatpush1.bf16.msra.mxu0 0
        %1823 = vmatprep.subr.bf16.mxu0 0
        %1824 = vmatpush1.bf16.msra.mxu0 0
        %1825 = vmatprep.subr.bf16.mxu0 0
        %1826 = vmatpush1.bf16.msra.mxu0 0
        %1827 = vmatprep.subr.bf16.mxu0 0
        %1828 = vmatpush1.bf16.msra.mxu0 %v1811
        %1829 = vmatprep.subr.bf16.mxu0 0
        %1830 = vmatpush2.bf16.msra.mxu0 0
        %1831 = vmatprep.subr.bf16.mxu0 0
        %1832 = vmatpush2.bf16.msra.mxu0 0
        %1833 = vmatprep.subr.bf16.mxu0 0
        %1834 = vmatpush2.bf16.msra.mxu0 0
        %1835 = vmatprep.subr.bf16.mxu0 0
        %1836 = vmatpush2.bf16.msra.mxu0 0
        %1837 = vmatprep.subr.bf16.mxu0 0
        %1838 = vmatpush2.bf16.msra.mxu0 0
        %1839 = vmatprep.subr.bf16.mxu0 0
        %1840 = vmatpush2.bf16.msra.mxu0 0
        %1841 = vmatprep.subr.bf16.mxu0 0
        %1842 = vmatpush2.bf16.msra.mxu0 0
        %1843 = vmatprep.subr.bf16.mxu0 0
        %1844 = vmatpush2.bf16.msra.mxu0 0
        %1845 = vmatprep.mubr.bf16.mxu0 0
        %1846 = vmatmul.mubr.bf16.gmra.mxu0 %v1805
        %v1847 = vpop.f32.mrf.mxu0
        %v1848 = vadd.f32 0.0, %v1847
        %v1849 = vpop.f32.mrf.mxu0
        %v1850 = vpop.f32.mrf.mxu0
        %v1851 = vadd.f32 0.0, %v1850
        %v1852 = vpop.f32.mrf.mxu0
        %1853 = vmatprep.mubr.bf16.mxu0 0
        %1854 = vmatmul.mubr.bf16.gmra.mxu0 %v1808
        %v1855 = vpop.f32.mrf.mxu0
        %v1856 = vadd.f32 0.0, %v1855
        %v1857 = vpop.f32.mrf.mxu0
        %v1858 = vpop.f32.mrf.mxu0
        %v1859 = vpop.f32.mrf.mxu0
        %1860 = vdwg.mxu0
        %v1861 = vadd.f32 %v1791, %v1848
        %v1862 = vadd.f32 %v1792, %v1851
        %v1863 = vadd.f32 %v1793, %v1856
        %v1864 = vld [vmem:[%s5] sm:$0x1]
        %v1866 = vlaneseq
        %v1867 = vshrl.u32 %v1866, 7
        %v1868 = vsub.s32 0, %v1867
        %v1869 = vrot.slane %v1864, %v1868
        %v1871 = vadd.f32 %v1861, %v1869
        %v1872 = vadd.f32 %v1862, %v1869
        %v1873 = vadd.f32 %v1863, %v1869
        %s1874 = smul.addr %s814, 4
        %s1875 = scalar_lea.vmem %s307, %s1874 [#allocation5]
        %v1876 = vld [vmem:[%s1875] sm:$0xf]
        %v1877 = vld [vmem:[%s1875 + $0x4] sm:$0xf]
        %v1878 = vld [vmem:[%s1875 + $0x8] sm:$0xf]
        %v1879 = vunpack.c.l.bf16 %v1876
        %v1880 = vunpack.c.l.bf16 %v1877
        %v1881 = vunpack.c.l.bf16 %v1878
        %v1882 = vadd.f32 %v1879, %v1871
        %v1883 = vadd.f32 %v1880, %v1872
        %v1884 = vadd.f32 %v1881, %v1873
        %v1885 = vpack.c.bf16 %v1883, %v1882
        %v1886 = vpack.c.bf16 %v1884, %v1884
        %v1889 = vunpack.c.l.b16 %v1885
        %v1890 = vunpack.c.h.b16 %v1885
        %v1891 = vunpack.c.l.b16 %v1886
        %v1892 = vpack.c.b16 %v1889, %v1889
        %v1893 = vpack.c.b16 %v1890, %v1890
        %v1894 = vpack.c.b16 %v1891, %v1891
        %vm1898 = vcmask 257024
        %1899 = vst.msk [vmem:[%s343] sm:$0xf] %vm1898, %v1892
        %1900 = vst.msk [vmem:[%s343 + $0x4] sm:$0xf] %vm1898, %v1893
        %1901 = vst.msk [vmem:[%s343 + $0x8] sm:$0xf] %vm1898, %v1894
        %s1902 = sand.u32 %s182, 1
        %s1903 = scalar_lea.sflag [#allocation7], %s1902
        %s1904 = sand.u32 %s182, 1
        %s1905 = smul.addr %s1904, 12
        %s1906 = scalar_lea.vmem [#allocation11], %s1905
        %s1907 = sand.u32 %s208, 1
        %s1908 = scalar_lea.sflag [#allocation13], %s1907
        %s1909 = sand.u32 %s208, 1
        %s1910 = scalar_lea.vmem [#allocation12], %s1909
        // Predicated region
        $region61: #{tpu_custom_call.1} parent=43 // pred_check
          %p1911 = pneg %p192
        $region62: #{tpu_custom_call.1} parent=43 // pred_check_branch
          %1913 = sbr.rel (%p1911) target = $region64
        $region63: #{tpu_custom_call.1} parent=43 // pred_region
          %s1914 = smul.u32 3, %s34
          %s1916 = ssub.s32 192, 192
          %1917 = vsyncadd %s1903, %s1916
          %s1918 = smul.addr %s33, 3
          %s1919 = sadd.s32 %s1914, %s1918
          %s1920 = smul.addr %s1919, 64
          %s1921 = scalar_lea.hbm %s6, %s1920
          %s1922 = sshll.u32 %s1906, 4
          %s1923 = int_to_ptr.vmem [resolvable:$true] %s1922
          %1928 = dma.vmem_to_hbm [thread:$0]  %s1923, 192, %s1921, %s1903, 64, 64, 4
        $region64: #{tpu_custom_call.1} parent=43 // pred_fallthru
          _
        // Predicated region
        $region65: #{tpu_custom_call.1} parent=43 // pred_check
          %p1929 = pneg %p218
        $region66: #{tpu_custom_call.1} parent=43 // pred_check_branch
          %1931 = sbr.rel (%p1929) target = $region68
        $region67: #{tpu_custom_call.1} parent=43 // pred_region
          %s1933 = ssub.s32 16, 16
          %1934 = vsyncadd %s1908, %s1933
          %s1935 = smul.addr %s33, 16
          %s1936 = scalar_lea.hbm %s7, %s1935
          %s1938 = sshll.u32 %s1910, 4
          %s1939 = int_to_ptr.vmem [resolvable:$true] %s1938
          %1941 = dma.vmem_to_hbm [thread:$0]  %s1939, 16, %s1936, %s1908
        $region68: #{tpu_custom_call.1} parent=43 // pred_fallthru
          _
      $region44: #{tpu_custom_call.1} parent=5 // pred_fallthru
        _
      %p1942 = scmp.le.s32.totalorder 2, %s24
      // Predicated region
      $region69: #{tpu_custom_call.1} parent=5 // pred_check
        %p1943 = pneg %p1942
      $region70: #{tpu_custom_call.1} parent=5 // pred_check_branch
        %1945 = sbr.rel (%p1943) target = $region72
      $region71: #{tpu_custom_call.1} parent=5 // pred_region
        %s1946 = ssub.s32 %s24, 2
        // Predicated region
        $region73: #{tpu_custom_call.1} parent=71 // pred_check
          %p1947 = pneg %p198
        $region74: #{tpu_custom_call.1} parent=71 // pred_check_branch
          %1949 = sbr.rel (%p1947) target = $region76
        $region75: #{tpu_custom_call.1} parent=71 // pred_region
          %s1950 = sand.u32 %s183, 1
          %s1951 = scalar_lea.sflag [#allocation7], %s1950
          %s1952 = sand.u32 %s183, 1
          %s1953 = smul.addr %s1952, 12
          %s1954 = scalar_lea.vmem [#allocation11], %s1953
          %1955 = dma.done %s1951, 192
        $region76: #{tpu_custom_call.1} parent=71 // pred_fallthru
          _
        // Predicated region
        $region77: #{tpu_custom_call.1} parent=71 // pred_check
          %p1956 = pneg %p224
        $region78: #{tpu_custom_call.1} parent=71 // pred_check_branch
          %1958 = sbr.rel (%p1956) target = $region80
        $region79: #{tpu_custom_call.1} parent=71 // pred_region
          %s1959 = sand.u32 %s209, 1
          %s1960 = scalar_lea.sflag [#allocation13], %s1959
          %s1961 = sand.u32 %s209, 1
          %s1962 = scalar_lea.vmem [#allocation12], %s1961
          %1963 = dma.done %s1960, 16
        $region80: #{tpu_custom_call.1} parent=71 // pred_fallthru
          _
      $region72: #{tpu_custom_call.1} parent=5 // pred_fallthru
        _
    $region6: #{tpu_custom_call.1} parent=1 // loop_footer
      %s28 = sadd.s32 1, %s24
    $region7: #{tpu_custom_call.1} parent=1 // loop_footer_branch
      %23 = sbr.rel target = $region3
    $region8: #{tpu_custom_call.1} parent=1 // loop_exit
      _
    %1964 = vsyncpa [#allocation6], 1
    %s1965 = scalar_lea.sflag [#allocation6], 1
    %1966 = vsyncpa %s1965, 1
    %1967 = vsyncpa [#allocation9], 1
    %1968 = vsyncpa [#allocation7], 1
    %s1969 = scalar_lea.sflag [#allocation7], 1
    %1970 = vsyncpa %s1969, 1
    %1971 = vsyncpa [#allocation13], 1
    %s1972 = scalar_lea.sflag [#allocation13], 1
    %1973 = vsyncpa %s1972, 1

// kernel: tpu_custom_call.1
$region0: #{tpu_custom_call.1}
  #allocation0 [shape = 'u32[]', space=smem, size = 0x4, offset = 0x4, fixed_abs, tag = 'smem constant byte address 0x4 - core index']
  #allocation1 [shape = 'u32[144,128]{1,0:T(1,128)}', space=vmem, size = 0x12000, scoped, tag = 'internal scratch']
  #allocation2 [shape = 'bf16[24,32]{1,0:T(8,128)(2,1)}', space=vmem, size = 0x1800, scoped, tag = 'scratch operand']
  #allocation3 [shape = 'bf16[24,32]{1,0:T(8,128)(2,1)}', space=vmem, size = 0x1800, scoped, tag = 'scratch operand']
  #allocation4 [shape = 'bf16[24,32]{1,0:T(8,128)(2,1)}', space=vmem, size = 0x1800, scoped, tag = 'scratch operand']
  %s0 = inlined_call_operand.hbm [shape: bf16[2,24,32], index: 0, kind: input, shape index: {}]
  %s1 = inlined_call_operand.vmem [shape: f32[1,32], index: 1, kind: input, shape index: {}]
  %s2 = inlined_call_operand.vmem [shape: f32[1,32], index: 2, kind: input, shape index: {}]
  %s3 = inlined_call_operand.hbm [shape: bf16[32,96], index: 3, kind: input, shape index: {}]
  %s4 = inlined_call_operand.hbm [shape: bf16[4,8,32], index: 4, kind: input, shape index: {}]
  %s5 = inlined_call_operand.vmem [shape: f32[1,32], index: 5, kind: input, shape index: {}]
  %s6 = inlined_call_operand.hbm [shape: bf16[2,24,32], index: 6, kind: output, shape index: {0}]
  %s7 = inlined_call_operand.hbm [shape: f32[2,1,24], index: 7, kind: output, shape index: {1}]
  %8 = xla_tuple %s6, %s7
  %s9 = sld [smem:[#allocation0]]
  $region81: #{tpu_custom_call.1} parent=0
    _
  %s11 = ssub.s32 1, %s9
  %s12 = scalar_select 0, %s11, %s9
  $region1: #{tpu_custom_call.1} parent=0
    #allocation5 [shape = 'u8[12288]{0}', space=vmem, size = 0x3000, scoped, tag = 'input window, operand 0']
    #allocation6 [shape = 's32[2]{0}', space=sflag, size = 0x8, scoped, tag = 'scoped memory for tpu_custom_call.1']
    #allocation7 [shape = 's32[2]{0}', space=sflag, size = 0x8, scoped, tag = 'scoped memory for tpu_custom_call.1']
    #allocation8 [shape = 'u8[8192]{0}', space=vmem, size = 0x2000, scoped, tag = 'input window, operand 3, single buffered']
    #allocation9 [shape = 's32[1]{0}', space=sflag, size = 0x4, scoped, tag = 'scoped memory for tpu_custom_call.1']
    #allocation10 [shape = 'u8[8192]{0}', space=vmem, size = 0x2000, scoped, tag = 'input window, operand 4, single buffered']
    #allocation11 [shape = 'u8[12288]{0}', space=vmem, size = 0x3000, scoped, tag = 'output window, operand 0']
    #allocation12 [shape = 'u8[1024]{0}', space=vmem, size = 0x400, scoped, tag = 'output window, operand 1']
    #allocation13 [shape = 's32[2]{0}', space=sflag, size = 0x8, scoped, tag = 'scoped memory for tpu_custom_call.1']
    %13 = vsyncpa [#allocation6], 0
    %s14 = scalar_lea.sflag [#allocation6], 1
    %15 = vsyncpa %s14, 0
    %16 = vsyncpa [#allocation9], 0
    %17 = vsyncpa [#allocation7], 0
    %s18 = scalar_lea.sflag [#allocation7], 1
    %19 = vsyncpa %s18, 0
    %20 = vsyncpa [#allocation13], 0
    %s21 = scalar_lea.sflag [#allocation13], 1
    %22 = vsyncpa %s21, 0
    loop: start=0, step=1, limit=4
    $region2: #{tpu_custom_call.1} parent=1 // loop_pre_header
      _
    $region3: #{tpu_custom_call.1} parent=1 // loop_header
      %s24 = sphi 0, %s28
      %p25 = scmp.ge.s32.totalorder %s24, 4
      %s31 = sphi 0, %s43
      %s32 = sphi 0, %s39
      %s33 = sphi 0, %s31
      %s34 = sphi 0, %s32
      %s35 = sphi 0, %s33
      %s36 = sphi 0, %s34
      %s46 = sphi 0, %s48
      %s49 = sphi 0, %s46
      %s50 = sphi 0, %s49
      %s66 = sphi 0, %s50
      %s70 = sphi 0, %s70
      %s72 = sphi 0, %s70
      %s73 = sphi 0, %s72
      %s87 = sphi 0, %s73
      %s91 = sphi 0, %s91
      %s93 = sphi 0, %s91
      %s94 = sphi 0, %s93
      %s108 = sphi 0, %s94
      %s112 = sphi 0, %s112
      %s114 = sphi 0, %s112
      %s115 = sphi 0, %s114
      %s129 = sphi 0, %s115
      %s133 = sphi 0, %s133
      %s135 = sphi 0, %s133
      %s136 = sphi 0, %s135
      %s150 = sphi 0, %s136
      %s154 = sphi 0, %s154
      %s156 = sphi 0, %s154
      %s157 = sphi 0, %s156
      %s171 = sphi 0, %s157
      %s179 = sphi 0, %s181
      %s182 = sphi 0, %s179
      %s183 = sphi 0, %s182
      %s199 = sphi 0, %s183
      %s205 = sphi 0, %s207
      %s208 = sphi 0, %s205
      %s209 = sphi 0, %s208
      %s225 = sphi 0, %s209
    $region4: #{tpu_custom_call.1} parent=1 // loop_header_branch
      %27 = sbr.rel (%p25) target = $region8
    $region5: #{tpu_custom_call.1} parent=1 // loop_body
      %s29 = ssub.s32 %s24, 1
      %s30 = ssub.s32 %s24, 2
      %s37 = sadd.s32 1, %s32
      %p38 = scmp.ge.s32.totalorder %s37, 1
      %s39 = scalar_select %p38, 0, %s37
      %s40 = sadd.s32 1, %s31
      %s41 = scalar_select %p38, %s40, %s31
      %p42 = scmp.ge.s32.totalorder %s41, 2
      %s43 = scalar_select %p42, 0, %s41
      %s44 = ssub.s32 %s31, %s43
      %p45 = scmp.eq.s32.totalorder %s44, 0
      %s47 = sadd.s32 %s46, 1
      %s48 = scalar_select %p45, %s46, %s47
      %p51 = pneg %p45
      %p52 = scmp.eq.s32.totalorder %s24, 1
      %p53 = por %p51, %p52
      %p54 = scmp.ne.s32.totalorder %s46, %s49
      %p55 = scmp.eq.s32.totalorder %s24, 0
      %p56 = por %p54, %p55
      %p57 = scmp.ne.s32.totalorder %s46, %s49
      %p58 = scmp.eq.s32.totalorder %s29, 1
      %p59 = por %p57, %p58
      %p60 = scmp.ne.s32.totalorder %s49, %s50
      %p61 = scmp.eq.s32.totalorder %s29, 0
      %p62 = por %p60, %p61
      %p63 = scmp.ne.s32.totalorder %s49, %s50
      %p64 = scmp.eq.s32.totalorder %s30, 1
      %p65 = por %p63, %p64
      %p67 = scmp.ne.s32.totalorder %s50, %s66
      %p68 = scmp.eq.s32.totalorder %s30, 0
      %p69 = por %p67, %p68
      %s71 = sadd.s32 %s70, 1
      %p74 = scmp.eq.s32.totalorder %s24, 1
      %p75 = scmp.ne.s32.totalorder %s70, %s72
      %p76 = scmp.eq.s32.totalorder %s24, 0
      %p77 = por %p75, %p76
      %p78 = scmp.ne.s32.totalorder %s70, %s72
      %p79 = scmp.eq.s32.totalorder %s29, 1
      %p80 = por %p78, %p79
      %p81 = scmp.ne.s32.totalorder %s72, %s73
      %p82 = scmp.eq.s32.totalorder %s29, 0
      %p83 = por %p81, %p82
      %p84 = scmp.ne.s32.totalorder %s72, %s73
      %p85 = scmp.eq.s32.totalorder %s30, 1
      %p86 = por %p84, %p85
      %p88 = scmp.ne.s32.totalorder %s73, %s87
      %p89 = scmp.eq.s32.totalorder %s30, 0
      %p90 = por %p88, %p89
      %s92 = sadd.s32 %s91, 1
      %p95 = scmp.eq.s32.totalorder %s24, 1
      %p96 = scmp.ne.s32.totalorder %s91, %s93
      %p97 = scmp.eq.s32.totalorder %s24, 0
      %p98 = por %p96, %p97
      %p99 = scmp.ne.s32.totalorder %s91, %s93
      %p100 = scmp.eq.s32.totalorder %s29, 1
      %p101 = por %p99, %p100
      %p102 = scmp.ne.s32.totalorder %s93, %s94
      %p103 = scmp.eq.s32.totalorder %s29, 0
      %p104 = por %p102, %p103
      %p105 = scmp.ne.s32.totalorder %s93, %s94
      %p106 = scmp.eq.s32.totalorder %s30, 1
      %p107 = por %p105, %p106
      %p109 = scmp.ne.s32.totalorder %s94, %s108
      %p110 = scmp.eq.s32.totalorder %s30, 0
      %p111 = por %p109, %p110
      %s113 = sadd.s32 %s112, 1
      %p116 = scmp.eq.s32.totalorder %s24, 1
      %p117 = scmp.ne.s32.totalorder %s112, %s114
      %p118 = scmp.eq.s32.totalorder %s24, 0
      %p119 = por %p117, %p118
      %p120 = scmp.ne.s32.totalorder %s112, %s114
      %p121 = scmp.eq.s32.totalorder %s29, 1
      %p122 = por %p120, %p121
      %p123 = scmp.ne.s32.totalorder %s114, %s115
      %p124 = scmp.eq.s32.totalorder %s29, 0
      %p125 = por %p123, %p124
      %p126 = scmp.ne.s32.totalorder %s114, %s115
      %p127 = scmp.eq.s32.totalorder %s30, 1
      %p128 = por %p126, %p127
      %p130 = scmp.ne.s32.totalorder %s115, %s129
      %p131 = scmp.eq.s32.totalorder %s30, 0
      %p132 = por %p130, %p131
      %s134 = sadd.s32 %s133, 1
      %p137 = scmp.eq.s32.totalorder %s24, 1
      %p138 = scmp.ne.s32.totalorder %s133, %s135
      %p139 = scmp.eq.s32.totalorder %s24, 0
      %p140 = por %p138, %p139
      %p141 = scmp.ne.s32.totalorder %s133, %s135
      %p142 = scmp.eq.s32.totalorder %s29, 1
      %p143 = por %p141, %p142
      %p144 = scmp.ne.s32.totalorder %s135, %s136
      %p145 = scmp.eq.s32.totalorder %s29, 0
      %p146 = por %p144, %p145
      %p147 = scmp.ne.s32.totalorder %s135, %s136
      %p148 = scmp.eq.s32.totalorder %s30, 1
      %p149 = por %p147, %p148
      %p151 = scmp.ne.s32.totalorder %s136, %s150
      %p152 = scmp.eq.s32.totalorder %s30, 0
      %p153 = por %p151, %p152
      %s155 = sadd.s32 %s154, 1
      %p158 = scmp.eq.s32.totalorder %s24, 1
      %p159 = scmp.ne.s32.totalorder %s154, %s156
      %p160 = scmp.eq.s32.totalorder %s24, 0
      %p161 = por %p159, %p160
      %p162 = scmp.ne.s32.totalorder %s154, %s156
      %p163 = scmp.eq.s32.totalorder %s29, 1
      %p164 = por %p162, %p163
      %p165 = scmp.ne.s32.totalorder %s156, %s157
      %p166 = scmp.eq.s32.totalorder %s29, 0
      %p167 = por %p165, %p166
      %p168 = scmp.ne.s32.totalorder %s156, %s157
      %p169 = scmp.eq.s32.totalorder %s30, 1
      %p170 = por %p168, %p169
      %p172 = scmp.ne.s32.totalorder %s157, %s171
      %p173 = scmp.eq.s32.totalorder %s30, 0
      %p174 = por %p172, %p173
      %s175 = ssub.s32 %s31, %s43
      %s176 = ssub.s32 %s32, %s39
      %s177 = sor.u32 %s175, %s176
      %p178 = scmp.eq.s32.totalorder %s177, 0
      %s180 = sadd.s32 %s179, 1
      %s181 = scalar_select %p178, %s179, %s180
      %p184 = pneg %p178
      %p185 = scmp.eq.s32.totalorder %s24, 1
      %p186 = por %p184, %p185
      %p187 = scmp.ne.s32.totalorder %s179, %s182
      %p188 = scmp.eq.s32.totalorder %s24, 0
      %p189 = por %p187, %p188
      %p190 = scmp.ne.s32.totalorder %s179, %s182
      %p191 = scmp.eq.s32.totalorder %s29, 1
      %p192 = por %p190, %p191
      %p193 = scmp.ne.s32.totalorder %s182, %s183
      %p194 = scmp.eq.s32.totalorder %s29, 0
      %p195 = por %p193, %p194
      %p196 = scmp.ne.s32.totalorder %s182, %s183
      %p197 = scmp.eq.s32.totalorder %s30, 1
      %p198 = por %p196, %p197
      %p200 = scmp.ne.s32.totalorder %s183, %s199
      %p201 = scmp.eq.s32.totalorder %s30, 0
      %p202 = por %p200, %p201
      %s203 = ssub.s32 %s31, %s43
      %p204 = scmp.eq.s32.totalorder %s203, 0
      %s206 = sadd.s32 %s205, 1
      %s207 = scalar_select %p204, %s205, %s206
      %p210 = pneg %p204
      %p211 = scmp.eq.s32.totalorder %s24, 1
      %p212 = por %p210, %p211
      %p213 = scmp.ne.s32.totalorder %s205, %s208
      %p214 = scmp.eq.s32.totalorder %s24, 0
      %p215 = por %p213, %p214
      %p216 = scmp.ne.s32.totalorder %s205, %s208
      %p217 = scmp.eq.s32.totalorder %s29, 1
      %p218 = por %p216, %p217
      %p219 = scmp.ne.s32.totalorder %s208, %s209
      %p220 = scmp.eq.s32.totalorder %s29, 0
      %p221 = por %p219, %p220
      %p222 = scmp.ne.s32.totalorder %s208, %s209
      %p223 = scmp.eq.s32.totalorder %s30, 1
      %p224 = por %p222, %p223
      %p226 = scmp.ne.s32.totalorder %s209, %s225
      %p227 = scmp.eq.s32.totalorder %s30, 0
      %p228 = por %p226, %p227
      %p229 = scmp.le.s32.totalorder 1, %s24
      %p230 = scmp.lt.s32.totalorder %s24, 3
      %p231 = pnand %p229, %p230
      %p232 = pneg %p231
      // Predicated region
      $region9: #{tpu_custom_call.1} parent=5 // pred_check
        _
      $region10: #{tpu_custom_call.1} parent=5 // pred_check_branch
        %234 = sbr.rel (%p231) target = $region12
      $region11: #{tpu_custom_call.1} parent=5 // pred_region
        %s235 = ssub.s32 %s24, 1
        // Predicated region
        $region13: #{tpu_custom_call.1} parent=11 // pred_check
          %p236 = pneg %p83
        $region14: #{tpu_custom_call.1} parent=11 // pred_check_branch
          %238 = sbr.rel (%p236) target = $region16
        $region15: #{tpu_custom_call.1} parent=11 // pred_region
          _
        $region16: #{tpu_custom_call.1} parent=11 // pred_fallthru
          _
        // Predicated region
        $region17: #{tpu_custom_call.1} parent=11 // pred_check
          %p239 = pneg %p104
        $region18: #{tpu_custom_call.1} parent=11 // pred_check_branch
          %241 = sbr.rel (%p239) target = $region20
        $region19: #{tpu_custom_call.1} parent=11 // pred_region
          _
        $region20: #{tpu_custom_call.1} parent=11 // pred_fallthru
          _
        // Predicated region
        $region21: #{tpu_custom_call.1} parent=11 // pred_check
          %p242 = pneg %p125
        $region22: #{tpu_custom_call.1} parent=11 // pred_check_branch
          %244 = sbr.rel (%p242) target = $region24
        $region23: #{tpu_custom_call.1} parent=11 // pred_region
          %s246 = ssub.s32 256, 256
          %247 = vsyncadd [#allocation9], %s246
          %s248 = sshll.u32 [#allocation8], 4
          %s249 = int_to_ptr.vmem [resolvable:$true] %s248
          %254 = dma.hbm_to_vmem [thread:$0]  %s3, 256, %s249, [#allocation9], 64, 64, 4
        $region24: #{tpu_custom_call.1} parent=11 // pred_fallthru
          _
        // Predicated region
        $region25: #{tpu_custom_call.1} parent=11 // pred_check
          %p255 = pneg %p146
        $region26: #{tpu_custom_call.1} parent=11 // pred_check_branch
          %257 = sbr.rel (%p255) target = $region28
        $region27: #{tpu_custom_call.1} parent=11 // pred_region
          %s259 = ssub.s32 256, 256
          %260 = vsyncadd [#allocation9], %s259
          %s261 = sshll.u32 [#allocation10], 4
          %s262 = int_to_ptr.vmem [resolvable:$true] %s261
          %267 = dma.hbm_to_vmem [thread:$0]  %s4, 256, %s262, [#allocation9], 64, 64, 4
        $region28: #{tpu_custom_call.1} parent=11 // pred_fallthru
          _
        // Predicated region
        $region29: #{tpu_custom_call.1} parent=11 // pred_check
          %p268 = pneg %p167
        $region30: #{tpu_custom_call.1} parent=11 // pred_check_branch
          %270 = sbr.rel (%p268) target = $region32
        $region31: #{tpu_custom_call.1} parent=11 // pred_region
          _
        $region32: #{tpu_custom_call.1} parent=11 // pred_fallthru
          _
      $region12: #{tpu_custom_call.1} parent=5 // pred_fallthru
        _
      %p271 = scmp.lt.s32.totalorder %s24, 2
      // Predicated region
      $region33: #{tpu_custom_call.1} parent=5 // pred_check
        %p272 = pneg %p271
      $region34: #{tpu_custom_call.1} parent=5 // pred_check_branch
        %274 = sbr.rel (%p272) target = $region36
      $region35: #{tpu_custom_call.1} parent=5 // pred_region
        // Predicated region
        $region37: #{tpu_custom_call.1} parent=35 // pred_check
          %p275 = pneg %p56
        $region38: #{tpu_custom_call.1} parent=35 // pred_check_branch
          %277 = sbr.rel (%p275) target = $region40
        $region39: #{tpu_custom_call.1} parent=35 // pred_region
          %s278 = sand.u32 %s46, 1
          %s279 = scalar_lea.sflag [#allocation6], %s278
          %s280 = sand.u32 %s46, 1
          %s281 = smul.addr %s280, 12
          %s282 = scalar_lea.vmem [#allocation5], %s281
          %s284 = ssub.s32 192, 192
          %285 = vsyncadd %s279, %s284
          %s286 = smul.addr %s31, 3
          %s287 = smul.addr %s286, 64
          %s288 = scalar_lea.hbm %s0, %s287
          %s289 = sshll.u32 %s282, 4
          %s290 = int_to_ptr.vmem [resolvable:$true] %s289
          %295 = dma.hbm_to_vmem [thread:$0]  %s288, 192, %s290, %s279, 64, 64, 4
        $region40: #{tpu_custom_call.1} parent=35 // pred_fallthru
          _
      $region36: #{tpu_custom_call.1} parent=5 // pred_fallthru
        _
      %p296 = scmp.le.s32.totalorder 1, %s24
      %p297 = scmp.lt.s32.totalorder %s24, 3
      %p298 = pnand %p296, %p297
      %p299 = pneg %p298
      // Predicated region
      $region41: #{tpu_custom_call.1} parent=5 // pred_check
        _
      $region42: #{tpu_custom_call.1} parent=5 // pred_check_branch
        %301 = sbr.rel (%p298) target = $region44
      $region43: #{tpu_custom_call.1} parent=5 // pred_region
        %s302 = ssub.s32 %s24, 1
        %s303 = sand.u32 %s49, 1
        %s304 = scalar_lea.sflag [#allocation6], %s303
        %s305 = sand.u32 %s49, 1
        %s306 = smul.addr %s305, 12
        %s307 = scalar_lea.vmem [#allocation5], %s306
        // Predicated region
        $region45: #{tpu_custom_call.1} parent=43 // pred_check
          %p308 = pneg %p62
        $region46: #{tpu_custom_call.1} parent=43 // pred_check_branch
          %310 = sbr.rel (%p308) target = $region48
        $region47: #{tpu_custom_call.1} parent=43 // pred_region
          %311 = dma.done %s304, 192
        $region48: #{tpu_custom_call.1} parent=43 // pred_fallthru
          _
        // Predicated region
        $region49: #{tpu_custom_call.1} parent=43 // pred_check
          %p312 = pneg %p125
        $region50: #{tpu_custom_call.1} parent=43 // pred_check_branch
          %314 = sbr.rel (%p312) target = $region52
        $region51: #{tpu_custom_call.1} parent=43 // pred_region
          %315 = dma.done [#allocation9], 256
        $region52: #{tpu_custom_call.1} parent=43 // pred_fallthru
          _
        // Predicated region
        $region53: #{tpu_custom_call.1} parent=43 // pred_check
          %p316 = pneg %p146
        $region54: #{tpu_custom_call.1} parent=43 // pred_check_branch
          %318 = sbr.rel (%p316) target = $region56
        $region55: #{tpu_custom_call.1} parent=43 // pred_region
          %319 = dma.done [#allocation9], 256
        $region56: #{tpu_custom_call.1} parent=43 // pred_fallthru
          _
        %s320 = sand.u32 %s49, 1
        %s321 = scalar_lea.sflag [#allocation6], %s320
        %s322 = sand.u32 %s49, 1
        %s323 = smul.addr %s322, 12
        %s324 = scalar_lea.vmem [#allocation5], %s323
        %p325 = pneg %p62
        %p326 = pneg %p59
        %p327 = pneg %p83
        %p328 = pneg %p80
        %p329 = pneg %p104
        %p330 = pneg %p101
        %p331 = pneg %p125
        %p332 = pneg %p122
        %p333 = pneg %p146
        %p334 = pneg %p143
        %p335 = pneg %p167
        %p336 = pneg %p164
        %p337 = pneg %p195
        %p338 = pneg %p192
        %s339 = sand.u32 %s182, 1
        %s340 = scalar_lea.sflag [#allocation7], %s339
        %s341 = sand.u32 %s182, 1
        %s342 = smul.addr %s341, 12
        %s343 = scalar_lea.vmem [#allocation11], %s342
        %p344 = pneg %p221
        %p345 = pneg %p218
        %s346 = sand.u32 %s208, 1
        %s347 = scalar_lea.sflag [#allocation13], %s346
        %s348 = sand.u32 %s208, 1
        %s349 = scalar_lea.vmem [#allocation12], %s348
        %s350 = smul.u32 3, %s34
        %p352 = scmp.eq.s32.totalorder %s34, 0
        // Predicated region
        $region57: #{tpu_custom_call.1} parent=43 // pred_check
          %p353 = pneg %p352
        $region58: #{tpu_custom_call.1} parent=43 // pred_check_branch
          %355 = sbr.rel (%p353) target = $region60
        $region59: #{tpu_custom_call.1} parent=43 // pred_region
          %v356 = vld [vmem:[%s307] sm:$0xf]
          %v357 = vld [vmem:[%s307 + $0x4] sm:$0xf]
          %v358 = vld [vmem:[%s307 + $0x8] sm:$0xf]
          %v359 = vunpack.c.l.bf16 %v356
          %v360 = vunpack.c.l.bf16 %v357
          %v361 = vunpack.c.l.bf16 %v358
          %v362 = vld [vmem:[%s1] sm:$0x1]
          %v363 = vld [vmem:[%s2] sm:$0x1]
          %vm364 = vcmask 261120
          %v365 = vsel %vm364, %v359, 0.0
          %366 = vadd.xlane.f32.xlu0 %v365
          %v367 = vpop.xlane.xlu0 %366
          %v368 = vsel %vm364, %v360, 0.0
          %369 = vadd.xlane.f32.xlu0 %v368
          %v370 = vpop.xlane.xlu0 %369
          %v371 = vsel %vm364, %v361, 0.0
          %372 = vadd.xlane.f32.xlu0 %v371
          %v373 = vpop.xlane.xlu0 %372
          %v374 = vrcp.pop 32.0
          %v375 = vmul.f32 %v367, %v374
          %v376 = vmul.f32 %v370, %v374
          %v377 = vmul.f32 %v373, %v374
          %v378 = vsub.f32 %v359, %v375
          %v379 = vsub.f32 %v360, %v376
          %v380 = vsub.f32 %v361, %v377
          %v381 = vmul.f32 %v378, %v378
          %v382 = vmul.f32 %v379, %v379
          %v383 = vmul.f32 %v380, %v380
          %v384 = vsel %vm364, %v381, 0.0
          %385 = vadd.xlane.f32.xlu0 %v384
          %v386 = vpop.xlane.xlu0 %385
          %v387 = vsel %vm364, %v382, 0.0
          %388 = vadd.xlane.f32.xlu0 %v387
          %v389 = vpop.xlane.xlu0 %388
          %v390 = vsel %vm364, %v383, 0.0
          %391 = vadd.xlane.f32.xlu0 %v390
          %v392 = vpop.xlane.xlu0 %391
          %v393 = vmul.f32 %v386, %v374
          %v394 = vmul.f32 %v389, %v374
          %v395 = vmul.f32 %v392, %v374
          %v396 = vadd.f32 %v393, 1e-05
          %v397 = vadd.f32 %v394, 1e-05
          %v398 = vadd.f32 %v395, 1e-05
          %v399 = vrsqrt.pop %v396
          %v400 = vrsqrt.pop %v397
          %v401 = vrsqrt.pop %v398
          %v402 = vmul.f32 %v378, %v399
          %v403 = vmul.f32 %v379, %v400
          %v404 = vmul.f32 %v380, %v401
          %v406 = vlaneseq
          %v407 = vshrl.u32 %v406, 7
          %v408 = vsub.s32 0, %v407
          %v409 = vrot.slane %v362, %v408
          %v411 = vmul.f32 %v402, %v409
          %v412 = vmul.f32 %v403, %v409
          %v413 = vmul.f32 %v404, %v409
          %v415 = vlaneseq
          %v416 = vshrl.u32 %v415, 7
          %v417 = vsub.s32 0, %v416
          %v418 = vrot.slane %v363, %v417
          %v420 = vadd.f32 %v411, %v418
          %v421 = vadd.f32 %v412, %v418
          %v422 = vadd.f32 %v413, %v418
          %v423 = vpack.c.bf16 %v421, %v420
          %v424 = vpack.c.bf16 %v422, %v422
          %v425 = vld [vmem:[#allocation8] sm:$0xf]
          %v426 = vld [vmem:[#allocation8 + $0x4] sm:$0xf]
          %v427 = vld [vmem:[#allocation8 + $0x8] sm:$0xf]
          %v428 = vld [vmem:[#allocation8 + $0xc] sm:$0xf]
          %v433 = vunpack.c.l.b16 %v425
          %v434 = vunpack.c.l.b16 %v426
          %v435 = vunpack.c.l.b16 %v427
          %v436 = vunpack.c.l.b16 %v428
          %v437 = vpack.c.b16 %v434, %v433
          %v438 = vpack.c.b16 %v436, %v435
          %v442 = vsel %vm364, %v423, 0
          %v445 = vsel %vm364, %v424, 0
          %447 = vmatprep.subr.bf16.mxu0 0
          %448 = vmatpush1.bf16.msra.mxu0 0
          %449 = vmatprep.subr.bf16.mxu0 0
          %450 = vmatpush1.bf16.msra.mxu0 0
          %451 = vmatprep.subr.bf16.mxu0 0
          %452 = vmatpush1.bf16.msra.mxu0 0
          %453 = vmatprep.subr.bf16.mxu0 0
          %454 = vmatpush1.bf16.msra.mxu0 0
          %455 = vmatprep.subr.bf16.mxu0 0
          %456 = vmatpush1.bf16.msra.mxu0 0
          %457 = vmatprep.subr.bf16.mxu0 0
          %458 = vmatpush1.bf16.msra.mxu0 0
          %459 = vmatprep.subr.bf16.mxu0 0
          %460 = vmatpush1.bf16.msra.mxu0 %v438
          %461 = vmatprep.subr.bf16.mxu0 0
          %462 = vmatpush1.bf16.msra.mxu0 %v437
          %463 = vmatprep.subr.bf16.mxu0 0
          %464 = vmatpush2.bf16.msra.mxu0 0
          %465 = vmatprep.subr.bf16.mxu0 0
          %466 = vmatpush2.bf16.msra.mxu0 0
          %467 = vmatprep.subr.bf16.mxu0 0
          %468 = vmatpush2.bf16.msra.mxu0 0
          %469 = vmatprep.subr.bf16.mxu0 0
          %470 = vmatpush2.bf16.msra.mxu0 0
          %471 = vmatprep.subr.bf16.mxu0 0
          %472 = vmatpush2.bf16.msra.mxu0 0
          %473 = vmatprep.subr.bf16.mxu0 0
          %474 = vmatpush2.bf16.msra.mxu0 0
          %475 = vmatprep.subr.bf16.mxu0 0
          %476 = vmatpush2.bf16.msra.mxu0 0
          %477 = vmatprep.subr.bf16.mxu0 0
          %478 = vmatpush2.bf16.msra.mxu0 0
          %479 = vmatprep.mubr.bf16.mxu0 0
          %480 = vmatmul.mubr.bf16.gmra.mxu0 %v442
          %v481 = vpop.f32.mrf.mxu0
          %v482 = vadd.f32 0.0, %v481
          %v483 = vpop.f32.mrf.mxu0
          %v484 = vpop.f32.mrf.mxu0
          %v485 = vadd.f32 0.0, %v484
          %v486 = vpop.f32.mrf.mxu0
          %487 = vmatprep.mubr.bf16.mxu0 0
          %488 = vmatmul.mubr.bf16.gmra.mxu0 %v445
          %v489 = vpop.f32.mrf.mxu0
          %v490 = vadd.f32 0.0, %v489
          %v491 = vpop.f32.mrf.mxu0
          %v492 = vpop.f32.mrf.mxu0
          %v493 = vpop.f32.mrf.mxu0
          %494 = vdwg.mxu0
          %v495 = vpack.c.bf16 %v485, %v482
          %v496 = vpack.c.bf16 %v490, %v490
          %v499 = vunpack.c.l.b16 %v495
          %v500 = vunpack.c.h.b16 %v495
          %v501 = vunpack.c.l.b16 %v496
          %v502 = vpack.c.b16 %v499, %v499
          %v503 = vpack.c.b16 %v500, %v500
          %v504 = vpack.c.b16 %v501, %v501
          %vm508 = vcmask 257024
          %509 = vst.msk [vmem:[#allocation2] sm:$0xf] %vm508, %v502
          %510 = vst.msk [vmem:[#allocation2 + $0x4] sm:$0xf] %vm508, %v503
          %511 = vst.msk [vmem:[#allocation2 + $0x8] sm:$0xf] %vm508, %v504
          %512 = vrot.lane.b32.xlu0 %v502, 96
          %v513 = vpop.permute.xlu0 %512
          %514 = vrot.lane.b32.xlu0 %v503, 96
          %v515 = vpop.permute.xlu0 %514
          %516 = vrot.lane.b32.xlu0 %v504, 96
          %v517 = vpop.permute.xlu0 %516
          %521 = vst.msk [vmem:[#allocation3] sm:$0xf] %vm508, %v513
          %522 = vst.msk [vmem:[#allocation3 + $0x4] sm:$0xf] %vm508, %v515
          %523 = vst.msk [vmem:[#allocation3 + $0x8] sm:$0xf] %vm508, %v517
          %524 = vrot.lane.b32.xlu0 %v502, 64
          %v525 = vpop.permute.xlu0 %524
          %526 = vrot.lane.b32.xlu0 %v503, 64
          %v527 = vpop.permute.xlu0 %526
          %528 = vrot.lane.b32.xlu0 %v504, 64
          %v529 = vpop.permute.xlu0 %528
          %533 = vst.msk [vmem:[#allocation4] sm:$0xf] %vm508, %v525
          %534 = vst.msk [vmem:[#allocation4 + $0x4] sm:$0xf] %vm508, %v527
          %535 = vst.msk [vmem:[#allocation4 + $0x8] sm:$0xf] %vm508, %v529
          %v536 = vlaneseq
          %v537 = vand.u32 %v536, 127
          %vm538 = vcmp.lt.s32.totalorder %v537, 17
          %539 = vrot.lane.b32.xlu0 %v495, 96
          %v540 = vpop.permute.xlu0 %539
          %541 = vrot.lane.b32.xlu0 %v496, 96
          %v542 = vpop.permute.xlu0 %541
          %vm543 = vcmask 64512
          %v545 = vsel %vm543, %v495, 0
          %v548 = vsel %vm543, %v540, 0
          %v551 = vsel %vm543, %v542, 0
          %553 = vmatprep.subr.bf16.mxu0 0
          %554 = vmatpush1.bf16.xpose.msra.mxu0 0
          %555 = vmatprep.subr.bf16.mxu0 0
          %556 = vmatpush1.bf16.xpose.msra.mxu0 0
          %557 = vmatprep.subr.bf16.mxu0 0
          %558 = vmatpush1.bf16.xpose.msra.mxu0 0
          %559 = vmatprep.subr.bf16.mxu0 0
          %560 = vmatpush1.bf16.xpose.msra.mxu0 0
          %561 = vmatprep.subr.bf16.mxu0 0
          %562 = vmatpush1.bf16.xpose.msra.mxu0 0
          %563 = vmatprep.subr.bf16.mxu0 0
          %564 = vmatpush1.bf16.xpose.msra.mxu0 0
          %565 = vmatprep.subr.bf16.mxu0 0
          %566 = vmatpush1.bf16.xpose.msra.mxu0 %v551
          %567 = vmatprep.subr.bf16.mxu0 0
          %568 = vmatpush1.bf16.xpose.msra.mxu0 %v548
          %569 = vmatprep.subr.bf16.mxu0 0
          %570 = vmatpush2.bf16.xpose.msra.mxu0 0
          %571 = vmatprep.subr.bf16.mxu0 0
          %572 = vmatpush2.bf16.xpose.msra.mxu0 0
          %573 = vmatprep.subr.bf16.mxu0 0
          %574 = vmatpush2.bf16.xpose.msra.mxu0 0
          %575 = vmatprep.subr.bf16.mxu0 0
          %576 = vmatpush2.bf16.xpose.msra.mxu0 0
          %577 = vmatprep.subr.bf16.mxu0 0
          %578 = vmatpush2.bf16.xpose.msra.mxu0 0
          %579 = vmatprep.subr.bf16.mxu0 0
          %580 = vmatpush2.bf16.xpose.msra.mxu0 0
          %581 = vmatprep.subr.bf16.mxu0 0
          %582 = vmatpush2.bf16.xpose.msra.mxu0 0
          %583 = vmatprep.subr.bf16.mxu0 0
          %584 = vmatpush2.bf16.xpose.msra.mxu0 0
          %585 = vmatprep.mubr.bf16.mxu0 0
          %586 = vmatmul.mubr.bf16.gmra.mxu0 %v545
          %v587 = vpop.f32.mrf.mxu0
          %v588 = vadd.f32 0.0, %v587
          %v589 = vpop.f32.mrf.mxu0
          %v590 = vpop.f32.mrf.mxu0
          %v591 = vpop.f32.mrf.mxu0
          %592 = vdwg.mxu0
          %v593 = vsel %vm538, %v588, -1e+30
          %vm594 = vcmask 188416
          %v595 = vsel %vm594, %v593, -inf
          %596 = vmax.xlane.f32.xlu0 %v595
          %v597 = vpop.xlane.xlu0 %596
          %v598 = vsub.f32 %v593, %v597
          %v599 = vmul.f32 %v598, 1.442695
          %v600 = vpow.pop %v599
          %v601 = vsel %vm594, %v600, 0.0
          %602 = vadd.xlane.f32.xlu0 %v601
          %v603 = vpop.xlane.xlu0 %602
          %v604 = vrcp.pop %v603
          %v605 = vmul.f32 %v600, %v604
          %v606 = vadd.f32 %v605, 0.0
          %607 = vrot.lane.b32.xlu0 %v495, 120
          %v608 = vpop.permute.xlu0 %607
          %609 = vrot.lane.b32.xlu0 %v495, 88
          %v610 = vpop.permute.xlu0 %609
          %611 = vrot.lane.b32.xlu0 %v496, 88
          %v612 = vpop.permute.xlu0 %611
          %v614 = vsel %vm543, %v608, 0
          %v617 = vsel %vm543, %v610, 0
          %v620 = vsel %vm543, %v612, 0
          %622 = vmatprep.subr.bf16.mxu0 0
          %623 = vmatpush1.bf16.xpose.msra.mxu0 0
          %624 = vmatprep.subr.bf16.mxu0 0
          %625 = vmatpush1.bf16.xpose.msra.mxu0 0
          %626 = vmatprep.subr.bf16.mxu0 0
          %627 = vmatpush1.bf16.xpose.msra.mxu0 0
          %628 = vmatprep.subr.bf16.mxu0 0
          %629 = vmatpush1.bf16.xpose.msra.mxu0 0
          %630 = vmatprep.subr.bf16.mxu0 0
          %631 = vmatpush1.bf16.xpose.msra.mxu0 0
          %632 = vmatprep.subr.bf16.mxu0 0
          %633 = vmatpush1.bf16.xpose.msra.mxu0 0
          %634 = vmatprep.subr.bf16.mxu0 0
          %635 = vmatpush1.bf16.xpose.msra.mxu0 %v620
          %636 = vmatprep.subr.bf16.mxu0 0
          %637 = vmatpush1.bf16.xpose.msra.mxu0 %v617
          %638 = vmatprep.subr.bf16.mxu0 0
          %639 = vmatpush2.bf16.xpose.msra.mxu0 0
          %640 = vmatprep.subr.bf16.mxu0 0
          %641 = vmatpush2.bf16.xpose.msra.mxu0 0
          %642 = vmatprep.subr.bf16.mxu0 0
          %643 = vmatpush2.bf16.xpose.msra.mxu0 0
          %644 = vmatprep.subr.bf16.mxu0 0
          %645 = vmatpush2.bf16.xpose.msra.mxu0 0
          %646 = vmatprep.subr.bf16.mxu0 0
          %647 = vmatpush2.bf16.xpose.msra.mxu0 0
          %648 = vmatprep.subr.bf16.mxu0 0
          %649 = vmatpush2.bf16.xpose.msra.mxu0 0
          %650 = vmatprep.subr.bf16.mxu0 0
          %651 = vmatpush2.bf16.xpose.msra.mxu0 0
          %652 = vmatprep.subr.bf16.mxu0 0
          %653 = vmatpush2.bf16.xpose.msra.mxu0 0
          %654 = vmatprep.mubr.bf16.mxu0 0
          %655 = vmatmul.mubr.bf16.gmra.mxu0 %v614
          %v656 = vpop.f32.mrf.mxu0
          %v657 = vadd.f32 0.0, %v656
          %v658 = vpop.f32.mrf.mxu0
          %v659 = vpop.f32.mrf.mxu0
          %v660 = vpop.f32.mrf.mxu0
          %661 = vdwg.mxu0
          %v662 = vsel %vm538, %v657, -1e+30
          %v663 = vsel %vm594, %v662, -inf
          %664 = vmax.xlane.f32.xlu0 %v663
          %v665 = vpop.xlane.xlu0 %664
          %v666 = vsub.f32 %v662, %v665
          %v667 = vmul.f32 %v666, 1.442695
          %v668 = vpow.pop %v667
          %v669 = vsel %vm594, %v668, 0.0
          %670 = vadd.xlane.f32.xlu0 %v669
          %v671 = vpop.xlane.xlu0 %670
          %v672 = vrcp.pop %v671
          %v673 = vmul.f32 %v668, %v672
          %v674 = vadd.f32 %v606, %v673
          %675 = vrot.lane.b32.xlu0 %v495, 112
          %v676 = vpop.permute.xlu0 %675
          %677 = vrot.lane.b32.xlu0 %v495, 80
          %v678 = vpop.permute.xlu0 %677
          %679 = vrot.lane.b32.xlu0 %v496, 80
          %v680 = vpop.permute.xlu0 %679
          %v682 = vsel %vm543, %v676, 0
          %v685 = vsel %vm543, %v678, 0
          %v688 = vsel %vm543, %v680, 0
          %690 = vmatprep.subr.bf16.mxu0 0
          %691 = vmatpush1.bf16.xpose.msra.mxu0 0
          %692 = vmatprep.subr.bf16.mxu0 0
          %693 = vmatpush1.bf16.xpose.msra.mxu0 0
          %694 = vmatprep.subr.bf16.mxu0 0
          %695 = vmatpush1.bf16.xpose.msra.mxu0 0
          %696 = vmatprep.subr.bf16.mxu0 0
          %697 = vmatpush1.bf16.xpose.msra.mxu0 0
          %698 = vmatprep.subr.bf16.mxu0 0
          %699 = vmatpush1.bf16.xpose.msra.mxu0 0
          %700 = vmatprep.subr.bf16.mxu0 0
          %701 = vmatpush1.bf16.xpose.msra.mxu0 0
          %702 = vmatprep.subr.bf16.mxu0 0
          %703 = vmatpush1.bf16.xpose.msra.mxu0 %v688
          %704 = vmatprep.subr.bf16.mxu0 0
          %705 = vmatpush1.bf16.xpose.msra.mxu0 %v685
          %706 = vmatprep.subr.bf16.mxu0 0
          %707 = vmatpush2.bf16.xpose.msra.mxu0 0
          %708 = vmatprep.subr.bf16.mxu0 0
          %709 = vmatpush2.bf16.xpose.msra.mxu0 0
          %710 = vmatprep.subr.bf16.mxu0 0
          %711 = vmatpush2.bf16.xpose.msra.mxu0 0
          %712 = vmatprep.subr.bf16.mxu0 0
          %713 = vmatpush2.bf16.xpose.msra.mxu0 0
          %714 = vmatprep.subr.bf16.mxu0 0
          %715 = vmatpush2.bf16.xpose.msra.mxu0 0
          %716 = vmatprep.subr.bf16.mxu0 0
          %717 = vmatpush2.bf16.xpose.msra.mxu0 0
          %718 = vmatprep.subr.bf16.mxu0 0
          %719 = vmatpush2.bf16.xpose.msra.mxu0 0
          %720 = vmatprep.subr.bf16.mxu0 0
          %721 = vmatpush2.bf16.xpose.msra.mxu0 0
          %722 = vmatprep.mubr.bf16.mxu0 0
          %723 = vmatmul.mubr.bf16.gmra.mxu0 %v682
          %v724 = vpop.f32.mrf.mxu0
          %v725 = vadd.f32 0.0, %v724
          %v726 = vpop.f32.mrf.mxu0
          %v727 = vpop.f32.mrf.mxu0
          %v728 = vpop.f32.mrf.mxu0
          %729 = vdwg.mxu0
          %v730 = vsel %vm538, %v725, -1e+30
          %v731 = vsel %vm594, %v730, -inf
          %732 = vmax.xlane.f32.xlu0 %v731
          %v733 = vpop.xlane.xlu0 %732
          %v734 = vsub.f32 %v730, %v733
          %v735 = vmul.f32 %v734, 1.442695
          %v736 = vpow.pop %v735
          %v737 = vsel %vm594, %v736, 0.0
          %738 = vadd.xlane.f32.xlu0 %v737
          %v739 = vpop.xlane.xlu0 %738
          %v740 = vrcp.pop %v739
          %v741 = vmul.f32 %v736, %v740
          %v742 = vadd.f32 %v674, %v741
          %743 = vrot.lane.b32.xlu0 %v495, 104
          %v744 = vpop.permute.xlu0 %743
          %745 = vrot.lane.b32.xlu0 %v495, 72
          %v746 = vpop.permute.xlu0 %745
          %747 = vrot.lane.b32.xlu0 %v496, 72
          %v748 = vpop.permute.xlu0 %747
          %v750 = vsel %vm543, %v744, 0
          %v753 = vsel %vm543, %v746, 0
          %v756 = vsel %vm543, %v748, 0
          %758 = vmatprep.subr.bf16.mxu0 0
          %759 = vmatpush1.bf16.xpose.msra.mxu0 0
          %760 = vmatprep.subr.bf16.mxu0 0
          %761 = vmatpush1.bf16.xpose.msra.mxu0 0
          %762 = vmatprep.subr.bf16.mxu0 0
          %763 = vmatpush1.bf16.xpose.msra.mxu0 0
          %764 = vmatprep.subr.bf16.mxu0 0
          %765 = vmatpush1.bf16.xpose.msra.mxu0 0
          %766 = vmatprep.subr.bf16.mxu0 0
          %767 = vmatpush1.bf16.xpose.msra.mxu0 0
          %768 = vmatprep.subr.bf16.mxu0 0
          %769 = vmatpush1.bf16.xpose.msra.mxu0 0
          %770 = vmatprep.subr.bf16.mxu0 0
          %771 = vmatpush1.bf16.xpose.msra.mxu0 %v756
          %772 = vmatprep.subr.bf16.mxu0 0
          %773 = vmatpush1.bf16.xpose.msra.mxu0 %v753
          %774 = vmatprep.subr.bf16.mxu0 0
          %775 = vmatpush2.bf16.xpose.msra.mxu0 0
          %776 = vmatprep.subr.bf16.mxu0 0
          %777 = vmatpush2.bf16.xpose.msra.mxu0 0
          %778 = vmatprep.subr.bf16.mxu0 0
          %779 = vmatpush2.bf16.xpose.msra.mxu0 0
          %780 = vmatprep.subr.bf16.mxu0 0
          %781 = vmatpush2.bf16.xpose.msra.mxu0 0
          %782 = vmatprep.subr.bf16.mxu0 0
          %783 = vmatpush2.bf16.xpose.msra.mxu0 0
          %784 = vmatprep.subr.bf16.mxu0 0
          %785 = vmatpush2.bf16.xpose.msra.mxu0 0
          %786 = vmatprep.subr.bf16.mxu0 0
          %787 = vmatpush2.bf16.xpose.msra.mxu0 0
          %788 = vmatprep.subr.bf16.mxu0 0
          %789 = vmatpush2.bf16.xpose.msra.mxu0 0
          %790 = vmatprep.mubr.bf16.mxu0 0
          %791 = vmatmul.mubr.bf16.gmra.mxu0 %v750
          %v792 = vpop.f32.mrf.mxu0
          %v793 = vadd.f32 0.0, %v792
          %v794 = vpop.f32.mrf.mxu0
          %v795 = vpop.f32.mrf.mxu0
          %v796 = vpop.f32.mrf.mxu0
          %797 = vdwg.mxu0
          %v798 = vsel %vm538, %v793, -1e+30
          %v799 = vsel %vm594, %v798, -inf
          %800 = vmax.xlane.f32.xlu0 %v799
          %v801 = vpop.xlane.xlu0 %800
          %v802 = vsub.f32 %v798, %v801
          %v803 = vmul.f32 %v802, 1.442695
          %v804 = vpow.pop %v803
          %v805 = vsel %vm594, %v804, 0.0
          %806 = vadd.xlane.f32.xlu0 %v805
          %v807 = vpop.xlane.xlu0 %806
          %v808 = vrcp.pop %v807
          %v809 = vmul.f32 %v804, %v808
          %v810 = vadd.f32 %v742, %v809
          %v811 = vmul.f32 %v810, 0.25
          %812 = vst.msk [vmem:[%s349] sm:$0x1] %vm594, %v811
        $region60: #{tpu_custom_call.1} parent=43 // pred_fallthru
          _
        %s813 = smul.u32 %s34, 24
        %s814 = sshra.s32 %s813, 3
        %s815 = sand.u32 %s813, 7
        %s816 = smul.addr %s814, 4
        %s817 = scalar_lea.vmem [#allocation2], %s816
        %v818 = vld [vmem:[%s817] sm:$0xf]
        %v819 = vld [vmem:[%s817 + $0x4] sm:$0xf]
        %v820 = vld [vmem:[%s817 + $0x8] sm:$0xf]
        %v821 = vld [vmem:[#allocation3] sm:$0xf]
        %v822 = vld [vmem:[#allocation3 + $0x4] sm:$0xf]
        %v823 = vld [vmem:[#allocation3 + $0x8] sm:$0xf]
        %v824 = vld [vmem:[#allocation4] sm:$0xf]
        %v825 = vld [vmem:[#allocation4 + $0x4] sm:$0xf]
        %v826 = vld [vmem:[#allocation4 + $0x8] sm:$0xf]
        %v827 = vlaneseq
        %v828 = vand.u32 %v827, 127
        %vm829 = vcmp.lt.s32.totalorder %v828, 17
        %v833 = vunpack.c.l.b16 %v818
        %v834 = vunpack.c.l.b16 %v819
        %v835 = vunpack.c.l.b16 %v820
        %v836 = vpack.c.b16 %v834, %v833
        %v837 = vpack.c.b16 %v835, %v835
        %v841 = vunpack.c.l.b16 %v821
        %v842 = vunpack.c.l.b16 %v822
        %v843 = vunpack.c.l.b16 %v823
        %v844 = vpack.c.b16 %v842, %v841
        %v845 = vpack.c.b16 %v843, %v843
        %vm846 = vcmask 64512
        %v848 = vsel %vm846, %v836, 0
        %v851 = vsel %vm846, %v837, 0
        %v854 = vsel %vm846, %v844, 0
        %v857 = vsel %vm846, %v845, 0
        %859 = vmatprep.subr.bf16.mxu0 0
        %860 = vmatpush1.bf16.xpose.msra.mxu0 0
        %861 = vmatprep.subr.bf16.mxu0 0
        %862 = vmatpush1.bf16.xpose.msra.mxu0 0
        %863 = vmatprep.subr.bf16.mxu0 0
        %864 = vmatpush1.bf16.xpose.msra.mxu0 0
        %865 = vmatprep.subr.bf16.mxu0 0
        %866 = vmatpush1.bf16.xpose.msra.mxu0 0
        %867 = vmatprep.subr.bf16.mxu0 0
        %868 = vmatpush1.bf16.xpose.msra.mxu0 0
        %869 = vmatprep.subr.bf16.mxu0 0
        %870 = vmatpush1.bf16.xpose.msra.mxu0 0
        %871 = vmatprep.subr.bf16.mxu0 0
        %872 = vmatpush1.bf16.xpose.msra.mxu0 %v857
        %873 = vmatprep.subr.bf16.mxu0 0
        %874 = vmatpush1.bf16.xpose.msra.mxu0 %v854
        %875 = vmatprep.subr.bf16.mxu0 0
        %876 = vmatpush2.bf16.xpose.msra.mxu0 0
        %877 = vmatprep.subr.bf16.mxu0 0
        %878 = vmatpush2.bf16.xpose.msra.mxu0 0
        %879 = vmatprep.subr.bf16.mxu0 0
        %880 = vmatpush2.bf16.xpose.msra.mxu0 0
        %881 = vmatprep.subr.bf16.mxu0 0
        %882 = vmatpush2.bf16.xpose.msra.mxu0 0
        %883 = vmatprep.subr.bf16.mxu0 0
        %884 = vmatpush2.bf16.xpose.msra.mxu0 0
        %885 = vmatprep.subr.bf16.mxu0 0
        %886 = vmatpush2.bf16.xpose.msra.mxu0 0
        %887 = vmatprep.subr.bf16.mxu0 0
        %888 = vmatpush2.bf16.xpose.msra.mxu0 0
        %889 = vmatprep.subr.bf16.mxu0 0
        %890 = vmatpush2.bf16.xpose.msra.mxu0 0
        %891 = vmatprep.mubr.bf16.mxu0 0
        %892 = vmatmul.mubr.bf16.gmra.mxu0 %v848
        %v893 = vpop.f32.mrf.mxu0
        %v894 = vadd.f32 0.0, %v893
        %v895 = vpop.f32.mrf.mxu0
        %v896 = vpop.f32.mrf.mxu0
        %v897 = vadd.f32 0.0, %v896
        %v898 = vpop.f32.mrf.mxu0
        %899 = vmatprep.mubr.bf16.mxu0 0
        %900 = vmatmul.mubr.bf16.gmra.mxu0 %v851
        %v901 = vpop.f32.mrf.mxu0
        %v902 = vadd.f32 0.0, %v901
        %v903 = vpop.f32.mrf.mxu0
        %v904 = vpop.f32.mrf.mxu0
        %v905 = vpop.f32.mrf.mxu0
        %906 = vdwg.mxu0
        %v907 = vsel %vm829, 1, 0
        %vm908 = vcmp.eq.s32.totalorder %v907, 1
        %v909 = vsel %vm908, %v894, -1e+30
        %v910 = vsel %vm908, %v897, -1e+30
        %v911 = vsel %vm908, %v902, -1e+30
        %vm912 = vcmask 195584
        %v913 = vsel %vm912, %v909, -inf
        %914 = vmax.xlane.f32.xlu0 %v913
        %v915 = vpop.xlane.xlu0 %914
        %v916 = vsel %vm912, %v910, -inf
        %917 = vmax.xlane.f32.xlu0 %v916
        %v918 = vpop.xlane.xlu0 %917
        %v919 = vsel %vm912, %v911, -inf
        %920 = vmax.xlane.f32.xlu0 %v919
        %v921 = vpop.xlane.xlu0 %920
        %v922 = vmax.f32 %v915, -1e+30
        %v923 = vmax.f32 %v918, -1e+30
        %v924 = vmax.f32 %v921, -1e+30
        %v925 = vsub.f32 -1e+30, %v922
        %v926 = vsub.f32 -1e+30, %v923
        %v927 = vsub.f32 -1e+30, %v924
        %v928 = vmul.f32 %v925, 1.442695
        %v929 = vpow.pop %v928
        %v930 = vmul.f32 %v926, 1.442695
        %v931 = vpow.pop %v930
        %v932 = vmul.f32 %v927, 1.442695
        %v933 = vpow.pop %v932
        %v934 = vsub.f32 %v909, %v922
        %v935 = vsub.f32 %v910, %v923
        %v936 = vsub.f32 %v911, %v924
        %v937 = vpack.c.bf16 %v935, %v934
        %v938 = vpack.c.bf16 %v936, %v936
        %v940 = vmul.bf16 %v937, 1069105081
        %v941 = vpow.bf16.pop %v940
        %v943 = vmul.bf16 %v938, 1069105081
        %v944 = vpow.bf16.pop %v943
        %v945 = vmul.f32 %v929, 0.0
        %v946 = vmul.f32 %v931, 0.0
        %v947 = vmul.f32 %v933, 0.0
        %v948 = vunpack.c.l.bf16 %v941
        %v949 = vunpack.c.h.bf16 %v941
        %v950 = vunpack.c.l.bf16 %v944
        %v951 = vsel %vm912, %v948, 0.0
        %952 = vadd.xlane.f32.xlu0 %v951
        %v953 = vpop.xlane.xlu0 %952
        %v954 = vsel %vm912, %v949, 0.0
        %955 = vadd.xlane.f32.xlu0 %v954
        %v956 = vpop.xlane.xlu0 %955
        %v957 = vsel %vm912, %v950, 0.0
        %958 = vadd.xlane.f32.xlu0 %v957
        %v959 = vpop.xlane.xlu0 %958
        %v960 = vadd.f32 %v945, %v953
        %v961 = vadd.f32 %v946, %v956
        %v962 = vadd.f32 %v947, %v959
        %v966 = vunpack.c.l.b16 %v824
        %v967 = vunpack.c.l.b16 %v825
        %v968 = vunpack.c.l.b16 %v826
        %v969 = vpack.c.b16 %v967, %v966
        %v970 = vpack.c.b16 %v968, %v968
        %v973 = vsel %vm912, %v941, 0
        %v976 = vsel %vm912, %v944, 0
        %vm978 = vcmask 1043456
        %v980 = vsel %vm978, %v970, 0
        %982 = vmatprep.subr.bf16.mxu0 0
        %983 = vmatpush1.bf16.msra.mxu0 0
        %984 = vmatprep.subr.bf16.mxu0 0
        %985 = vmatpush1.bf16.msra.mxu0 0
        %986 = vmatprep.subr.bf16.mxu0 0
        %987 = vmatpush1.bf16.msra.mxu0 0
        %988 = vmatprep.subr.bf16.mxu0 0
        %989 = vmatpush1.bf16.msra.mxu0 0
        %990 = vmatprep.subr.bf16.mxu0 0
        %991 = vmatpush1.bf16.msra.mxu0 0
        %992 = vmatprep.subr.bf16.mxu0 0
        %993 = vmatpush1.bf16.msra.mxu0 0
        %994 = vmatprep.subr.bf16.mxu0 0
        %995 = vmatpush1.bf16.msra.mxu0 %v980
        %996 = vmatprep.subr.bf16.mxu0 0
        %997 = vmatpush1.bf16.msra.mxu0 %v969
        %998 = vmatprep.subr.bf16.mxu0 0
        %999 = vmatpush2.bf16.msra.mxu0 0
        %1000 = vmatprep.subr.bf16.mxu0 0
        %1001 = vmatpush2.bf16.msra.mxu0 0
        %1002 = vmatprep.subr.bf16.mxu0 0
        %1003 = vmatpush2.bf16.msra.mxu0 0
        %1004 = vmatprep.subr.bf16.mxu0 0
        %1005 = vmatpush2.bf16.msra.mxu0 0
        %1006 = vmatprep.subr.bf16.mxu0 0
        %1007 = vmatpush2.bf16.msra.mxu0 0
        %1008 = vmatprep.subr.bf16.mxu0 0
        %1009 = vmatpush2.bf16.msra.mxu0 0
        %1010 = vmatprep.subr.bf16.mxu0 0
        %1011 = vmatpush2.bf16.msra.mxu0 0
        %1012 = vmatprep.subr.bf16.mxu0 0
        %1013 = vmatpush2.bf16.msra.mxu0 0
        %1014 = vmatprep.mubr.bf16.mxu0 0
        %1015 = vmatmul.mubr.bf16.gmra.mxu0 %v973
        %v1016 = vpop.f32.mrf.mxu0
        %v1017 = vadd.f32 0.0, %v1016
        %v1018 = vpop.f32.mrf.mxu0
        %v1019 = vpop.f32.mrf.mxu0
        %v1020 = vadd.f32 0.0, %v1019
        %v1021 = vpop.f32.mrf.mxu0
        %1022 = vmatprep.mubr.bf16.mxu0 0
        %1023 = vmatmul.mubr.bf16.gmra.mxu0 %v976
        %v1024 = vpop.f32.mrf.mxu0
        %v1025 = vadd.f32 0.0, %v1024
        %v1026 = vpop.f32.mrf.mxu0
        %v1027 = vpop.f32.mrf.mxu0
        %v1028 = vpop.f32.mrf.mxu0
        %1029 = vdwg.mxu0
        %v1030 = vadd.f32 %v945, %v1017
        %v1031 = vadd.f32 %v946, %v1020
        %v1032 = vadd.f32 %v947, %v1025
        %1033 = vrot.lane.b32.xlu0 %v836, 120
        %v1034 = vpop.permute.xlu0 %1033
        %1035 = vrot.lane.b32.xlu0 %v837, 120
        %v1036 = vpop.permute.xlu0 %1035
        %1037 = vrot.lane.b32.xlu0 %v844, 120
        %v1038 = vpop.permute.xlu0 %1037
        %1039 = vrot.lane.b32.xlu0 %v845, 120
        %v1040 = vpop.permute.xlu0 %1039
        %v1042 = vsel %vm846, %v1034, 0
        %v1045 = vsel %vm846, %v1036, 0
        %v1048 = vsel %vm846, %v1038, 0
        %v1051 = vsel %vm846, %v1040, 0
        %1053 = vmatprep.subr.bf16.mxu0 0
        %1054 = vmatpush1.bf16.xpose.msra.mxu0 0
        %1055 = vmatprep.subr.bf16.mxu0 0
        %1056 = vmatpush1.bf16.xpose.msra.mxu0 0
        %1057 = vmatprep.subr.bf16.mxu0 0
        %1058 = vmatpush1.bf16.xpose.msra.mxu0 0
        %1059 = vmatprep.subr.bf16.mxu0 0
        %1060 = vmatpush1.bf16.xpose.msra.mxu0 0
        %1061 = vmatprep.subr.bf16.mxu0 0
        %1062 = vmatpush1.bf16.xpose.msra.mxu0 0
        %1063 = vmatprep.subr.bf16.mxu0 0
        %1064 = vmatpush1.bf16.xpose.msra.mxu0 0
        %1065 = vmatprep.subr.bf16.mxu0 0
        %1066 = vmatpush1.bf16.xpose.msra.mxu0 %v1051
        %1067 = vmatprep.subr.bf16.mxu0 0
        %1068 = vmatpush1.bf16.xpose.msra.mxu0 %v1048
        %1069 = vmatprep.subr.bf16.mxu0 0
        %1070 = vmatpush2.bf16.xpose.msra.mxu0 0
        %1071 = vmatprep.subr.bf16.mxu0 0
        %1072 = vmatpush2.bf16.xpose.msra.mxu0 0
        %1073 = vmatprep.subr.bf16.mxu0 0
        %1074 = vmatpush2.bf16.xpose.msra.mxu0 0
        %1075 = vmatprep.subr.bf16.mxu0 0
        %1076 = vmatpush2.bf16.xpose.msra.mxu0 0
        %1077 = vmatprep.subr.bf16.mxu0 0
        %1078 = vmatpush2.bf16.xpose.msra.mxu0 0
        %1079 = vmatprep.subr.bf16.mxu0 0
        %1080 = vmatpush2.bf16.xpose.msra.mxu0 0
        %1081 = vmatprep.subr.bf16.mxu0 0
        %1082 = vmatpush2.bf16.xpose.msra.mxu0 0
        %1083 = vmatprep.subr.bf16.mxu0 0
        %1084 = vmatpush2.bf16.xpose.msra.mxu0 0
        %1085 = vmatprep.mubr.bf16.mxu0 0
        %1086 = vmatmul.mubr.bf16.gmra.mxu0 %v1042
        %v1087 = vpop.f32.mrf.mxu0
        %v1088 = vadd.f32 0.0, %v1087
        %v1089 = vpop.f32.mrf.mxu0
        %v1090 = vpop.f32.mrf.mxu0
        %v1091 = vadd.f32 0.0, %v1090
        %v1092 = vpop.f32.mrf.mxu0
        %1093 = vmatprep.mubr.bf16.mxu0 0
        %1094 = vmatmul.mubr.bf16.gmra.mxu0 %v1045
        %v1095 = vpop.f32.mrf.mxu0
        %v1096 = vadd.f32 0.0, %v1095
        %v1097 = vpop.f32.mrf.mxu0
        %v1098 = vpop.f32.mrf.mxu0
        %v1099 = vpop.f32.mrf.mxu0
        %1100 = vdwg.mxu0
        %v1101 = vsel %vm908, %v1088, -1e+30
        %v1102 = vsel %vm908, %v1091, -1e+30
        %v1103 = vsel %vm908, %v1096, -1e+30
        %v1104 = vsel %vm912, %v1101, -inf
        %1105 = vmax.xlane.f32.xlu0 %v1104
        %v1106 = vpop.xlane.xlu0 %1105
        %v1107 = vsel %vm912, %v1102, -inf
        %1108 = vmax.xlane.f32.xlu0 %v1107
        %v1109 = vpop.xlane.xlu0 %1108
        %v1110 = vsel %vm912, %v1103, -inf
        %1111 = vmax.xlane.f32.xlu0 %v1110
        %v1112 = vpop.xlane.xlu0 %1111
        %v1113 = vmax.f32 %v1106, -1e+30
        %v1114 = vmax.f32 %v1109, -1e+30
        %v1115 = vmax.f32 %v1112, -1e+30
        %v1116 = vsub.f32 -1e+30, %v1113
        %v1117 = vsub.f32 -1e+30, %v1114
        %v1118 = vsub.f32 -1e+30, %v1115
        %v1119 = vmul.f32 %v1116, 1.442695
        %v1120 = vpow.pop %v1119
        %v1121 = vmul.f32 %v1117, 1.442695
        %v1122 = vpow.pop %v1121
        %v1123 = vmul.f32 %v1118, 1.442695
        %v1124 = vpow.pop %v1123
        %v1125 = vsub.f32 %v1101, %v1113
        %v1126 = vsub.f32 %v1102, %v1114
        %v1127 = vsub.f32 %v1103, %v1115
        %v1128 = vpack.c.bf16 %v1126, %v1125
        %v1129 = vpack.c.bf16 %v1127, %v1127
        %v1131 = vmul.bf16 %v1128, 1069105081
        %v1132 = vpow.bf16.pop %v1131
        %v1134 = vmul.bf16 %v1129, 1069105081
        %v1135 = vpow.bf16.pop %v1134
        %v1136 = vmul.f32 %v1120, 0.0
        %v1137 = vmul.f32 %v1122, 0.0
        %v1138 = vmul.f32 %v1124, 0.0
        %v1139 = vunpack.c.l.bf16 %v1132
        %v1140 = vunpack.c.h.bf16 %v1132
        %v1141 = vunpack.c.l.bf16 %v1135
        %v1142 = vsel %vm912, %v1139, 0.0
        %1143 = vadd.xlane.f32.xlu0 %v1142
        %v1144 = vpop.xlane.xlu0 %1143
        %v1145 = vsel %vm912, %v1140, 0.0
        %1146 = vadd.xlane.f32.xlu0 %v1145
        %v1147 = vpop.xlane.xlu0 %1146
        %v1148 = vsel %vm912, %v1141, 0.0
        %1149 = vadd.xlane.f32.xlu0 %v1148
        %v1150 = vpop.xlane.xlu0 %1149
        %v1151 = vadd.f32 %v1136, %v1144
        %v1152 = vadd.f32 %v1137, %v1147
        %v1153 = vadd.f32 %v1138, %v1150
        %1154 = vrot.lane.b32.xlu0 %v969, 120
        %v1155 = vpop.permute.xlu0 %1154
        %1156 = vrot.lane.b32.xlu0 %v970, 120
        %v1157 = vpop.permute.xlu0 %1156
        %v1160 = vsel %vm912, %v1132, 0
        %v1163 = vsel %vm912, %v1135, 0
        %v1166 = vsel %vm978, %v1157, 0
        %1168 = vmatprep.subr.bf16.mxu0 0
        %1169 = vmatpush1.bf16.msra.mxu0 0
        %1170 = vmatprep.subr.bf16.mxu0 0
        %1171 = vmatpush1.bf16.msra.mxu0 0
        %1172 = vmatprep.subr.bf16.mxu0 0
        %1173 = vmatpush1.bf16.msra.mxu0 0
        %1174 = vmatprep.subr.bf16.mxu0 0
        %1175 = vmatpush1.bf16.msra.mxu0 0
        %1176 = vmatprep.subr.bf16.mxu0 0
        %1177 = vmatpush1.bf16.msra.mxu0 0
        %1178 = vmatprep.subr.bf16.mxu0 0
        %1179 = vmatpush1.bf16.msra.mxu0 0
        %1180 = vmatprep.subr.bf16.mxu0 0
        %1181 = vmatpush1.bf16.msra.mxu0 %v1166
        %1182 = vmatprep.subr.bf16.mxu0 0
        %1183 = vmatpush1.bf16.msra.mxu0 %v1155
        %1184 = vmatprep.subr.bf16.mxu0 0
        %1185 = vmatpush2.bf16.msra.mxu0 0
        %1186 = vmatprep.subr.bf16.mxu0 0
        %1187 = vmatpush2.bf16.msra.mxu0 0
        %1188 = vmatprep.subr.bf16.mxu0 0
        %1189 = vmatpush2.bf16.msra.mxu0 0
        %1190 = vmatprep.subr.bf16.mxu0 0
        %1191 = vmatpush2.bf16.msra.mxu0 0
        %1192 = vmatprep.subr.bf16.mxu0 0
        %1193 = vmatpush2.bf16.msra.mxu0 0
        %1194 = vmatprep.subr.bf16.mxu0 0
        %1195 = vmatpush2.bf16.msra.mxu0 0
        %1196 = vmatprep.subr.bf16.mxu0 0
        %1197 = vmatpush2.bf16.msra.mxu0 0
        %1198 = vmatprep.subr.bf16.mxu0 0
        %1199 = vmatpush2.bf16.msra.mxu0 0
        %1200 = vmatprep.mubr.bf16.mxu0 0
        %1201 = vmatmul.mubr.bf16.gmra.mxu0 %v1160
        %v1202 = vpop.f32.mrf.mxu0
        %v1203 = vadd.f32 0.0, %v1202
        %v1204 = vpop.f32.mrf.mxu0
        %v1205 = vpop.f32.mrf.mxu0
        %v1206 = vadd.f32 0.0, %v1205
        %v1207 = vpop.f32.mrf.mxu0
        %1208 = vmatprep.mubr.bf16.mxu0 0
        %1209 = vmatmul.mubr.bf16.gmra.mxu0 %v1163
        %v1210 = vpop.f32.mrf.mxu0
        %v1211 = vadd.f32 0.0, %v1210
        %v1212 = vpop.f32.mrf.mxu0
        %v1213 = vpop.f32.mrf.mxu0
        %v1214 = vpop.f32.mrf.mxu0
        %1215 = vdwg.mxu0
        %v1216 = vadd.f32 %v1136, %v1203
        %v1217 = vadd.f32 %v1137, %v1206
        %v1218 = vadd.f32 %v1138, %v1211
        %1219 = vrot.lane.b32.xlu0 %v836, 112
        %v1220 = vpop.permute.xlu0 %1219
        %1221 = vrot.lane.b32.xlu0 %v837, 112
        %v1222 = vpop.permute.xlu0 %1221
        %1223 = vrot.lane.b32.xlu0 %v844, 112
        %v1224 = vpop.permute.xlu0 %1223
        %1225 = vrot.lane.b32.xlu0 %v845, 112
        %v1226 = vpop.permute.xlu0 %1225
        %v1228 = vsel %vm846, %v1220, 0
        %v1231 = vsel %vm846, %v1222, 0
        %v1234 = vsel %vm846, %v1224, 0
        %v1237 = vsel %vm846, %v1226, 0
        %1239 = vmatprep.subr.bf16.mxu0 0
        %1240 = vmatpush1.bf16.xpose.msra.mxu0 0
        %1241 = vmatprep.subr.bf16.mxu0 0
        %1242 = vmatpush1.bf16.xpose.msra.mxu0 0
        %1243 = vmatprep.subr.bf16.mxu0 0
        %1244 = vmatpush1.bf16.xpose.msra.mxu0 0
        %1245 = vmatprep.subr.bf16.mxu0 0
        %1246 = vmatpush1.bf16.xpose.msra.mxu0 0
        %1247 = vmatprep.subr.bf16.mxu0 0
        %1248 = vmatpush1.bf16.xpose.msra.mxu0 0
        %1249 = vmatprep.subr.bf16.mxu0 0
        %1250 = vmatpush1.bf16.xpose.msra.mxu0 0
        %1251 = vmatprep.subr.bf16.mxu0 0
        %1252 = vmatpush1.bf16.xpose.msra.mxu0 %v1237
        %1253 = vmatprep.subr.bf16.mxu0 0
        %1254 = vmatpush1.bf16.xpose.msra.mxu0 %v1234
        %1255 = vmatprep.subr.bf16.mxu0 0
        %1256 = vmatpush2.bf16.xpose.msra.mxu0 0
        %1257 = vmatprep.subr.bf16.mxu0 0
        %1258 = vmatpush2.bf16.xpose.msra.mxu0 0
        %1259 = vmatprep.subr.bf16.mxu0 0
        %1260 = vmatpush2.bf16.xpose.msra.mxu0 0
        %1261 = vmatprep.subr.bf16.mxu0 0
        %1262 = vmatpush2.bf16.xpose.msra.mxu0 0
        %1263 = vmatprep.subr.bf16.mxu0 0
        %1264 = vmatpush2.bf16.xpose.msra.mxu0 0
        %1265 = vmatprep.subr.bf16.mxu0 0
        %1266 = vmatpush2.bf16.xpose.msra.mxu0 0
        %1267 = vmatprep.subr.bf16.mxu0 0
        %1268 = vmatpush2.bf16.xpose.msra.mxu0 0
        %1269 = vmatprep.subr.bf16.mxu0 0
        %1270 = vmatpush2.bf16.xpose.msra.mxu0 0
        %1271 = vmatprep.mubr.bf16.mxu0 0
        %1272 = vmatmul.mubr.bf16.gmra.mxu0 %v1228
        %v1273 = vpop.f32.mrf.mxu0
        %v1274 = vadd.f32 0.0, %v1273
        %v1275 = vpop.f32.mrf.mxu0
        %v1276 = vpop.f32.mrf.mxu0
        %v1277 = vadd.f32 0.0, %v1276
        %v1278 = vpop.f32.mrf.mxu0
        %1279 = vmatprep.mubr.bf16.mxu0 0
        %1280 = vmatmul.mubr.bf16.gmra.mxu0 %v1231
        %v1281 = vpop.f32.mrf.mxu0
        %v1282 = vadd.f32 0.0, %v1281
        %v1283 = vpop.f32.mrf.mxu0
        %v1284 = vpop.f32.mrf.mxu0
        %v1285 = vpop.f32.mrf.mxu0
        %1286 = vdwg.mxu0
        %v1287 = vsel %vm908, %v1274, -1e+30
        %v1288 = vsel %vm908, %v1277, -1e+30
        %v1289 = vsel %vm908, %v1282, -1e+30
        %v1290 = vsel %vm912, %v1287, -inf
        %1291 = vmax.xlane.f32.xlu0 %v1290
        %v1292 = vpop.xlane.xlu0 %1291
        %v1293 = vsel %vm912, %v1288, -inf
        %1294 = vmax.xlane.f32.xlu0 %v1293
        %v1295 = vpop.xlane.xlu0 %1294
        %v1296 = vsel %vm912, %v1289, -inf
        %1297 = vmax.xlane.f32.xlu0 %v1296
        %v1298 = vpop.xlane.xlu0 %1297
        %v1299 = vmax.f32 %v1292, -1e+30
        %v1300 = vmax.f32 %v1295, -1e+30
        %v1301 = vmax.f32 %v1298, -1e+30
        %v1302 = vsub.f32 -1e+30, %v1299
        %v1303 = vsub.f32 -1e+30, %v1300
        %v1304 = vsub.f32 -1e+30, %v1301
        %v1305 = vmul.f32 %v1302, 1.442695
        %v1306 = vpow.pop %v1305
        %v1307 = vmul.f32 %v1303, 1.442695
        %v1308 = vpow.pop %v1307
        %v1309 = vmul.f32 %v1304, 1.442695
        %v1310 = vpow.pop %v1309
        %v1311 = vsub.f32 %v1287, %v1299
        %v1312 = vsub.f32 %v1288, %v1300
        %v1313 = vsub.f32 %v1289, %v1301
        %v1314 = vpack.c.bf16 %v1312, %v1311
        %v1315 = vpack.c.bf16 %v1313, %v1313
        %v1317 = vmul.bf16 %v1314, 1069105081
        %v1318 = vpow.bf16.pop %v1317
        %v1320 = vmul.bf16 %v1315, 1069105081
        %v1321 = vpow.bf16.pop %v1320
        %v1322 = vmul.f32 %v1306, 0.0
        %v1323 = vmul.f32 %v1308, 0.0
        %v1324 = vmul.f32 %v1310, 0.0
        %v1325 = vunpack.c.l.bf16 %v1318
        %v1326 = vunpack.c.h.bf16 %v1318
        %v1327 = vunpack.c.l.bf16 %v1321
        %v1328 = vsel %vm912, %v1325, 0.0
        %1329 = vadd.xlane.f32.xlu0 %v1328
        %v1330 = vpop.xlane.xlu0 %1329
        %v1331 = vsel %vm912, %v1326, 0.0
        %1332 = vadd.xlane.f32.xlu0 %v1331
        %v1333 = vpop.xlane.xlu0 %1332
        %v1334 = vsel %vm912, %v1327, 0.0
        %1335 = vadd.xlane.f32.xlu0 %v1334
        %v1336 = vpop.xlane.xlu0 %1335
        %v1337 = vadd.f32 %v1322, %v1330
        %v1338 = vadd.f32 %v1323, %v1333
        %v1339 = vadd.f32 %v1324, %v1336
        %1340 = vrot.lane.b32.xlu0 %v969, 112
        %v1341 = vpop.permute.xlu0 %1340
        %1342 = vrot.lane.b32.xlu0 %v970, 112
        %v1343 = vpop.permute.xlu0 %1342
        %v1346 = vsel %vm912, %v1318, 0
        %v1349 = vsel %vm912, %v1321, 0
        %v1352 = vsel %vm978, %v1343, 0
        %1354 = vmatprep.subr.bf16.mxu0 0
        %1355 = vmatpush1.bf16.msra.mxu0 0
        %1356 = vmatprep.subr.bf16.mxu0 0
        %1357 = vmatpush1.bf16.msra.mxu0 0
        %1358 = vmatprep.subr.bf16.mxu0 0
        %1359 = vmatpush1.bf16.msra.mxu0 0
        %1360 = vmatprep.subr.bf16.mxu0 0
        %1361 = vmatpush1.bf16.msra.mxu0 0
        %1362 = vmatprep.subr.bf16.mxu0 0
        %1363 = vmatpush1.bf16.msra.mxu0 0
        %1364 = vmatprep.subr.bf16.mxu0 0
        %1365 = vmatpush1.bf16.msra.mxu0 0
        %1366 = vmatprep.subr.bf16.mxu0 0
        %1367 = vmatpush1.bf16.msra.mxu0 %v1352
        %1368 = vmatprep.subr.bf16.mxu0 0
        %1369 = vmatpush1.bf16.msra.mxu0 %v1341
        %1370 = vmatprep.subr.bf16.mxu0 0
        %1371 = vmatpush2.bf16.msra.mxu0 0
        %1372 = vmatprep.subr.bf16.mxu0 0
        %1373 = vmatpush2.bf16.msra.mxu0 0
        %1374 = vmatprep.subr.bf16.mxu0 0
        %1375 = vmatpush2.bf16.msra.mxu0 0
        %1376 = vmatprep.subr.bf16.mxu0 0
        %1377 = vmatpush2.bf16.msra.mxu0 0
        %1378 = vmatprep.subr.bf16.mxu0 0
        %1379 = vmatpush2.bf16.msra.mxu0 0
        %1380 = vmatprep.subr.bf16.mxu0 0
        %1381 = vmatpush2.bf16.msra.mxu0 0
        %1382 = vmatprep.subr.bf16.mxu0 0
        %1383 = vmatpush2.bf16.msra.mxu0 0
        %1384 = vmatprep.subr.bf16.mxu0 0
        %1385 = vmatpush2.bf16.msra.mxu0 0
        %1386 = vmatprep.mubr.bf16.mxu0 0
        %1387 = vmatmul.mubr.bf16.gmra.mxu0 %v1346
        %v1388 = vpop.f32.mrf.mxu0
        %v1389 = vadd.f32 0.0, %v1388
        %v1390 = vpop.f32.mrf.mxu0
        %v1391 = vpop.f32.mrf.mxu0
        %v1392 = vadd.f32 0.0, %v1391
        %v1393 = vpop.f32.mrf.mxu0
        %1394 = vmatprep.mubr.bf16.mxu0 0
        %1395 = vmatmul.mubr.bf16.gmra.mxu0 %v1349
        %v1396 = vpop.f32.mrf.mxu0
        %v1397 = vadd.f32 0.0, %v1396
        %v1398 = vpop.f32.mrf.mxu0
        %v1399 = vpop.f32.mrf.mxu0
        %v1400 = vpop.f32.mrf.mxu0
        %1401 = vdwg.mxu0
        %v1402 = vadd.f32 %v1322, %v1389
        %v1403 = vadd.f32 %v1323, %v1392
        %v1404 = vadd.f32 %v1324, %v1397
        %1405 = vrot.lane.b32.xlu0 %v836, 104
        %v1406 = vpop.permute.xlu0 %1405
        %1407 = vrot.lane.b32.xlu0 %v837, 104
        %v1408 = vpop.permute.xlu0 %1407
        %1409 = vrot.lane.b32.xlu0 %v844, 104
        %v1410 = vpop.permute.xlu0 %1409
        %1411 = vrot.lane.b32.xlu0 %v845, 104
        %v1412 = vpop.permute.xlu0 %1411
        %v1414 = vsel %vm846, %v1406, 0
        %v1417 = vsel %vm846, %v1408, 0
        %v1420 = vsel %vm846, %v1410, 0
        %v1423 = vsel %vm846, %v1412, 0
        %1425 = vmatprep.subr.bf16.mxu0 0
        %1426 = vmatpush1.bf16.xpose.msra.mxu0 0
        %1427 = vmatprep.subr.bf16.mxu0 0
        %1428 = vmatpush1.bf16.xpose.msra.mxu0 0
        %1429 = vmatprep.subr.bf16.mxu0 0
        %1430 = vmatpush1.bf16.xpose.msra.mxu0 0
        %1431 = vmatprep.subr.bf16.mxu0 0
        %1432 = vmatpush1.bf16.xpose.msra.mxu0 0
        %1433 = vmatprep.subr.bf16.mxu0 0
        %1434 = vmatpush1.bf16.xpose.msra.mxu0 0
        %1435 = vmatprep.subr.bf16.mxu0 0
        %1436 = vmatpush1.bf16.xpose.msra.mxu0 0
        %1437 = vmatprep.subr.bf16.mxu0 0
        %1438 = vmatpush1.bf16.xpose.msra.mxu0 %v1423
        %1439 = vmatprep.subr.bf16.mxu0 0
        %1440 = vmatpush1.bf16.xpose.msra.mxu0 %v1420
        %1441 = vmatprep.subr.bf16.mxu0 0
        %1442 = vmatpush2.bf16.xpose.msra.mxu0 0
        %1443 = vmatprep.subr.bf16.mxu0 0
        %1444 = vmatpush2.bf16.xpose.msra.mxu0 0
        %1445 = vmatprep.subr.bf16.mxu0 0
        %1446 = vmatpush2.bf16.xpose.msra.mxu0 0
        %1447 = vmatprep.subr.bf16.mxu0 0
        %1448 = vmatpush2.bf16.xpose.msra.mxu0 0
        %1449 = vmatprep.subr.bf16.mxu0 0
        %1450 = vmatpush2.bf16.xpose.msra.mxu0 0
        %1451 = vmatprep.subr.bf16.mxu0 0
        %1452 = vmatpush2.bf16.xpose.msra.mxu0 0
        %1453 = vmatprep.subr.bf16.mxu0 0
        %1454 = vmatpush2.bf16.xpose.msra.mxu0 0
        %1455 = vmatprep.subr.bf16.mxu0 0
        %1456 = vmatpush2.bf16.xpose.msra.mxu0 0
        %1457 = vmatprep.mubr.bf16.mxu0 0
        %1458 = vmatmul.mubr.bf16.gmra.mxu0 %v1414
        %v1459 = vpop.f32.mrf.mxu0
        %v1460 = vadd.f32 0.0, %v1459
        %v1461 = vpop.f32.mrf.mxu0
        %v1462 = vpop.f32.mrf.mxu0
        %v1463 = vadd.f32 0.0, %v1462
        %v1464 = vpop.f32.mrf.mxu0
        %1465 = vmatprep.mubr.bf16.mxu0 0
        %1466 = vmatmul.mubr.bf16.gmra.mxu0 %v1417
        %v1467 = vpop.f32.mrf.mxu0
        %v1468 = vadd.f32 0.0, %v1467
        %v1469 = vpop.f32.mrf.mxu0
        %v1470 = vpop.f32.mrf.mxu0
        %v1471 = vpop.f32.mrf.mxu0
        %1472 = vdwg.mxu0
        %v1473 = vsel %vm908, %v1460, -1e+30
        %v1474 = vsel %vm908, %v1463, -1e+30
        %v1475 = vsel %vm908, %v1468, -1e+30
        %v1476 = vsel %vm912, %v1473, -inf
        %1477 = vmax.xlane.f32.xlu0 %v1476
        %v1478 = vpop.xlane.xlu0 %1477
        %v1479 = vsel %vm912, %v1474, -inf
        %1480 = vmax.xlane.f32.xlu0 %v1479
        %v1481 = vpop.xlane.xlu0 %1480
        %v1482 = vsel %vm912, %v1475, -inf
        %1483 = vmax.xlane.f32.xlu0 %v1482
        %v1484 = vpop.xlane.xlu0 %1483
        %v1485 = vmax.f32 %v1478, -1e+30
        %v1486 = vmax.f32 %v1481, -1e+30
        %v1487 = vmax.f32 %v1484, -1e+30
        %v1488 = vsub.f32 -1e+30, %v1485
        %v1489 = vsub.f32 -1e+30, %v1486
        %v1490 = vsub.f32 -1e+30, %v1487
        %v1491 = vmul.f32 %v1488, 1.442695
        %v1492 = vpow.pop %v1491
        %v1493 = vmul.f32 %v1489, 1.442695
        %v1494 = vpow.pop %v1493
        %v1495 = vmul.f32 %v1490, 1.442695
        %v1496 = vpow.pop %v1495
        %v1497 = vsub.f32 %v1473, %v1485
        %v1498 = vsub.f32 %v1474, %v1486
        %v1499 = vsub.f32 %v1475, %v1487
        %v1500 = vpack.c.bf16 %v1498, %v1497
        %v1501 = vpack.c.bf16 %v1499, %v1499
        %v1503 = vmul.bf16 %v1500, 1069105081
        %v1504 = vpow.bf16.pop %v1503
        %v1506 = vmul.bf16 %v1501, 1069105081
        %v1507 = vpow.bf16.pop %v1506
        %v1508 = vmul.f32 %v1492, 0.0
        %v1509 = vmul.f32 %v1494, 0.0
        %v1510 = vmul.f32 %v1496, 0.0
        %v1511 = vunpack.c.l.bf16 %v1504
        %v1512 = vunpack.c.h.bf16 %v1504
        %v1513 = vunpack.c.l.bf16 %v1507
        %v1514 = vsel %vm912, %v1511, 0.0
        %1515 = vadd.xlane.f32.xlu0 %v1514
        %v1516 = vpop.xlane.xlu0 %1515
        %v1517 = vsel %vm912, %v1512, 0.0
        %1518 = vadd.xlane.f32.xlu0 %v1517
        %v1519 = vpop.xlane.xlu0 %1518
        %v1520 = vsel %vm912, %v1513, 0.0
        %1521 = vadd.xlane.f32.xlu0 %v1520
        %v1522 = vpop.xlane.xlu0 %1521
        %v1523 = vadd.f32 %v1508, %v1516
        %v1524 = vadd.f32 %v1509, %v1519
        %v1525 = vadd.f32 %v1510, %v1522
        %1526 = vrot.lane.b32.xlu0 %v969, 104
        %v1527 = vpop.permute.xlu0 %1526
        %1528 = vrot.lane.b32.xlu0 %v970, 104
        %v1529 = vpop.permute.xlu0 %1528
        %v1532 = vsel %vm912, %v1504, 0
        %v1535 = vsel %vm912, %v1507, 0
        %v1538 = vsel %vm978, %v1529, 0
        %1540 = vmatprep.subr.bf16.mxu0 0
        %1541 = vmatpush1.bf16.msra.mxu0 0
        %1542 = vmatprep.subr.bf16.mxu0 0
        %1543 = vmatpush1.bf16.msra.mxu0 0
        %1544 = vmatprep.subr.bf16.mxu0 0
        %1545 = vmatpush1.bf16.msra.mxu0 0
        %1546 = vmatprep.subr.bf16.mxu0 0
        %1547 = vmatpush1.bf16.msra.mxu0 0
        %1548 = vmatprep.subr.bf16.mxu0 0
        %1549 = vmatpush1.bf16.msra.mxu0 0
        %1550 = vmatprep.subr.bf16.mxu0 0
        %1551 = vmatpush1.bf16.msra.mxu0 0
        %1552 = vmatprep.subr.bf16.mxu0 0
        %1553 = vmatpush1.bf16.msra.mxu0 %v1538
        %1554 = vmatprep.subr.bf16.mxu0 0
        %1555 = vmatpush1.bf16.msra.mxu0 %v1527
        %1556 = vmatprep.subr.bf16.mxu0 0
        %1557 = vmatpush2.bf16.msra.mxu0 0
        %1558 = vmatprep.subr.bf16.mxu0 0
        %1559 = vmatpush2.bf16.msra.mxu0 0
        %1560 = vmatprep.subr.bf16.mxu0 0
        %1561 = vmatpush2.bf16.msra.mxu0 0
        %1562 = vmatprep.subr.bf16.mxu0 0
        %1563 = vmatpush2.bf16.msra.mxu0 0
        %1564 = vmatprep.subr.bf16.mxu0 0
        %1565 = vmatpush2.bf16.msra.mxu0 0
        %1566 = vmatprep.subr.bf16.mxu0 0
        %1567 = vmatpush2.bf16.msra.mxu0 0
        %1568 = vmatprep.subr.bf16.mxu0 0
        %1569 = vmatpush2.bf16.msra.mxu0 0
        %1570 = vmatprep.subr.bf16.mxu0 0
        %1571 = vmatpush2.bf16.msra.mxu0 0
        %1572 = vmatprep.mubr.bf16.mxu0 0
        %1573 = vmatmul.mubr.bf16.gmra.mxu0 %v1532
        %v1574 = vpop.f32.mrf.mxu0
        %v1575 = vadd.f32 0.0, %v1574
        %v1576 = vpop.f32.mrf.mxu0
        %v1577 = vpop.f32.mrf.mxu0
        %v1578 = vadd.f32 0.0, %v1577
        %v1579 = vpop.f32.mrf.mxu0
        %1580 = vmatprep.mubr.bf16.mxu0 0
        %1581 = vmatmul.mubr.bf16.gmra.mxu0 %v1535
        %v1582 = vpop.f32.mrf.mxu0
        %v1583 = vadd.f32 0.0, %v1582
        %v1584 = vpop.f32.mrf.mxu0
        %v1585 = vpop.f32.mrf.mxu0
        %v1586 = vpop.f32.mrf.mxu0
        %1587 = vdwg.mxu0
        %v1588 = vadd.f32 %v1508, %v1575
        %v1589 = vadd.f32 %v1509, %v1578
        %v1590 = vadd.f32 %v1510, %v1583
        %v1591 = vrcp.pop %v960
        %v1592 = vrcp.pop %v961
        %v1593 = vrcp.pop %v962
        %v1594 = vmul.f32 %v1030, %v1591
        %v1595 = vmul.f32 %v1031, %v1592
        %v1596 = vmul.f32 %v1032, %v1593
        %v1597 = vpack.c.bf16 %v1595, %v1594
        %v1598 = vpack.c.bf16 %v1596, %v1596
        %v1599 = vld [vmem:[#allocation10] sm:$0xf]
        %v1600 = vrcp.pop %v1151
        %v1601 = vrcp.pop %v1152
        %v1602 = vrcp.pop %v1153
        %v1603 = vmul.f32 %v1216, %v1600
        %v1604 = vmul.f32 %v1217, %v1601
        %v1605 = vmul.f32 %v1218, %v1602
        %v1606 = vpack.c.bf16 %v1604, %v1603
        %v1607 = vpack.c.bf16 %v1605, %v1605
        %s1608 = scalar_lea.vmem [#allocation10], 4
        %v1609 = vld [vmem:[%s1608] sm:$0xf]
        %v1611 = vsel %vm846, %v1606, 0
        %v1614 = vsel %vm846, %v1607, 0
        %v1617 = vsel %vm978, %v1609, 0
        %1619 = vmatprep.subr.bf16.mxu0 0
        %1620 = vmatpush1.bf16.msra.mxu0 0
        %1621 = vmatprep.subr.bf16.mxu0 0
        %1622 = vmatpush1.bf16.msra.mxu0 0
        %1623 = vmatprep.subr.bf16.mxu0 0
        %1624 = vmatpush1.bf16.msra.mxu0 0
        %1625 = vmatprep.subr.bf16.mxu0 0
        %1626 = vmatpush1.bf16.msra.mxu0 0
        %1627 = vmatprep.subr.bf16.mxu0 0
        %1628 = vmatpush1.bf16.msra.mxu0 0
        %1629 = vmatprep.subr.bf16.mxu0 0
        %1630 = vmatpush1.bf16.msra.mxu0 0
        %1631 = vmatprep.subr.bf16.mxu0 0
        %1632 = vmatpush1.bf16.msra.mxu0 0
        %1633 = vmatprep.subr.bf16.mxu0 0
        %1634 = vmatpush1.bf16.msra.mxu0 %v1617
        %1635 = vmatprep.subr.bf16.mxu0 0
        %1636 = vmatpush2.bf16.msra.mxu0 0
        %1637 = vmatprep.subr.bf16.mxu0 0
        %1638 = vmatpush2.bf16.msra.mxu0 0
        %1639 = vmatprep.subr.bf16.mxu0 0
        %1640 = vmatpush2.bf16.msra.mxu0 0
        %1641 = vmatprep.subr.bf16.mxu0 0
        %1642 = vmatpush2.bf16.msra.mxu0 0
        %1643 = vmatprep.subr.bf16.mxu0 0
        %1644 = vmatpush2.bf16.msra.mxu0 0
        %1645 = vmatprep.subr.bf16.mxu0 0
        %1646 = vmatpush2.bf16.msra.mxu0 0
        %1647 = vmatprep.subr.bf16.mxu0 0
        %1648 = vmatpush2.bf16.msra.mxu0 0
        %1649 = vmatprep.subr.bf16.mxu0 0
        %1650 = vmatpush2.bf16.msra.mxu0 0
        %1651 = vmatprep.mubr.bf16.mxu0 0
        %1652 = vmatmul.mubr.bf16.gmra.mxu0 %v1611
        %v1653 = vpop.f32.mrf.mxu0
        %v1654 = vadd.f32 0.0, %v1653
        %v1655 = vpop.f32.mrf.mxu0
        %v1656 = vpop.f32.mrf.mxu0
        %v1657 = vadd.f32 0.0, %v1656
        %v1658 = vpop.f32.mrf.mxu0
        %1659 = vmatprep.mubr.bf16.mxu0 0
        %1660 = vmatmul.mubr.bf16.gmra.mxu0 %v1614
        %v1661 = vpop.f32.mrf.mxu0
        %v1662 = vadd.f32 0.0, %v1661
        %v1663 = vpop.f32.mrf.mxu0
        %v1664 = vpop.f32.mrf.mxu0
        %v1665 = vpop.f32.mrf.mxu0
        %1666 = vdwg.mxu0
        %v1668 = vsel %vm846, %v1597, 0
        %v1671 = vsel %vm846, %v1598, 0
        %v1674 = vsel %vm978, %v1599, 0
        %1676 = vmatprep.subr.bf16.mxu0 0
        %1677 = vmatpush1.bf16.msra.mxu0 0
        %1678 = vmatprep.subr.bf16.mxu0 0
        %1679 = vmatpush1.bf16.msra.mxu0 0
        %1680 = vmatprep.subr.bf16.mxu0 0
        %1681 = vmatpush1.bf16.msra.mxu0 0
        %1682 = vmatprep.subr.bf16.mxu0 0
        %1683 = vmatpush1.bf16.msra.mxu0 0
        %1684 = vmatprep.subr.bf16.mxu0 0
        %1685 = vmatpush1.bf16.msra.mxu0 0
        %1686 = vmatprep.subr.bf16.mxu0 0
        %1687 = vmatpush1.bf16.msra.mxu0 0
        %1688 = vmatprep.subr.bf16.mxu0 0
        %1689 = vmatpush1.bf16.msra.mxu0 0
        %1690 = vmatprep.subr.bf16.mxu0 0
        %1691 = vmatpush1.bf16.msra.mxu0 %v1674
        %1692 = vmatprep.subr.bf16.mxu0 0
        %1693 = vmatpush2.bf16.msra.mxu0 0
        %1694 = vmatprep.subr.bf16.mxu0 0
        %1695 = vmatpush2.bf16.msra.mxu0 0
        %1696 = vmatprep.subr.bf16.mxu0 0
        %1697 = vmatpush2.bf16.msra.mxu0 0
        %1698 = vmatprep.subr.bf16.mxu0 0
        %1699 = vmatpush2.bf16.msra.mxu0 0
        %1700 = vmatprep.subr.bf16.mxu0 0
        %1701 = vmatpush2.bf16.msra.mxu0 0
        %1702 = vmatprep.subr.bf16.mxu0 0
        %1703 = vmatpush2.bf16.msra.mxu0 0
        %1704 = vmatprep.subr.bf16.mxu0 0
        %1705 = vmatpush2.bf16.msra.mxu0 0
        %1706 = vmatprep.subr.bf16.mxu0 0
        %1707 = vmatpush2.bf16.msra.mxu0 0
        %1708 = vmatprep.mubr.bf16.mxu0 0
        %1709 = vmatmul.mubr.bf16.gmra.mxu0 %v1668
        %v1710 = vpop.f32.mrf.mxu0
        %v1711 = vadd.f32 %v1654, %v1710
        %v1712 = vpop.f32.mrf.mxu0
        %v1713 = vpop.f32.mrf.mxu0
        %v1714 = vadd.f32 %v1657, %v1713
        %v1715 = vpop.f32.mrf.mxu0
        %1716 = vmatprep.mubr.bf16.mxu0 0
        %1717 = vmatmul.mubr.bf16.gmra.mxu0 %v1671
        %v1718 = vpop.f32.mrf.mxu0
        %v1719 = vadd.f32 %v1662, %v1718
        %v1720 = vpop.f32.mrf.mxu0
        %v1721 = vpop.f32.mrf.mxu0
        %v1722 = vpop.f32.mrf.mxu0
        %1723 = vdwg.mxu0
        %v1724 = vrcp.pop %v1337
        %v1725 = vrcp.pop %v1338
        %v1726 = vrcp.pop %v1339
        %v1727 = vmul.f32 %v1402, %v1724
        %v1728 = vmul.f32 %v1403, %v1725
        %v1729 = vmul.f32 %v1404, %v1726
        %v1730 = vpack.c.bf16 %v1728, %v1727
        %v1731 = vpack.c.bf16 %v1729, %v1729
        %s1732 = scalar_lea.vmem [#allocation10], 8
        %v1733 = vld [vmem:[%s1732] sm:$0xf]
        %v1735 = vsel %vm846, %v1730, 0
        %v1738 = vsel %vm846, %v1731, 0
        %v1741 = vsel %vm978, %v1733, 0
        %1743 = vmatprep.subr.bf16.mxu0 0
        %1744 = vmatpush1.bf16.msra.mxu0 0
        %1745 = vmatprep.subr.bf16.mxu0 0
        %1746 = vmatpush1.bf16.msra.mxu0 0
        %1747 = vmatprep.subr.bf16.mxu0 0
        %1748 = vmatpush1.bf16.msra.mxu0 0
        %1749 = vmatprep.subr.bf16.mxu0 0
        %1750 = vmatpush1.bf16.msra.mxu0 0
        %1751 = vmatprep.subr.bf16.mxu0 0
        %1752 = vmatpush1.bf16.msra.mxu0 0
        %1753 = vmatprep.subr.bf16.mxu0 0
        %1754 = vmatpush1.bf16.msra.mxu0 0
        %1755 = vmatprep.subr.bf16.mxu0 0
        %1756 = vmatpush1.bf16.msra.mxu0 0
        %1757 = vmatprep.subr.bf16.mxu0 0
        %1758 = vmatpush1.bf16.msra.mxu0 %v1741
        %1759 = vmatprep.subr.bf16.mxu0 0
        %1760 = vmatpush2.bf16.msra.mxu0 0
        %1761 = vmatprep.subr.bf16.mxu0 0
        %1762 = vmatpush2.bf16.msra.mxu0 0
        %1763 = vmatprep.subr.bf16.mxu0 0
        %1764 = vmatpush2.bf16.msra.mxu0 0
        %1765 = vmatprep.subr.bf16.mxu0 0
        %1766 = vmatpush2.bf16.msra.mxu0 0
        %1767 = vmatprep.subr.bf16.mxu0 0
        %1768 = vmatpush2.bf16.msra.mxu0 0
        %1769 = vmatprep.subr.bf16.mxu0 0
        %1770 = vmatpush2.bf16.msra.mxu0 0
        %1771 = vmatprep.subr.bf16.mxu0 0
        %1772 = vmatpush2.bf16.msra.mxu0 0
        %1773 = vmatprep.subr.bf16.mxu0 0
        %1774 = vmatpush2.bf16.msra.mxu0 0
        %1775 = vmatprep.mubr.bf16.mxu0 0
        %1776 = vmatmul.mubr.bf16.gmra.mxu0 %v1735
        %v1777 = vpop.f32.mrf.mxu0
        %v1778 = vadd.f32 0.0, %v1777
        %v1779 = vpop.f32.mrf.mxu0
        %v1780 = vpop.f32.mrf.mxu0
        %v1781 = vadd.f32 0.0, %v1780
        %v1782 = vpop.f32.mrf.mxu0
        %1783 = vmatprep.mubr.bf16.mxu0 0
        %1784 = vmatmul.mubr.bf16.gmra.mxu0 %v1738
        %v1785 = vpop.f32.mrf.mxu0
        %v1786 = vadd.f32 0.0, %v1785
        %v1787 = vpop.f32.mrf.mxu0
        %v1788 = vpop.f32.mrf.mxu0
        %v1789 = vpop.f32.mrf.mxu0
        %1790 = vdwg.mxu0
        %v1791 = vadd.f32 %v1711, %v1778
        %v1792 = vadd.f32 %v1714, %v1781
        %v1793 = vadd.f32 %v1719, %v1786
        %v1794 = vrcp.pop %v1523
        %v1795 = vrcp.pop %v1524
        %v1796 = vrcp.pop %v1525
        %v1797 = vmul.f32 %v1588, %v1794
        %v1798 = vmul.f32 %v1589, %v1795
        %v1799 = vmul.f32 %v1590, %v1796
        %v1800 = vpack.c.bf16 %v1798, %v1797
        %v1801 = vpack.c.bf16 %v1799, %v1799
        %s1802 = scalar_lea.vmem [#allocation10], 12
        %v1803 = vld [vmem:[%s1802] sm:$0xf]
        %v1805 = vsel %vm846, %v1800, 0
        %v1808 = vsel %vm846, %v1801, 0
        %v1811 = vsel %vm978, %v1803, 0
        %1813 = vmatprep.subr.bf16.mxu0 0
        %1814 = vmatpush1.bf16.msra.mxu0 0
        %1815 = vmatprep.subr.bf16.mxu0 0
        %1816 = vmatpush1.bf16.msra.mxu0 0
        %1817 = vmatprep.subr.bf16.mxu0 0
        %1818 = vmatpush1.bf16.msra.mxu0 0
        %1819 = vmatprep.subr.bf16.mxu0 0
        %1820 = vmatpush1.bf16.msra.mxu0 0
        %1821 = vmatprep.subr.bf16.mxu0 0
        %1822 = vmatpush1.bf16.msra.mxu0 0
        %1823 = vmatprep.subr.bf16.mxu0 0
        %1824 = vmatpush1.bf16.msra.mxu0 0
        %1825 = vmatprep.subr.bf16.mxu0 0
        %1826 = vmatpush1.bf16.msra.mxu0 0
        %1827 = vmatprep.subr.bf16.mxu0 0
        %1828 = vmatpush1.bf16.msra.mxu0 %v1811
        %1829 = vmatprep.subr.bf16.mxu0 0
        %1830 = vmatpush2.bf16.msra.mxu0 0
        %1831 = vmatprep.subr.bf16.mxu0 0
        %1832 = vmatpush2.bf16.msra.mxu0 0
        %1833 = vmatprep.subr.bf16.mxu0 0
        %1834 = vmatpush2.bf16.msra.mxu0 0
        %1835 = vmatprep.subr.bf16.mxu0 0
        %1836 = vmatpush2.bf16.msra.mxu0 0
        %1837 = vmatprep.subr.bf16.mxu0 0
        %1838 = vmatpush2.bf16.msra.mxu0 0
        %1839 = vmatprep.subr.bf16.mxu0 0
        %1840 = vmatpush2.bf16.msra.mxu0 0
        %1841 = vmatprep.subr.bf16.mxu0 0
        %1842 = vmatpush2.bf16.msra.mxu0 0
        %1843 = vmatprep.subr.bf16.mxu0 0
        %1844 = vmatpush2.bf16.msra.mxu0 0
        %1845 = vmatprep.mubr.bf16.mxu0 0
        %1846 = vmatmul.mubr.bf16.gmra.mxu0 %v1805
        %v1847 = vpop.f32.mrf.mxu0
        %v1848 = vadd.f32 0.0, %v1847
        %v1849 = vpop.f32.mrf.mxu0
        %v1850 = vpop.f32.mrf.mxu0
        %v1851 = vadd.f32 0.0, %v1850
        %v1852 = vpop.f32.mrf.mxu0
        %1853 = vmatprep.mubr.bf16.mxu0 0
        %1854 = vmatmul.mubr.bf16.gmra.mxu0 %v1808
        %v1855 = vpop.f32.mrf.mxu0
        %v1856 = vadd.f32 0.0, %v1855
        %v1857 = vpop.f32.mrf.mxu0
        %v1858 = vpop.f32.mrf.mxu0
        %v1859 = vpop.f32.mrf.mxu0
        %1860 = vdwg.mxu0
        %v1861 = vadd.f32 %v1791, %v1848
        %v1862 = vadd.f32 %v1792, %v1851
        %v1863 = vadd.f32 %v1793, %v1856
        %v1864 = vld [vmem:[%s5] sm:$0x1]
        %v1866 = vlaneseq
        %v1867 = vshrl.u32 %v1866, 7
        %v1868 = vsub.s32 0, %v1867
        %v1869 = vrot.slane %v1864, %v1868
        %v1871 = vadd.f32 %v1861, %v1869
        %v1872 = vadd.f32 %v1862, %v1869
        %v1873 = vadd.f32 %v1863, %v1869
        %s1874 = smul.addr %s814, 4
        %s1875 = scalar_lea.vmem %s307, %s1874 [#allocation5]
        %v1876 = vld [vmem:[%s1875] sm:$0xf]
        %v1877 = vld [vmem:[%s1875 + $0x4] sm:$0xf]
        %v1878 = vld [vmem:[%s1875 + $0x8] sm:$0xf]
        %v1879 = vunpack.c.l.bf16 %v1876
        %v1880 = vunpack.c.l.bf16 %v1877
        %v1881 = vunpack.c.l.bf16 %v1878
        %v1882 = vadd.f32 %v1879, %v1871
        %v1883 = vadd.f32 %v1880, %v1872
        %v1884 = vadd.f32 %v1881, %v1873
        %v1885 = vpack.c.bf16 %v1883, %v1882
        %v1886 = vpack.c.bf16 %v1884, %v1884
        %v1889 = vunpack.c.l.b16 %v1885
        %v1890 = vunpack.c.h.b16 %v1885
        %v1891 = vunpack.c.l.b16 %v1886
        %v1892 = vpack.c.b16 %v1889, %v1889
        %v1893 = vpack.c.b16 %v1890, %v1890
        %v1894 = vpack.c.b16 %v1891, %v1891
        %vm1898 = vcmask 257024
        %1899 = vst.msk [vmem:[%s343] sm:$0xf] %vm1898, %v1892
        %1900 = vst.msk [vmem:[%s343 + $0x4] sm:$0xf] %vm1898, %v1893
        %1901 = vst.msk [vmem:[%s343 + $0x8] sm:$0xf] %vm1898, %v1894
        %s1902 = sand.u32 %s182, 1
        %s1903 = scalar_lea.sflag [#allocation7], %s1902
        %s1904 = sand.u32 %s182, 1
        %s1905 = smul.addr %s1904, 12
        %s1906 = scalar_lea.vmem [#allocation11], %s1905
        %s1907 = sand.u32 %s208, 1
        %s1908 = scalar_lea.sflag [#allocation13], %s1907
        %s1909 = sand.u32 %s208, 1
        %s1910 = scalar_lea.vmem [#allocation12], %s1909
        // Predicated region
        $region61: #{tpu_custom_call.1} parent=43 // pred_check
          %p1911 = pneg %p192
        $region62: #{tpu_custom_call.1} parent=43 // pred_check_branch
          %1913 = sbr.rel (%p1911) target = $region64
        $region63: #{tpu_custom_call.1} parent=43 // pred_region
          %s1914 = smul.u32 3, %s34
          %s1916 = ssub.s32 192, 192
          %1917 = vsyncadd %s1903, %s1916
          %s1918 = smul.addr %s33, 3
          %s1919 = sadd.s32 %s1914, %s1918
          %s1920 = smul.addr %s1919, 64
          %s1921 = scalar_lea.hbm %s6, %s1920
          %s1922 = sshll.u32 %s1906, 4
          %s1923 = int_to_ptr.vmem [resolvable:$true] %s1922
          %1928 = dma.vmem_to_hbm [thread:$0]  %s1923, 192, %s1921, %s1903, 64, 64, 4
        $region64: #{tpu_custom_call.1} parent=43 // pred_fallthru
          _
        // Predicated region
        $region65: #{tpu_custom_call.1} parent=43 // pred_check
          %p1929 = pneg %p218
        $region66: #{tpu_custom_call.1} parent=43 // pred_check_branch
          %1931 = sbr.rel (%p1929) target = $region68
        $region67: #{tpu_custom_call.1} parent=43 // pred_region
          %s1933 = ssub.s32 16, 16
          %1934 = vsyncadd %s1908, %s1933
          %s1935 = smul.addr %s33, 16
          %s1936 = scalar_lea.hbm %s7, %s1935
          %s1938 = sshll.u32 %s1910, 4
          %s1939 = int_to_ptr.vmem [resolvable:$true] %s1938
          %1941 = dma.vmem_to_hbm [thread:$0]  %s1939, 16, %s1936, %s1908
        $region68: #{tpu_custom_call.1} parent=43 // pred_fallthru
          _
      $region44: #{tpu_custom_call.1} parent=5 // pred_fallthru
        _
      %p1942 = scmp.le.s32.totalorder 2, %s24
      // Predicated region
      $region69: #{tpu_custom_call.1} parent=5 // pred_check
        %p1943 = pneg %p1942
      $region70: #{tpu_custom_call.1} parent=5 // pred_check_branch
        %1945 = sbr.rel (%p1943) target = $region72
      $region71: #{tpu_custom_call.1} parent=5 // pred_region
        %s1946 = ssub.s32 %s24, 2
        // Predicated region
        $region73: #{tpu_custom_call.1} parent=71 // pred_check
          %p1947 = pneg %p198
        $region74: #{tpu_custom_call.1} parent=71 // pred_check_branch
          %1949 = sbr.rel (%p1947) target = $region76
        $region75: #{tpu_custom_call.1} parent=71 // pred_region
          %s1950 = sand.u32 %s183, 1
          %s1951 = scalar_lea.sflag [#allocation7], %s1950
          %s1952 = sand.u32 %s183, 1
          %s1953 = smul.addr %s1952, 12
          %s1954 = scalar_lea.vmem [#allocation11], %s1953
          %1955 = dma.done %s1951, 192
        $region76: #{tpu_custom_call.1} parent=71 // pred_fallthru
          _
        // Predicated region
        $region77: #{tpu_custom_call.1} parent=71 // pred_check
          %p1956 = pneg %p224
        $region78: #{tpu_custom_call.1} parent=71 // pred_check_branch
          %1958 = sbr.rel (%p1956) target = $region80
        $region79: #{tpu_custom_call.1} parent=71 // pred_region
          %s1959 = sand.u32 %s209, 1
          %s1960 = scalar_lea.sflag [#allocation13], %s1959
          %s1961 = sand.u32 %s209, 1
          %s1962 = scalar_lea.vmem [#allocation12], %s1961
          %1963 = dma.done %s1960, 16
        $region80: #{tpu_custom_call.1} parent=71 // pred_fallthru
          _
      $region72: #{tpu_custom_call.1} parent=5 // pred_fallthru
        _
    $region6: #{tpu_custom_call.1} parent=1 // loop_footer
      %s28 = sadd.s32 1, %s24
    $region7: #{tpu_custom_call.1} parent=1 // loop_footer_branch
      %23 = sbr.rel target = $region3
    $region8: #{tpu_custom_call.1} parent=1 // loop_exit
      _
    %1964 = vsyncpa [#allocation6], 1
    %s1965 = scalar_lea.sflag [#allocation6], 1
    %1966 = vsyncpa %s1965, 1
    %1967 = vsyncpa [#allocation9], 1
    %1968 = vsyncpa [#allocation7], 1
    %s1969 = scalar_lea.sflag [#allocation7], 1
    %1970 = vsyncpa %s1969, 1
    %1971 = vsyncpa [#allocation13], 1
    %s1972 = scalar_lea.sflag [#allocation13], 1
    %1973 = vsyncpa %s1972, 1

</llo_original>
